<compile_context>
chip_gen: v5e
topology: v5e:2x2
jax: 0.10.0
libtpu: 0.0.40
codegen_flags: <defaults>
</compile_context>

<pallas_src>
import jax
import jax.numpy as jnp
from jax import lax
from jax.experimental import pallas as pl
from jax.experimental.pallas import tpu as pltpu


# ----------------------------------------------------------------------------
# Fused kernel: 2-layer GRU over padded variable-length sequences + epilogue
#   out = ctx + h1_final @ W_sc + b_sc
# ----------------------------------------------------------------------------
def _compm_fused_kernel(x_ref, lens_ref, ctx_ref,
                        wih0_ref, whh0_ref, b0_ref, bhn0_ref,
                        wih1_ref, whh1_ref, b1_ref, bhn1_ref,
                        wsc_ref, bsc_ref,
                        out_ref,
                        gx0_ref):
    TB, H3 = gx0_ref.shape
    H = H3 // 3
    Bt = lens_ref.shape[0]
    T = TB // Bt
    TC = 8                                   # timestep chunk for the projection
    rows = TC * Bt

    # ---- Hoisted layer-0 input projection, chunked over time. ----
    # x_ref is a 2-D (T*Bt, Hp) bf16 slab (timestep-major); each chunk is one
    # fat (TC*Bt, Hp)@(Hp, 3Hp) MXU push accumulated in f32 and stored
    # lane-dense into the gx0 scratch (keeps vreg pressure bounded and lets
    # stores pipeline instead of one giant store burst).
    b0 = jnp.broadcast_to(b0_ref[...], (rows, H3))
    for c in range(T // TC):
        xc = x_ref[pl.ds(c * rows, rows), :]
        gx0_ref[pl.ds(c * rows, rows), :] = (
            jnp.dot(xc, wih0_ref[...], preferred_element_type=jnp.float32) + b0)

    # ---- Hoists for the recurrence (JAX does not CSE broadcasts). ----
    lens = lens_ref[...]                                  # (Bt, 1) int32
    bhn0 = jnp.broadcast_to(bhn0_ref[...], (Bt, H))
    bhn1 = jnp.broadcast_to(bhn1_ref[...], (Bt, H))
    b1 = jnp.broadcast_to(b1_ref[...], (Bt, H3))

    def gates(gx, gh, h, bhn):
        # Gate order r | z | n; each gate block is H (128-aligned) lanes wide.
        # r/z biases (input+hidden) are pre-folded into gx; only b_hn stays
        # separate (needed inside r * (...)).  Gate math stays f32 (v5e has no
        # bf16 VPU/EUP path; correct on all gens).
        r = jax.nn.sigmoid(gx[:, :H] + gh[:, :H])
        z = jax.nn.sigmoid(gx[:, H:2 * H] + gh[:, H:2 * H])
        n = jnp.tanh(gx[:, 2 * H:] + r * (gh[:, 2 * H:] + bhn))
        return (1.0 - z) * n + z * h

    def step(t, carry):
        h0, h1 = carry
        # Independent MXU pushes first: both depend only on the previous-step
        # hidden states, so they overlap with each other and with the layer-0
        # gate math below -- only one dependent matmul per step remains on the
        # serial chain.
        gh0 = jnp.dot(h0.astype(jnp.bfloat16), whh0_ref[...],
                      preferred_element_type=jnp.float32)
        gh1 = jnp.dot(h1.astype(jnp.bfloat16), whh1_ref[...],
                      preferred_element_type=jnp.float32)
        row = pl.multiple_of(t * Bt, 8)
        gx0 = gx0_ref[pl.ds(row, Bt), :]
        h0n = gates(gx0, gh0, h0, bhn0)
        # TODO(synk): fusing gx1+gh1 into one [h0n|h1] @ [Wih1;Whh1] push was
        # considered, but it conflicts with hoisting gh1 above; the reorder
        # wins on this latency-bound chain.
        gx1 = jnp.dot(h0n.astype(jnp.bfloat16), wih1_ref[...],
                      preferred_element_type=jnp.float32) + b1
        h1n = gates(gx1, gh1, h1, bhn1)
        valid = t < lens                      # freeze state past sequence end
        return jnp.where(valid, h0n, h0), jnp.where(valid, h1n, h1)

    zeros = jnp.zeros((Bt, H), jnp.float32)
    unroll = True if T <= 16 else 8           # full unroll only for tiny T
    _, h1_final = lax.fori_loop(0, T, step, (zeros, zeros), unroll=unroll)

    # ---- Fused epilogue: out = ctx + h1 @ W_sc + b_sc (lane-dense store). ----
    out_ref[...] = (ctx_ref[...]
                    + jnp.dot(h1_final.astype(jnp.bfloat16), wsc_ref[...],
                              preferred_element_type=jnp.float32)
                    + bsc_ref[...])


# ----------------------------------------------------------------------------
# Wrapper: lane/sublane padding, gate layout prep, single pallas_call
# ----------------------------------------------------------------------------
def _round_up(x, m):
    return ((x + m - 1) // m) * m


def _pad_gate_matrix(w, Hs, Hp):
    # (Hs, 3Hs) with column blocks [r|z|n] -> (Hp, 3Hp), each gate 128-aligned.
    blocks = [jnp.pad(w[:, g * Hs:(g + 1) * Hs], ((0, Hp - Hs), (0, Hp - Hs)))
              for g in range(3)]
    return jnp.concatenate(blocks, axis=1)


def _pad_gate_bias(b, Hs, Hp):
    blocks = [jnp.pad(b[:, g * Hs:(g + 1) * Hs], ((0, 0), (0, Hp - Hs)))
              for g in range(3)]
    return jnp.concatenate(blocks, axis=1)


def _prep_layer(w_ih, w_hh, b_ih, b_hh, Hs, Hp):
    # Combined bias (b_ir+b_hr | b_iz+b_hz | b_in); b_hn kept separate.
    # Weights stored bf16 (MXU-native); biases stay f32.
    b_main = jnp.concatenate([b_ih[:, :2 * Hs] + b_hh[:, :2 * Hs],
                              b_ih[:, 2 * Hs:]], axis=1)
    return (_pad_gate_matrix(w_ih, Hs, Hp).astype(jnp.bfloat16),
            _pad_gate_matrix(w_hh, Hs, Hp).astype(jnp.bfloat16),
            _pad_gate_bias(b_main, Hs, Hp),
            jnp.pad(b_hh[:, 2 * Hs:], ((0, 0), (0, Hp - Hs))))


def _replicated_spec(shape):
    n = len(shape)
    return pl.BlockSpec(shape, lambda g, n=n: (0,) * n)


def _bytes(a):
    return int(a.size) * a.dtype.itemsize


def compm_fused_pallas(ctx_out, x_tbh, lens_b1, gru, w_sc, b_sc):
    T, B, Hs = x_tbh.shape
    Hc = ctx_out.shape[1]
    Hp, Hcp = _round_up(Hs, 128), _round_up(Hc, 128)
    Bp = _round_up(B, 8)
    Bt = Bp if Bp <= 128 else 128             # fat MXU M per batch tile
    Bp = _round_up(Bp, Bt)
    nb = Bp // Bt
    Tp = _round_up(max(T, 1), 8)              # multiple of the 8-step chunk

    # Zero-padding is inert: padded lanes/rows stay exactly 0 through the GRU
    # (relies on the all-zero initial hidden state) and contribute 0 to the
    # epilogue matmul; padded timesteps are frozen by the lens mask.
    x_p = jnp.pad(x_tbh, ((0, Tp - T), (0, Bp - B), (0, Hp - Hs)))
    lens_p = jnp.pad(lens_b1, ((0, Bp - B), (0, 0)))
    ctx_p = jnp.pad(ctx_out, ((0, Bp - B), (0, Hcp - Hc)))

    # Regroup x so each batch tile g owns a contiguous 2-D (Tp*Bt, Hp) slab:
    # no in-kernel reshape, lane-dense loads/stores.  bf16 for the MXU.
    x_g = (x_p.reshape(Tp, nb, Bt, Hp).transpose(1, 0, 2, 3)
              .reshape(nb, Tp * Bt, Hp).astype(jnp.bfloat16))

    wih0, whh0, b0, bhn0 = _prep_layer(gru["w_ih_l0"], gru["w_hh_l0"],
                                       gru["b_ih_l0"], gru["b_hh_l0"], Hs, Hp)
    wih1, whh1, b1, bhn1 = _prep_layer(gru["w_ih_l1"], gru["w_hh_l1"],
                                       gru["b_ih_l1"], gru["b_hh_l1"], Hs, Hp)
    wsc_p = jnp.pad(w_sc, ((0, Hp - Hs), (0, Hcp - Hc))).astype(jnp.bfloat16)
    bsc_p = jnp.pad(b_sc, ((0, 0), (0, Hcp - Hc)))

    args = (x_g, lens_p, ctx_p, wih0, whh0, b0, bhn0,
            wih1, whh1, b1, bhn1, wsc_p, bsc_p)

    in_specs = [
        pl.BlockSpec((None, Tp * Bt, Hp), lambda g: (g, 0, 0)),   # x slab
        pl.BlockSpec((Bt, 1), lambda g: (g, 0)),                  # lens
        pl.BlockSpec((Bt, Hcp), lambda g: (g, 0)),                # ctx
    ] + [_replicated_spec(a.shape) for a in args[3:]]             # weights/bias
    out_spec = pl.BlockSpec((Bt, Hcp), lambda g: (g, 0))

    # Size-derived VMEM request: double-buffered blocks + scratch, ~35%
    # headroom, capped at 48 MiB so we never ask for all of v7x's 64 MiB.
    # TODO(synk): at realistic RoBERTa sizes (Hs=1024, long T) on v7x, stream
    # gx0 over a T grid axis instead of keeping the full scratch resident.
    scratch_bytes = Tp * Bt * 3 * Hp * 4
    blk_bytes = ((_bytes(x_g) + _bytes(lens_p) + _bytes(ctx_p)) // nb
                 + sum(_bytes(a) for a in args[3:]) + Bt * Hcp * 4)
    vmem_limit = int(min(max(1.35 * (2 * blk_bytes + scratch_bytes),
                             32 * 1024 * 1024), 48 * 1024 * 1024))

    out = pl.pallas_call(
        _compm_fused_kernel,
        out_shape=jax.ShapeDtypeStruct((Bp, Hcp), jnp.float32),
        grid_spec=pltpu.PrefetchScalarGridSpec(
            num_scalar_prefetch=0, grid=(nb,),
            in_specs=in_specs, out_specs=out_spec,
            scratch_shapes=[pltpu.VMEM((Tp * Bt, 3 * Hp), jnp.float32)]),
        compiler_params=pltpu.CompilerParams(
            dimension_semantics=("parallel",),
            vmem_limit_bytes=vmem_limit),
    )(*args)
    return out[:B, :Hc]


# ----------------------------------------------------------------------------
# CoMPM forward (glue in plain JAX, hot path in the fused Pallas kernel)
# ----------------------------------------------------------------------------
def _build_inputs(batch_input_tokens, batch_speaker_tokens, params):
    # TODO(synk): the pretrained Roberta context/speaker encoders are replaced
    # by deterministic embedding-table stand-ins (CLS == first-token pooling).
    # TODO(synk): the per-speaker gather+pad+stack could move into the kernel
    # via PrefetchScalarGridSpec row-gather on speaker_table.
    ctx_out = params["context_table"][batch_input_tokens[:, 0]]        # (B, Hc)
    Hs = params["speaker_table"].shape[1]
    B = batch_input_tokens.shape[0]
    lens = [t.shape[0] for t in batch_speaker_tokens]
    T_max = max(max(lens), 1)
    feats = []
    for toks in batch_speaker_tokens:
        if toks.shape[0] == 0:
            feats.append(jnp.zeros((T_max, Hs), jnp.float32))
        else:
            f = params["speaker_table"][toks[:, 0]]                    # (T_i, Hs)
            feats.append(jnp.pad(f, ((0, T_max - toks.shape[0]), (0, 0))))
    x_tbh = jnp.stack(feats, axis=1)                                   # (T, B, Hs)
    lens_b1 = jnp.asarray(lens, jnp.int32).reshape(B, 1)
    return ctx_out, x_tbh, lens_b1


def compm_forward(batch_input_tokens, batch_speaker_tokens, params):
    ctx_out, x_tbh, lens_b1 = _build_inputs(
        batch_input_tokens, batch_speaker_tokens, params)
    return compm_fused_pallas(ctx_out, x_tbh, lens_b1,
                              params["gru"], params["w_sc"], params["b_sc"])


# ----------------------------------------------------------------------------
# Pure-JAX f32 reference (PyTorch nn.GRU eval semantics, unpadded) for checking
# ----------------------------------------------------------------------------
def _gru_cell_ref(x, h, w_ih, w_hh, b_ih, b_hh, H):
    gx = x @ w_ih + b_ih
    gh = h @ w_hh + b_hh
    r = jax.nn.sigmoid(gx[:, :H] + gh[:, :H])
    z = jax.nn.sigmoid(gx[:, H:2 * H] + gh[:, H:2 * H])
    n = jnp.tanh(gx[:, 2 * H:] + r * gh[:, 2 * H:])
    return (1.0 - z) * n + z * h


def compm_reference(ctx_out, x_tbh, lens_b1, params):
    g = params["gru"]
    T_max, B, H = x_tbh.shape
    h0 = jnp.zeros((B, H), jnp.float32)
    h1 = jnp.zeros((B, H), jnp.float32)
    for t in range(T_max):
        valid = t < lens_b1
        h0n = _gru_cell_ref(x_tbh[t], h0, g["w_ih_l0"], g["w_hh_l0"],
                            g["b_ih_l0"], g["b_hh_l0"], H)
        h1n = _gru_cell_ref(h0n, h1, g["w_ih_l1"], g["w_hh_l1"],
                            g["b_ih_l1"], g["b_hh_l1"], H)
        h0 = jnp.where(valid, h0n, h0)
        h1 = jnp.where(valid, h1n, h1)
    return ctx_out + h1 @ params["w_sc"] + params["b_sc"]


if __name__ == "__main__":
    # Small, deterministic setup.
    B, L = 3, 8            # batch, token length
    Hs, Hc = 32, 64        # speaker hidden, context hidden (stand-in sizes)
    V = 100                # stand-in vocab size

    key = jax.random.PRNGKey(0)
    keys = jax.random.split(key, 12)
    scale = 1.0 / jnp.sqrt(jnp.float32(Hs))
    u = lambda k, shape: jax.random.uniform(k, shape, jnp.float32, -scale, scale)

    params = {
        "context_table": 0.1 * jax.random.normal(keys[0], (V, Hc), jnp.float32),
        "speaker_table": 0.1 * jax.random.normal(keys[1], (V, Hs), jnp.float32),
        "gru": {
            # PyTorch stores (3H, H); pre-transpose to (H, 3H).  nn.GRU's
            # dropout=0.3 between layers is training-only (eval semantics here).
            "w_ih_l0": u(keys[2], (3 * Hs, Hs)).T,
            "w_hh_l0": u(keys[3], (3 * Hs, Hs)).T,
            "b_ih_l0": u(keys[4], (3 * Hs,)).reshape(1, 3 * Hs),
            "b_hh_l0": u(keys[5], (3 * Hs,)).reshape(1, 3 * Hs),
            "w_ih_l1": u(keys[6], (3 * Hs, Hs)).T,
            "w_hh_l1": u(keys[7], (3 * Hs, Hs)).T,
            "b_ih_l1": u(keys[8], (3 * Hs,)).reshape(1, 3 * Hs),
            "b_hh_l1": u(keys[9], (3 * Hs,)).reshape(1, 3 * Hs),
        },
        # nn.Linear(Hs, Hc): weight (Hc, Hs) -> transposed to (Hs, Hc)
        "w_sc": u(keys[10], (Hc, Hs)).T,
        "b_sc": u(keys[11], (Hc,)).reshape(1, Hc),
    }

    batch_input_tokens = jax.random.randint(
        jax.random.PRNGKey(1), (B, L), 0, V, jnp.int32)
    batch_speaker_tokens = [
        jax.random.randint(jax.random.PRNGKey(2), (3, L), 0, V, jnp.int32),
        jnp.zeros((0, L), jnp.int32),                                   # empty speaker
        jax.random.randint(jax.random.PRNGKey(3), (4, L), 0, V, jnp.int32),
    ]

    out = compm_forward(batch_input_tokens, batch_speaker_tokens, params)
    out = jax.block_until_ready(out)
    assert out.shape == (B, Hc), out.shape

    # Correctness check against the pure-JAX f32 reference (same inputs).
    # Tolerance accounts for the bf16 weight/activation matmuls in the kernel.
    ctx_out, x_tbh, lens_b1 = _build_inputs(
        batch_input_tokens, batch_speaker_tokens, params)
    ref = compm_reference(ctx_out, x_tbh, lens_b1, params)
    assert jnp.allclose(out, ref, atol=2e-2, rtol=2e-2), (
        float(jnp.max(jnp.abs(out - ref))))
    print("KERNEL_OK")
</pallas_src>

<mosaic_0001>
module attributes {stable_mosaic.version = 11 : i64} {
  func.func @_compm_fused_kernel(%arg0: i32, %arg1: memref<1x64x128xbf16, #tpu.memory_space<vmem>>, %arg2: memref<8x1xi32, #tpu.memory_space<vmem>>, %arg3: memref<8x128xf32, #tpu.memory_space<vmem>>, %arg4: memref<128x384xbf16, #tpu.memory_space<vmem>>, %arg5: memref<128x384xbf16, #tpu.memory_space<vmem>>, %arg6: memref<1x384xf32, #tpu.memory_space<vmem>>, %arg7: memref<1x128xf32, #tpu.memory_space<vmem>>, %arg8: memref<128x384xbf16, #tpu.memory_space<vmem>>, %arg9: memref<128x384xbf16, #tpu.memory_space<vmem>>, %arg10: memref<1x384xf32, #tpu.memory_space<vmem>>, %arg11: memref<1x128xf32, #tpu.memory_space<vmem>>, %arg12: memref<128x128xbf16, #tpu.memory_space<vmem>>, %arg13: memref<1x128xf32, #tpu.memory_space<vmem>>, %arg14: memref<8x128xf32, #tpu.memory_space<vmem>>, %arg15: memref<64x384xf32, #tpu.memory_space<vmem>>) attributes {dimension_semantics = [#tpu.dimension_semantics<parallel>], iteration_bounds = array<i64: 1>, scalar_prefetch = 0 : i64, scratch_operands = 1 : i64, tpu.core_type = #tpu.core_type<tc>, window_params = [{transform_indices = @transform_0, window_bounds = array<i64: 1, 64, 128>}, {transform_indices = @transform_1, window_bounds = array<i64: 8, 1>}, {transform_indices = @transform_2, window_bounds = array<i64: 8, 128>}, {pipeline_mode = #tpu.pipeline_mode<synchronous>, transform_indices = @transform_3, window_bounds = array<i64: 128, 384>}, {pipeline_mode = #tpu.pipeline_mode<synchronous>, transform_indices = @transform_4, window_bounds = array<i64: 128, 384>}, {pipeline_mode = #tpu.pipeline_mode<synchronous>, transform_indices = @transform_5, window_bounds = array<i64: 1, 384>}, {pipeline_mode = #tpu.pipeline_mode<synchronous>, transform_indices = @transform_6, window_bounds = array<i64: 1, 128>}, {pipeline_mode = #tpu.pipeline_mode<synchronous>, transform_indices = @transform_7, window_bounds = array<i64: 128, 384>}, {pipeline_mode = #tpu.pipeline_mode<synchronous>, transform_indices = @transform_8, window_bounds = array<i64: 128, 384>}, {pipeline_mode = #tpu.pipeline_mode<synchronous>, transform_indices = @transform_9, window_bounds = array<i64: 1, 384>}, {pipeline_mode = #tpu.pipeline_mode<synchronous>, transform_indices = @transform_10, window_bounds = array<i64: 1, 128>}, {pipeline_mode = #tpu.pipeline_mode<synchronous>, transform_indices = @transform_11, window_bounds = array<i64: 128, 128>}, {pipeline_mode = #tpu.pipeline_mode<synchronous>, transform_indices = @transform_12, window_bounds = array<i64: 1, 128>}, {transform_indices = @transform_13, window_bounds = array<i64: 8, 128>}]} {
    %c0 = arith.constant 0 : index
    %c0_0 = arith.constant 0 : index
    %0 = vector.load %arg6[%c0, %c0_0] : memref<1x384xf32, #tpu.memory_space<vmem>>, vector<1x384xf32>
    %1 = vector.shape_cast %0 : vector<1x384xf32> to vector<1x384xf32>
    %2 = vector.broadcast %1 : vector<1x384xf32> to vector<64x384xf32>
    %c0_1 = arith.constant 0 : index
    %c0_2 = arith.constant 0 : index
    %c0_3 = arith.constant 0 : index
    %3 = vector.load %arg1[%c0_1, %c0_2, %c0_3] : memref<1x64x128xbf16, #tpu.memory_space<vmem>>, vector<1x64x128xbf16>
    %4 = vector.shape_cast %3 : vector<1x64x128xbf16> to vector<64x128xbf16>
    %c0_4 = arith.constant 0 : index
    %c0_5 = arith.constant 0 : index
    %5 = vector.load %arg4[%c0_4, %c0_5] : memref<128x384xbf16, #tpu.memory_space<vmem>>, vector<128x384xbf16>
    %cst = arith.constant dense<0.000000e+00> : vector<64x384xf32>
    %6 = tpu.matmul %4, %5, %cst {dimension_numbers = #tpu.dot_dimension_numbers<[1], [0], [0], [1], [0, 0, 1, 1], [], []>} : vector<64x128xbf16>, vector<128x384xbf16>, vector<64x384xf32> -> vector<64x384xf32>
    %7 = arith.addf %6, %2 : vector<64x384xf32>
    %c0_6 = arith.constant 0 : index
    %c0_7 = arith.constant 0 : index
    %8 = vector.load %arg15[%c0_6, %c0_7] : memref<64x384xf32, #tpu.memory_space<vmem>>, vector<64x384xf32>
    tpu.vector_store %arg15[%c0_6, %c0_7], %7 {strides = array<i32>} : memref<64x384xf32, #tpu.memory_space<vmem>>, vector<64x384xf32>,
    %c0_8 = arith.constant 0 : index
    %c0_9 = arith.constant 0 : index
    %9 = vector.load %arg2[%c0_8, %c0_9] : memref<8x1xi32, #tpu.memory_space<vmem>>, vector<8x1xi32>
    %c0_10 = arith.constant 0 : index
    %c0_11 = arith.constant 0 : index
    %10 = vector.load %arg7[%c0_10, %c0_11] : memref<1x128xf32, #tpu.memory_space<vmem>>, vector<1x128xf32>
    %11 = vector.shape_cast %10 : vector<1x128xf32> to vector<1x128xf32>
    %12 = vector.broadcast %11 : vector<1x128xf32> to vector<8x128xf32>
    %c0_12 = arith.constant 0 : index
    %c0_13 = arith.constant 0 : index
    %13 = vector.load %arg11[%c0_12, %c0_13] : memref<1x128xf32, #tpu.memory_space<vmem>>, vector<1x128xf32>
    %14 = vector.shape_cast %13 : vector<1x128xf32> to vector<1x128xf32>
    %15 = vector.broadcast %14 : vector<1x128xf32> to vector<8x128xf32>
    %c0_14 = arith.constant 0 : index
    %c0_15 = arith.constant 0 : index
    %16 = vector.load %arg10[%c0_14, %c0_15] : memref<1x384xf32, #tpu.memory_space<vmem>>, vector<1x384xf32>
    %17 = vector.shape_cast %16 : vector<1x384xf32> to vector<1x384xf32>
    %18 = vector.broadcast %17 : vector<1x384xf32> to vector<8x384xf32>
    %cst_16 = arith.constant 0.000000e+00 : f32
    %19 = vector.broadcast %cst_16 : f32 to vector<8x128xf32>
    %c0_i32 = arith.constant 0 : i32
    %20 = arith.truncf %19 : vector<8x128xf32> to vector<8x128xbf16>
    %c0_17 = arith.constant 0 : index
    %c0_18 = arith.constant 0 : index
    %21 = vector.load %arg5[%c0_17, %c0_18] : memref<128x384xbf16, #tpu.memory_space<vmem>>, vector<128x384xbf16>
    %cst_19 = arith.constant dense<0.000000e+00> : vector<8x384xf32>
    %22 = tpu.matmul %20, %21, %cst_19 {dimension_numbers = #tpu.dot_dimension_numbers<[1], [0], [0], [1], [0, 0, 1, 1], [], []>} : vector<8x128xbf16>, vector<128x384xbf16>, vector<8x384xf32> -> vector<8x384xf32>
    %23 = arith.truncf %19 : vector<8x128xf32> to vector<8x128xbf16>
    %c0_20 = arith.constant 0 : index
    %c0_21 = arith.constant 0 : index
    %24 = vector.load %arg9[%c0_20, %c0_21] : memref<128x384xbf16, #tpu.memory_space<vmem>>, vector<128x384xbf16>
    %cst_22 = arith.constant dense<0.000000e+00> : vector<8x384xf32>
    %25 = tpu.matmul %23, %24, %cst_22 {dimension_numbers = #tpu.dot_dimension_numbers<[1], [0], [0], [1], [0, 0, 1, 1], [], []>} : vector<8x128xbf16>, vector<128x384xbf16>, vector<8x384xf32> -> vector<8x384xf32>
    %c8_i32 = arith.constant 8 : i32
    %26 = arith.muli %c0_i32, %c8_i32 : i32
    %27 = tpu.assume_multiple %26, 8 : i32
    %28 = arith.index_cast %27 : i32 to index
    %c0_23 = arith.constant 0 : index
    %29 = vector.load %arg15[%28, %c0_23] : memref<64x384xf32, #tpu.memory_space<vmem>>, vector<8x384xf32>
    %30 = vector.extract_strided_slice %29 {offsets = [0, 0], sizes = [8, 128], strides = [1, 1]} : vector<8x384xf32> to vector<8x128xf32>
    %31 = vector.extract_strided_slice %22 {offsets = [0, 0], sizes = [8, 128], strides = [1, 1]} : vector<8x384xf32> to vector<8x128xf32>
    %32 = arith.addf %30, %31 : vector<8x128xf32>
    %33 = arith.negf %32 : vector<8x128xf32>
    %34 = math.exp %33 : vector<8x128xf32>
    %cst_24 = arith.constant 1.000000e+00 : f32
    %35 = vector.broadcast %cst_24 : f32 to vector<8x128xf32>
    %36 = arith.addf %35, %34 : vector<8x128xf32>
    %37 = arith.divf %35, %36 : vector<8x128xf32>
    %38 = vector.extract_strided_slice %29 {offsets = [0, 128], sizes = [8, 128], strides = [1, 1]} : vector<8x384xf32> to vector<8x128xf32>
    %39 = vector.extract_strided_slice %22 {offsets = [0, 128], sizes = [8, 128], strides = [1, 1]} : vector<8x384xf32> to vector<8x128xf32>
    %40 = arith.addf %38, %39 : vector<8x128xf32>
    %41 = arith.negf %40 : vector<8x128xf32>
    %42 = math.exp %41 : vector<8x128xf32>
    %cst_25 = arith.constant 1.000000e+00 : f32
    %43 = vector.broadcast %cst_25 : f32 to vector<8x128xf32>
    %44 = arith.addf %43, %42 : vector<8x128xf32>
    %45 = arith.divf %43, %44 : vector<8x128xf32>
    %46 = vector.extract_strided_slice %29 {offsets = [0, 256], sizes = [8, 128], strides = [1, 1]} : vector<8x384xf32> to vector<8x128xf32>
    %47 = vector.extract_strided_slice %22 {offsets = [0, 256], sizes = [8, 128], strides = [1, 1]} : vector<8x384xf32> to vector<8x128xf32>
    %48 = arith.addf %47, %12 : vector<8x128xf32>
    %49 = arith.mulf %37, %48 : vector<8x128xf32>
    %50 = arith.addf %46, %49 : vector<8x128xf32>
    %51 = math.tanh %50 : vector<8x128xf32>
    %cst_26 = arith.constant 1.000000e+00 : f32
    %52 = vector.broadcast %cst_26 : f32 to vector<8x128xf32>
    %53 = arith.subf %52, %45 : vector<8x128xf32>
    %54 = arith.mulf %53, %51 : vector<8x128xf32>
    %55 = arith.mulf %45, %19 : vector<8x128xf32>
    %56 = arith.addf %54, %55 : vector<8x128xf32>
    %57 = arith.truncf %56 : vector<8x128xf32> to vector<8x128xbf16>
    %c0_27 = arith.constant 0 : index
    %c0_28 = arith.constant 0 : index
    %58 = vector.load %arg8[%c0_27, %c0_28] : memref<128x384xbf16, #tpu.memory_space<vmem>>, vector<128x384xbf16>
    %cst_29 = arith.constant dense<0.000000e+00> : vector<8x384xf32>
    %59 = tpu.matmul %57, %58, %cst_29 {dimension_numbers = #tpu.dot_dimension_numbers<[1], [0], [0], [1], [0, 0, 1, 1], [], []>} : vector<8x128xbf16>, vector<128x384xbf16>, vector<8x384xf32> -> vector<8x384xf32>
    %60 = arith.addf %59, %18 : vector<8x384xf32>
    %61 = vector.extract_strided_slice %60 {offsets = [0, 0], sizes = [8, 128], strides = [1, 1]} : vector<8x384xf32> to vector<8x128xf32>
    %62 = vector.extract_strided_slice %25 {offsets = [0, 0], sizes = [8, 128], strides = [1, 1]} : vector<8x384xf32> to vector<8x128xf32>
    %63 = arith.addf %61, %62 : vector<8x128xf32>
    %64 = arith.negf %63 : vector<8x128xf32>
    %65 = math.exp %64 : vector<8x128xf32>
    %cst_30 = arith.constant 1.000000e+00 : f32
    %66 = vector.broadcast %cst_30 : f32 to vector<8x128xf32>
    %67 = arith.addf %66, %65 : vector<8x128xf32>
    %68 = arith.divf %66, %67 : vector<8x128xf32>
    %69 = vector.extract_strided_slice %60 {offsets = [0, 128], sizes = [8, 128], strides = [1, 1]} : vector<8x384xf32> to vector<8x128xf32>
    %70 = vector.extract_strided_slice %25 {offsets = [0, 128], sizes = [8, 128], strides = [1, 1]} : vector<8x384xf32> to vector<8x128xf32>
    %71 = arith.addf %69, %70 : vector<8x128xf32>
    %72 = arith.negf %71 : vector<8x128xf32>
    %73 = math.exp %72 : vector<8x128xf32>
    %cst_31 = arith.constant 1.000000e+00 : f32
    %74 = vector.broadcast %cst_31 : f32 to vector<8x128xf32>
    %75 = arith.addf %74, %73 : vector<8x128xf32>
    %76 = arith.divf %74, %75 : vector<8x128xf32>
    %77 = vector.extract_strided_slice %60 {offsets = [0, 256], sizes = [8, 128], strides = [1, 1]} : vector<8x384xf32> to vector<8x128xf32>
    %78 = vector.extract_strided_slice %25 {offsets = [0, 256], sizes = [8, 128], strides = [1, 1]} : vector<8x384xf32> to vector<8x128xf32>
    %79 = arith.addf %78, %15 : vector<8x128xf32>
    %80 = arith.mulf %68, %79 : vector<8x128xf32>
    %81 = arith.addf %77, %80 : vector<8x128xf32>
    %82 = math.tanh %81 : vector<8x128xf32>
    %cst_32 = arith.constant 1.000000e+00 : f32
    %83 = vector.broadcast %cst_32 : f32 to vector<8x128xf32>
    %84 = arith.subf %83, %76 : vector<8x128xf32>
    %85 = arith.mulf %84, %82 : vector<8x128xf32>
    %86 = arith.mulf %76, %19 : vector<8x128xf32>
    %87 = arith.addf %85, %86 : vector<8x128xf32>
    %88 = vector.broadcast %c0_i32 : i32 to vector<8x1xi32>
    %89 = arith.cmpi slt, %88, %9 : vector<8x1xi32>
    %90 = vector.shape_cast %89 : vector<8x1xi1> to vector<8x1xi1>
    %91 = vector.broadcast %90 : vector<8x1xi1> to vector<8x128xi1>
    %92 = arith.select %91, %56, %19 : vector<8x128xi1>, vector<8x128xf32>
    %93 = vector.shape_cast %89 : vector<8x1xi1> to vector<8x1xi1>
    %94 = vector.broadcast %93 : vector<8x1xi1> to vector<8x128xi1>
    %95 = arith.select %94, %87, %19 : vector<8x128xi1>, vector<8x128xf32>
    %c1_i32 = arith.constant 1 : i32
    %96 = arith.truncf %92 : vector<8x128xf32> to vector<8x128xbf16>
    %c0_33 = arith.constant 0 : index
    %c0_34 = arith.constant 0 : index
    %97 = vector.load %arg5[%c0_33, %c0_34] : memref<128x384xbf16, #tpu.memory_space<vmem>>, vector<128x384xbf16>
    %cst_35 = arith.constant dense<0.000000e+00> : vector<8x384xf32>
    %98 = tpu.matmul %96, %97, %cst_35 {dimension_numbers = #tpu.dot_dimension_numbers<[1], [0], [0], [1], [0, 0, 1, 1], [], []>} : vector<8x128xbf16>, vector<128x384xbf16>, vector<8x384xf32> -> vector<8x384xf32>
    %99 = arith.truncf %95 : vector<8x128xf32> to vector<8x128xbf16>
    %c0_36 = arith.constant 0 : index
    %c0_37 = arith.constant 0 : index
    %100 = vector.load %arg9[%c0_36, %c0_37] : memref<128x384xbf16, #tpu.memory_space<vmem>>, vector<128x384xbf16>
    %cst_38 = arith.constant dense<0.000000e+00> : vector<8x384xf32>
    %101 = tpu.matmul %99, %100, %cst_38 {dimension_numbers = #tpu.dot_dimension_numbers<[1], [0], [0], [1], [0, 0, 1, 1], [], []>} : vector<8x128xbf16>, vector<128x384xbf16>, vector<8x384xf32> -> vector<8x384xf32>
    %c8_i32_39 = arith.constant 8 : i32
    %102 = arith.muli %c1_i32, %c8_i32_39 : i32
    %103 = tpu.assume_multiple %102, 8 : i32
    %104 = arith.index_cast %103 : i32 to index
    %c0_40 = arith.constant 0 : index
    %105 = vector.load %arg15[%104, %c0_40] : memref<64x384xf32, #tpu.memory_space<vmem>>, vector<8x384xf32>
    %106 = vector.extract_strided_slice %105 {offsets = [0, 0], sizes = [8, 128], strides = [1, 1]} : vector<8x384xf32> to vector<8x128xf32>
    %107 = vector.extract_strided_slice %98 {offsets = [0, 0], sizes = [8, 128], strides = [1, 1]} : vector<8x384xf32> to vector<8x128xf32>
    %108 = arith.addf %106, %107 : vector<8x128xf32>
    %109 = arith.negf %108 : vector<8x128xf32>
    %110 = math.exp %109 : vector<8x128xf32>
    %cst_41 = arith.constant 1.000000e+00 : f32
    %111 = vector.broadcast %cst_41 : f32 to vector<8x128xf32>
    %112 = arith.addf %111, %110 : vector<8x128xf32>
    %113 = arith.divf %111, %112 : vector<8x128xf32>
    %114 = vector.extract_strided_slice %105 {offsets = [0, 128], sizes = [8, 128], strides = [1, 1]} : vector<8x384xf32> to vector<8x128xf32>
    %115 = vector.extract_strided_slice %98 {offsets = [0, 128], sizes = [8, 128], strides = [1, 1]} : vector<8x384xf32> to vector<8x128xf32>
    %116 = arith.addf %114, %115 : vector<8x128xf32>
    %117 = arith.negf %116 : vector<8x128xf32>
    %118 = math.exp %117 : vector<8x128xf32>
    %cst_42 = arith.constant 1.000000e+00 : f32
    %119 = vector.broadcast %cst_42 : f32 to vector<8x128xf32>
    %120 = arith.addf %119, %118 : vector<8x128xf32>
    %121 = arith.divf %119, %120 : vector<8x128xf32>
    %122 = vector.extract_strided_slice %105 {offsets = [0, 256], sizes = [8, 128], strides = [1, 1]} : vector<8x384xf32> to vector<8x128xf32>
    %123 = vector.extract_strided_slice %98 {offsets = [0, 256], sizes = [8, 128], strides = [1, 1]} : vector<8x384xf32> to vector<8x128xf32>
    %124 = arith.addf %123, %12 : vector<8x128xf32>
    %125 = arith.mulf %113, %124 : vector<8x128xf32>
    %126 = arith.addf %122, %125 : vector<8x128xf32>
    %127 = math.tanh %126 : vector<8x128xf32>
    %cst_43 = arith.constant 1.000000e+00 : f32
    %128 = vector.broadcast %cst_43 : f32 to vector<8x128xf32>
    %129 = arith.subf %128, %121 : vector<8x128xf32>
    %130 = arith.mulf %129, %127 : vector<8x128xf32>
    %131 = arith.mulf %121, %92 : vector<8x128xf32>
    %132 = arith.addf %130, %131 : vector<8x128xf32>
    %133 = arith.truncf %132 : vector<8x128xf32> to vector<8x128xbf16>
    %c0_44 = arith.constant 0 : index
    %c0_45 = arith.constant 0 : index
    %134 = vector.load %arg8[%c0_44, %c0_45] : memref<128x384xbf16, #tpu.memory_space<vmem>>, vector<128x384xbf16>
    %cst_46 = arith.constant dense<0.000000e+00> : vector<8x384xf32>
    %135 = tpu.matmul %133, %134, %cst_46 {dimension_numbers = #tpu.dot_dimension_numbers<[1], [0], [0], [1], [0, 0, 1, 1], [], []>} : vector<8x128xbf16>, vector<128x384xbf16>, vector<8x384xf32> -> vector<8x384xf32>
    %136 = arith.addf %135, %18 : vector<8x384xf32>
    %137 = vector.extract_strided_slice %136 {offsets = [0, 0], sizes = [8, 128], strides = [1, 1]} : vector<8x384xf32> to vector<8x128xf32>
    %138 = vector.extract_strided_slice %101 {offsets = [0, 0], sizes = [8, 128], strides = [1, 1]} : vector<8x384xf32> to vector<8x128xf32>
    %139 = arith.addf %137, %138 : vector<8x128xf32>
    %140 = arith.negf %139 : vector<8x128xf32>
    %141 = math.exp %140 : vector<8x128xf32>
    %cst_47 = arith.constant 1.000000e+00 : f32
    %142 = vector.broadcast %cst_47 : f32 to vector<8x128xf32>
    %143 = arith.addf %142, %141 : vector<8x128xf32>
    %144 = arith.divf %142, %143 : vector<8x128xf32>
    %145 = vector.extract_strided_slice %136 {offsets = [0, 128], sizes = [8, 128], strides = [1, 1]} : vector<8x384xf32> to vector<8x128xf32>
    %146 = vector.extract_strided_slice %101 {offsets = [0, 128], sizes = [8, 128], strides = [1, 1]} : vector<8x384xf32> to vector<8x128xf32>
    %147 = arith.addf %145, %146 : vector<8x128xf32>
    %148 = arith.negf %147 : vector<8x128xf32>
    %149 = math.exp %148 : vector<8x128xf32>
    %cst_48 = arith.constant 1.000000e+00 : f32
    %150 = vector.broadcast %cst_48 : f32 to vector<8x128xf32>
    %151 = arith.addf %150, %149 : vector<8x128xf32>
    %152 = arith.divf %150, %151 : vector<8x128xf32>
    %153 = vector.extract_strided_slice %136 {offsets = [0, 256], sizes = [8, 128], strides = [1, 1]} : vector<8x384xf32> to vector<8x128xf32>
    %154 = vector.extract_strided_slice %101 {offsets = [0, 256], sizes = [8, 128], strides = [1, 1]} : vector<8x384xf32> to vector<8x128xf32>
    %155 = arith.addf %154, %15 : vector<8x128xf32>
    %156 = arith.mulf %144, %155 : vector<8x128xf32>
    %157 = arith.addf %153, %156 : vector<8x128xf32>
    %158 = math.tanh %157 : vector<8x128xf32>
    %cst_49 = arith.constant 1.000000e+00 : f32
    %159 = vector.broadcast %cst_49 : f32 to vector<8x128xf32>
    %160 = arith.subf %159, %152 : vector<8x128xf32>
    %161 = arith.mulf %160, %158 : vector<8x128xf32>
    %162 = arith.mulf %152, %95 : vector<8x128xf32>
    %163 = arith.addf %161, %162 : vector<8x128xf32>
    %164 = vector.broadcast %c1_i32 : i32 to vector<8x1xi32>
    %165 = arith.cmpi slt, %164, %9 : vector<8x1xi32>
    %166 = vector.shape_cast %165 : vector<8x1xi1> to vector<8x1xi1>
    %167 = vector.broadcast %166 : vector<8x1xi1> to vector<8x128xi1>
    %168 = arith.select %167, %132, %92 : vector<8x128xi1>, vector<8x128xf32>
    %169 = vector.shape_cast %165 : vector<8x1xi1> to vector<8x1xi1>
    %170 = vector.broadcast %169 : vector<8x1xi1> to vector<8x128xi1>
    %171 = arith.select %170, %163, %95 : vector<8x128xi1>, vector<8x128xf32>
    %c2_i32 = arith.constant 2 : i32
    %172 = arith.truncf %168 : vector<8x128xf32> to vector<8x128xbf16>
    %c0_50 = arith.constant 0 : index
    %c0_51 = arith.constant 0 : index
    %173 = vector.load %arg5[%c0_50, %c0_51] : memref<128x384xbf16, #tpu.memory_space<vmem>>, vector<128x384xbf16>
    %cst_52 = arith.constant dense<0.000000e+00> : vector<8x384xf32>
    %174 = tpu.matmul %172, %173, %cst_52 {dimension_numbers = #tpu.dot_dimension_numbers<[1], [0], [0], [1], [0, 0, 1, 1], [], []>} : vector<8x128xbf16>, vector<128x384xbf16>, vector<8x384xf32> -> vector<8x384xf32>
    %175 = arith.truncf %171 : vector<8x128xf32> to vector<8x128xbf16>
    %c0_53 = arith.constant 0 : index
    %c0_54 = arith.constant 0 : index
    %176 = vector.load %arg9[%c0_53, %c0_54] : memref<128x384xbf16, #tpu.memory_space<vmem>>, vector<128x384xbf16>
    %cst_55 = arith.constant dense<0.000000e+00> : vector<8x384xf32>
    %177 = tpu.matmul %175, %176, %cst_55 {dimension_numbers = #tpu.dot_dimension_numbers<[1], [0], [0], [1], [0, 0, 1, 1], [], []>} : vector<8x128xbf16>, vector<128x384xbf16>, vector<8x384xf32> -> vector<8x384xf32>
    %c8_i32_56 = arith.constant 8 : i32
    %178 = arith.muli %c2_i32, %c8_i32_56 : i32
    %179 = tpu.assume_multiple %178, 8 : i32
    %180 = arith.index_cast %179 : i32 to index
    %c0_57 = arith.constant 0 : index
    %181 = vector.load %arg15[%180, %c0_57] : memref<64x384xf32, #tpu.memory_space<vmem>>, vector<8x384xf32>
    %182 = vector.extract_strided_slice %181 {offsets = [0, 0], sizes = [8, 128], strides = [1, 1]} : vector<8x384xf32> to vector<8x128xf32>
    %183 = vector.extract_strided_slice %174 {offsets = [0, 0], sizes = [8, 128], strides = [1, 1]} : vector<8x384xf32> to vector<8x128xf32>
    %184 = arith.addf %182, %183 : vector<8x128xf32>
    %185 = arith.negf %184 : vector<8x128xf32>
    %186 = math.exp %185 : vector<8x128xf32>
    %cst_58 = arith.constant 1.000000e+00 : f32
    %187 = vector.broadcast %cst_58 : f32 to vector<8x128xf32>
    %188 = arith.addf %187, %186 : vector<8x128xf32>
    %189 = arith.divf %187, %188 : vector<8x128xf32>
    %190 = vector.extract_strided_slice %181 {offsets = [0, 128], sizes = [8, 128], strides = [1, 1]} : vector<8x384xf32> to vector<8x128xf32>
    %191 = vector.extract_strided_slice %174 {offsets = [0, 128], sizes = [8, 128], strides = [1, 1]} : vector<8x384xf32> to vector<8x128xf32>
    %192 = arith.addf %190, %191 : vector<8x128xf32>
    %193 = arith.negf %192 : vector<8x128xf32>
    %194 = math.exp %193 : vector<8x128xf32>
    %cst_59 = arith.constant 1.000000e+00 : f32
    %195 = vector.broadcast %cst_59 : f32 to vector<8x128xf32>
    %196 = arith.addf %195, %194 : vector<8x128xf32>
    %197 = arith.divf %195, %196 : vector<8x128xf32>
    %198 = vector.extract_strided_slice %181 {offsets = [0, 256], sizes = [8, 128], strides = [1, 1]} : vector<8x384xf32> to vector<8x128xf32>
    %199 = vector.extract_strided_slice %174 {offsets = [0, 256], sizes = [8, 128], strides = [1, 1]} : vector<8x384xf32> to vector<8x128xf32>
    %200 = arith.addf %199, %12 : vector<8x128xf32>
    %201 = arith.mulf %189, %200 : vector<8x128xf32>
    %202 = arith.addf %198, %201 : vector<8x128xf32>
    %203 = math.tanh %202 : vector<8x128xf32>
    %cst_60 = arith.constant 1.000000e+00 : f32
    %204 = vector.broadcast %cst_60 : f32 to vector<8x128xf32>
    %205 = arith.subf %204, %197 : vector<8x128xf32>
    %206 = arith.mulf %205, %203 : vector<8x128xf32>
    %207 = arith.mulf %197, %168 : vector<8x128xf32>
    %208 = arith.addf %206, %207 : vector<8x128xf32>
    %209 = arith.truncf %208 : vector<8x128xf32> to vector<8x128xbf16>
    %c0_61 = arith.constant 0 : index
    %c0_62 = arith.constant 0 : index
    %210 = vector.load %arg8[%c0_61, %c0_62] : memref<128x384xbf16, #tpu.memory_space<vmem>>, vector<128x384xbf16>
    %cst_63 = arith.constant dense<0.000000e+00> : vector<8x384xf32>
    %211 = tpu.matmul %209, %210, %cst_63 {dimension_numbers = #tpu.dot_dimension_numbers<[1], [0], [0], [1], [0, 0, 1, 1], [], []>} : vector<8x128xbf16>, vector<128x384xbf16>, vector<8x384xf32> -> vector<8x384xf32>
    %212 = arith.addf %211, %18 : vector<8x384xf32>
    %213 = vector.extract_strided_slice %212 {offsets = [0, 0], sizes = [8, 128], strides = [1, 1]} : vector<8x384xf32> to vector<8x128xf32>
    %214 = vector.extract_strided_slice %177 {offsets = [0, 0], sizes = [8, 128], strides = [1, 1]} : vector<8x384xf32> to vector<8x128xf32>
    %215 = arith.addf %213, %214 : vector<8x128xf32>
    %216 = arith.negf %215 : vector<8x128xf32>
    %217 = math.exp %216 : vector<8x128xf32>
    %cst_64 = arith.constant 1.000000e+00 : f32
    %218 = vector.broadcast %cst_64 : f32 to vector<8x128xf32>
    %219 = arith.addf %218, %217 : vector<8x128xf32>
    %220 = arith.divf %218, %219 : vector<8x128xf32>
    %221 = vector.extract_strided_slice %212 {offsets = [0, 128], sizes = [8, 128], strides = [1, 1]} : vector<8x384xf32> to vector<8x128xf32>
    %222 = vector.extract_strided_slice %177 {offsets = [0, 128], sizes = [8, 128], strides = [1, 1]} : vector<8x384xf32> to vector<8x128xf32>
    %223 = arith.addf %221, %222 : vector<8x128xf32>
    %224 = arith.negf %223 : vector<8x128xf32>
    %225 = math.exp %224 : vector<8x128xf32>
    %cst_65 = arith.constant 1.000000e+00 : f32
    %226 = vector.broadcast %cst_65 : f32 to vector<8x128xf32>
    %227 = arith.addf %226, %225 : vector<8x128xf32>
    %228 = arith.divf %226, %227 : vector<8x128xf32>
    %229 = vector.extract_strided_slice %212 {offsets = [0, 256], sizes = [8, 128], strides = [1, 1]} : vector<8x384xf32> to vector<8x128xf32>
    %230 = vector.extract_strided_slice %177 {offsets = [0, 256], sizes = [8, 128], strides = [1, 1]} : vector<8x384xf32> to vector<8x128xf32>
    %231 = arith.addf %230, %15 : vector<8x128xf32>
    %232 = arith.mulf %220, %231 : vector<8x128xf32>
    %233 = arith.addf %229, %232 : vector<8x128xf32>
    %234 = math.tanh %233 : vector<8x128xf32>
    %cst_66 = arith.constant 1.000000e+00 : f32
    %235 = vector.broadcast %cst_66 : f32 to vector<8x128xf32>
    %236 = arith.subf %235, %228 : vector<8x128xf32>
    %237 = arith.mulf %236, %234 : vector<8x128xf32>
    %238 = arith.mulf %228, %171 : vector<8x128xf32>
    %239 = arith.addf %237, %238 : vector<8x128xf32>
    %240 = vector.broadcast %c2_i32 : i32 to vector<8x1xi32>
    %241 = arith.cmpi slt, %240, %9 : vector<8x1xi32>
    %242 = vector.shape_cast %241 : vector<8x1xi1> to vector<8x1xi1>
    %243 = vector.broadcast %242 : vector<8x1xi1> to vector<8x128xi1>
    %244 = arith.select %243, %208, %168 : vector<8x128xi1>, vector<8x128xf32>
    %245 = vector.shape_cast %241 : vector<8x1xi1> to vector<8x1xi1>
    %246 = vector.broadcast %245 : vector<8x1xi1> to vector<8x128xi1>
    %247 = arith.select %246, %239, %171 : vector<8x128xi1>, vector<8x128xf32>
    %c3_i32 = arith.constant 3 : i32
    %248 = arith.truncf %244 : vector<8x128xf32> to vector<8x128xbf16>
    %c0_67 = arith.constant 0 : index
    %c0_68 = arith.constant 0 : index
    %249 = vector.load %arg5[%c0_67, %c0_68] : memref<128x384xbf16, #tpu.memory_space<vmem>>, vector<128x384xbf16>
    %cst_69 = arith.constant dense<0.000000e+00> : vector<8x384xf32>
    %250 = tpu.matmul %248, %249, %cst_69 {dimension_numbers = #tpu.dot_dimension_numbers<[1], [0], [0], [1], [0, 0, 1, 1], [], []>} : vector<8x128xbf16>, vector<128x384xbf16>, vector<8x384xf32> -> vector<8x384xf32>
    %251 = arith.truncf %247 : vector<8x128xf32> to vector<8x128xbf16>
    %c0_70 = arith.constant 0 : index
    %c0_71 = arith.constant 0 : index
    %252 = vector.load %arg9[%c0_70, %c0_71] : memref<128x384xbf16, #tpu.memory_space<vmem>>, vector<128x384xbf16>
    %cst_72 = arith.constant dense<0.000000e+00> : vector<8x384xf32>
    %253 = tpu.matmul %251, %252, %cst_72 {dimension_numbers = #tpu.dot_dimension_numbers<[1], [0], [0], [1], [0, 0, 1, 1], [], []>} : vector<8x128xbf16>, vector<128x384xbf16>, vector<8x384xf32> -> vector<8x384xf32>
    %c8_i32_73 = arith.constant 8 : i32
    %254 = arith.muli %c3_i32, %c8_i32_73 : i32
    %255 = tpu.assume_multiple %254, 8 : i32
    %256 = arith.index_cast %255 : i32 to index
    %c0_74 = arith.constant 0 : index
    %257 = vector.load %arg15[%256, %c0_74] : memref<64x384xf32, #tpu.memory_space<vmem>>, vector<8x384xf32>
    %258 = vector.extract_strided_slice %257 {offsets = [0, 0], sizes = [8, 128], strides = [1, 1]} : vector<8x384xf32> to vector<8x128xf32>
    %259 = vector.extract_strided_slice %250 {offsets = [0, 0], sizes = [8, 128], strides = [1, 1]} : vector<8x384xf32> to vector<8x128xf32>
    %260 = arith.addf %258, %259 : vector<8x128xf32>
    %261 = arith.negf %260 : vector<8x128xf32>
    %262 = math.exp %261 : vector<8x128xf32>
    %cst_75 = arith.constant 1.000000e+00 : f32
    %263 = vector.broadcast %cst_75 : f32 to vector<8x128xf32>
    %264 = arith.addf %263, %262 : vector<8x128xf32>
    %265 = arith.divf %263, %264 : vector<8x128xf32>
    %266 = vector.extract_strided_slice %257 {offsets = [0, 128], sizes = [8, 128], strides = [1, 1]} : vector<8x384xf32> to vector<8x128xf32>
    %267 = vector.extract_strided_slice %250 {offsets = [0, 128], sizes = [8, 128], strides = [1, 1]} : vector<8x384xf32> to vector<8x128xf32>
    %268 = arith.addf %266, %267 : vector<8x128xf32>
    %269 = arith.negf %268 : vector<8x128xf32>
    %270 = math.exp %269 : vector<8x128xf32>
    %cst_76 = arith.constant 1.000000e+00 : f32
    %271 = vector.broadcast %cst_76 : f32 to vector<8x128xf32>
    %272 = arith.addf %271, %270 : vector<8x128xf32>
    %273 = arith.divf %271, %272 : vector<8x128xf32>
    %274 = vector.extract_strided_slice %257 {offsets = [0, 256], sizes = [8, 128], strides = [1, 1]} : vector<8x384xf32> to vector<8x128xf32>
    %275 = vector.extract_strided_slice %250 {offsets = [0, 256], sizes = [8, 128], strides = [1, 1]} : vector<8x384xf32> to vector<8x128xf32>
    %276 = arith.addf %275, %12 : vector<8x128xf32>
    %277 = arith.mulf %265, %276 : vector<8x128xf32>
    %278 = arith.addf %274, %277 : vector<8x128xf32>
    %279 = math.tanh %278 : vector<8x128xf32>
    %cst_77 = arith.constant 1.000000e+00 : f32
    %280 = vector.broadcast %cst_77 : f32 to vector<8x128xf32>
    %281 = arith.subf %280, %273 : vector<8x128xf32>
    %282 = arith.mulf %281, %279 : vector<8x128xf32>
    %283 = arith.mulf %273, %244 : vector<8x128xf32>
    %284 = arith.addf %282, %283 : vector<8x128xf32>
    %285 = arith.truncf %284 : vector<8x128xf32> to vector<8x128xbf16>
    %c0_78 = arith.constant 0 : index
    %c0_79 = arith.constant 0 : index
    %286 = vector.load %arg8[%c0_78, %c0_79] : memref<128x384xbf16, #tpu.memory_space<vmem>>, vector<128x384xbf16>
    %cst_80 = arith.constant dense<0.000000e+00> : vector<8x384xf32>
    %287 = tpu.matmul %285, %286, %cst_80 {dimension_numbers = #tpu.dot_dimension_numbers<[1], [0], [0], [1], [0, 0, 1, 1], [], []>} : vector<8x128xbf16>, vector<128x384xbf16>, vector<8x384xf32> -> vector<8x384xf32>
    %288 = arith.addf %287, %18 : vector<8x384xf32>
    %289 = vector.extract_strided_slice %288 {offsets = [0, 0], sizes = [8, 128], strides = [1, 1]} : vector<8x384xf32> to vector<8x128xf32>
    %290 = vector.extract_strided_slice %253 {offsets = [0, 0], sizes = [8, 128], strides = [1, 1]} : vector<8x384xf32> to vector<8x128xf32>
    %291 = arith.addf %289, %290 : vector<8x128xf32>
    %292 = arith.negf %291 : vector<8x128xf32>
    %293 = math.exp %292 : vector<8x128xf32>
    %cst_81 = arith.constant 1.000000e+00 : f32
    %294 = vector.broadcast %cst_81 : f32 to vector<8x128xf32>
    %295 = arith.addf %294, %293 : vector<8x128xf32>
    %296 = arith.divf %294, %295 : vector<8x128xf32>
    %297 = vector.extract_strided_slice %288 {offsets = [0, 128], sizes = [8, 128], strides = [1, 1]} : vector<8x384xf32> to vector<8x128xf32>
    %298 = vector.extract_strided_slice %253 {offsets = [0, 128], sizes = [8, 128], strides = [1, 1]} : vector<8x384xf32> to vector<8x128xf32>
    %299 = arith.addf %297, %298 : vector<8x128xf32>
    %300 = arith.negf %299 : vector<8x128xf32>
    %301 = math.exp %300 : vector<8x128xf32>
    %cst_82 = arith.constant 1.000000e+00 : f32
    %302 = vector.broadcast %cst_82 : f32 to vector<8x128xf32>
    %303 = arith.addf %302, %301 : vector<8x128xf32>
    %304 = arith.divf %302, %303 : vector<8x128xf32>
    %305 = vector.extract_strided_slice %288 {offsets = [0, 256], sizes = [8, 128], strides = [1, 1]} : vector<8x384xf32> to vector<8x128xf32>
    %306 = vector.extract_strided_slice %253 {offsets = [0, 256], sizes = [8, 128], strides = [1, 1]} : vector<8x384xf32> to vector<8x128xf32>
    %307 = arith.addf %306, %15 : vector<8x128xf32>
    %308 = arith.mulf %296, %307 : vector<8x128xf32>
    %309 = arith.addf %305, %308 : vector<8x128xf32>
    %310 = math.tanh %309 : vector<8x128xf32>
    %cst_83 = arith.constant 1.000000e+00 : f32
    %311 = vector.broadcast %cst_83 : f32 to vector<8x128xf32>
    %312 = arith.subf %311, %304 : vector<8x128xf32>
    %313 = arith.mulf %312, %310 : vector<8x128xf32>
    %314 = arith.mulf %304, %247 : vector<8x128xf32>
    %315 = arith.addf %313, %314 : vector<8x128xf32>
    %316 = vector.broadcast %c3_i32 : i32 to vector<8x1xi32>
    %317 = arith.cmpi slt, %316, %9 : vector<8x1xi32>
    %318 = vector.shape_cast %317 : vector<8x1xi1> to vector<8x1xi1>
    %319 = vector.broadcast %318 : vector<8x1xi1> to vector<8x128xi1>
    %320 = arith.select %319, %284, %244 : vector<8x128xi1>, vector<8x128xf32>
    %321 = vector.shape_cast %317 : vector<8x1xi1> to vector<8x1xi1>
    %322 = vector.broadcast %321 : vector<8x1xi1> to vector<8x128xi1>
    %323 = arith.select %322, %315, %247 : vector<8x128xi1>, vector<8x128xf32>
    %c4_i32 = arith.constant 4 : i32
    %324 = arith.truncf %320 : vector<8x128xf32> to vector<8x128xbf16>
    %c0_84 = arith.constant 0 : index
    %c0_85 = arith.constant 0 : index
    %325 = vector.load %arg5[%c0_84, %c0_85] : memref<128x384xbf16, #tpu.memory_space<vmem>>, vector<128x384xbf16>
    %cst_86 = arith.constant dense<0.000000e+00> : vector<8x384xf32>
    %326 = tpu.matmul %324, %325, %cst_86 {dimension_numbers = #tpu.dot_dimension_numbers<[1], [0], [0], [1], [0, 0, 1, 1], [], []>} : vector<8x128xbf16>, vector<128x384xbf16>, vector<8x384xf32> -> vector<8x384xf32>
    %327 = arith.truncf %323 : vector<8x128xf32> to vector<8x128xbf16>
    %c0_87 = arith.constant 0 : index
    %c0_88 = arith.constant 0 : index
    %328 = vector.load %arg9[%c0_87, %c0_88] : memref<128x384xbf16, #tpu.memory_space<vmem>>, vector<128x384xbf16>
    %cst_89 = arith.constant dense<0.000000e+00> : vector<8x384xf32>
    %329 = tpu.matmul %327, %328, %cst_89 {dimension_numbers = #tpu.dot_dimension_numbers<[1], [0], [0], [1], [0, 0, 1, 1], [], []>} : vector<8x128xbf16>, vector<128x384xbf16>, vector<8x384xf32> -> vector<8x384xf32>
    %c8_i32_90 = arith.constant 8 : i32
    %330 = arith.muli %c4_i32, %c8_i32_90 : i32
    %331 = tpu.assume_multiple %330, 8 : i32
    %332 = arith.index_cast %331 : i32 to index
    %c0_91 = arith.constant 0 : index
    %333 = vector.load %arg15[%332, %c0_91] : memref<64x384xf32, #tpu.memory_space<vmem>>, vector<8x384xf32>
    %334 = vector.extract_strided_slice %333 {offsets = [0, 0], sizes = [8, 128], strides = [1, 1]} : vector<8x384xf32> to vector<8x128xf32>
    %335 = vector.extract_strided_slice %326 {offsets = [0, 0], sizes = [8, 128], strides = [1, 1]} : vector<8x384xf32> to vector<8x128xf32>
    %336 = arith.addf %334, %335 : vector<8x128xf32>
    %337 = arith.negf %336 : vector<8x128xf32>
    %338 = math.exp %337 : vector<8x128xf32>
    %cst_92 = arith.constant 1.000000e+00 : f32
    %339 = vector.broadcast %cst_92 : f32 to vector<8x128xf32>
    %340 = arith.addf %339, %338 : vector<8x128xf32>
    %341 = arith.divf %339, %340 : vector<8x128xf32>
    %342 = vector.extract_strided_slice %333 {offsets = [0, 128], sizes = [8, 128], strides = [1, 1]} : vector<8x384xf32> to vector<8x128xf32>
    %343 = vector.extract_strided_slice %326 {offsets = [0, 128], sizes = [8, 128], strides = [1, 1]} : vector<8x384xf32> to vector<8x128xf32>
    %344 = arith.addf %342, %343 : vector<8x128xf32>
    %345 = arith.negf %344 : vector<8x128xf32>
    %346 = math.exp %345 : vector<8x128xf32>
    %cst_93 = arith.constant 1.000000e+00 : f32
    %347 = vector.broadcast %cst_93 : f32 to vector<8x128xf32>
    %348 = arith.addf %347, %346 : vector<8x128xf32>
    %349 = arith.divf %347, %348 : vector<8x128xf32>
    %350 = vector.extract_strided_slice %333 {offsets = [0, 256], sizes = [8, 128], strides = [1, 1]} : vector<8x384xf32> to vector<8x128xf32>
    %351 = vector.extract_strided_slice %326 {offsets = [0, 256], sizes = [8, 128], strides = [1, 1]} : vector<8x384xf32> to vector<8x128xf32>
    %352 = arith.addf %351, %12 : vector<8x128xf32>
    %353 = arith.mulf %341, %352 : vector<8x128xf32>
    %354 = arith.addf %350, %353 : vector<8x128xf32>
    %355 = math.tanh %354 : vector<8x128xf32>
    %cst_94 = arith.constant 1.000000e+00 : f32
    %356 = vector.broadcast %cst_94 : f32 to vector<8x128xf32>
    %357 = arith.subf %356, %349 : vector<8x128xf32>
    %358 = arith.mulf %357, %355 : vector<8x128xf32>
    %359 = arith.mulf %349, %320 : vector<8x128xf32>
    %360 = arith.addf %358, %359 : vector<8x128xf32>
    %361 = arith.truncf %360 : vector<8x128xf32> to vector<8x128xbf16>
    %c0_95 = arith.constant 0 : index
    %c0_96 = arith.constant 0 : index
    %362 = vector.load %arg8[%c0_95, %c0_96] : memref<128x384xbf16, #tpu.memory_space<vmem>>, vector<128x384xbf16>
    %cst_97 = arith.constant dense<0.000000e+00> : vector<8x384xf32>
    %363 = tpu.matmul %361, %362, %cst_97 {dimension_numbers = #tpu.dot_dimension_numbers<[1], [0], [0], [1], [0, 0, 1, 1], [], []>} : vector<8x128xbf16>, vector<128x384xbf16>, vector<8x384xf32> -> vector<8x384xf32>
    %364 = arith.addf %363, %18 : vector<8x384xf32>
    %365 = vector.extract_strided_slice %364 {offsets = [0, 0], sizes = [8, 128], strides = [1, 1]} : vector<8x384xf32> to vector<8x128xf32>
    %366 = vector.extract_strided_slice %329 {offsets = [0, 0], sizes = [8, 128], strides = [1, 1]} : vector<8x384xf32> to vector<8x128xf32>
    %367 = arith.addf %365, %366 : vector<8x128xf32>
    %368 = arith.negf %367 : vector<8x128xf32>
    %369 = math.exp %368 : vector<8x128xf32>
    %cst_98 = arith.constant 1.000000e+00 : f32
    %370 = vector.broadcast %cst_98 : f32 to vector<8x128xf32>
    %371 = arith.addf %370, %369 : vector<8x128xf32>
    %372 = arith.divf %370, %371 : vector<8x128xf32>
    %373 = vector.extract_strided_slice %364 {offsets = [0, 128], sizes = [8, 128], strides = [1, 1]} : vector<8x384xf32> to vector<8x128xf32>
    %374 = vector.extract_strided_slice %329 {offsets = [0, 128], sizes = [8, 128], strides = [1, 1]} : vector<8x384xf32> to vector<8x128xf32>
    %375 = arith.addf %373, %374 : vector<8x128xf32>
    %376 = arith.negf %375 : vector<8x128xf32>
    %377 = math.exp %376 : vector<8x128xf32>
    %cst_99 = arith.constant 1.000000e+00 : f32
    %378 = vector.broadcast %cst_99 : f32 to vector<8x128xf32>
    %379 = arith.addf %378, %377 : vector<8x128xf32>
    %380 = arith.divf %378, %379 : vector<8x128xf32>
    %381 = vector.extract_strided_slice %364 {offsets = [0, 256], sizes = [8, 128], strides = [1, 1]} : vector<8x384xf32> to vector<8x128xf32>
    %382 = vector.extract_strided_slice %329 {offsets = [0, 256], sizes = [8, 128], strides = [1, 1]} : vector<8x384xf32> to vector<8x128xf32>
    %383 = arith.addf %382, %15 : vector<8x128xf32>
    %384 = arith.mulf %372, %383 : vector<8x128xf32>
    %385 = arith.addf %381, %384 : vector<8x128xf32>
    %386 = math.tanh %385 : vector<8x128xf32>
    %cst_100 = arith.constant 1.000000e+00 : f32
    %387 = vector.broadcast %cst_100 : f32 to vector<8x128xf32>
    %388 = arith.subf %387, %380 : vector<8x128xf32>
    %389 = arith.mulf %388, %386 : vector<8x128xf32>
    %390 = arith.mulf %380, %323 : vector<8x128xf32>
    %391 = arith.addf %389, %390 : vector<8x128xf32>
    %392 = vector.broadcast %c4_i32 : i32 to vector<8x1xi32>
    %393 = arith.cmpi slt, %392, %9 : vector<8x1xi32>
    %394 = vector.shape_cast %393 : vector<8x1xi1> to vector<8x1xi1>
    %395 = vector.broadcast %394 : vector<8x1xi1> to vector<8x128xi1>
    %396 = arith.select %395, %360, %320 : vector<8x128xi1>, vector<8x128xf32>
    %397 = vector.shape_cast %393 : vector<8x1xi1> to vector<8x1xi1>
    %398 = vector.broadcast %397 : vector<8x1xi1> to vector<8x128xi1>
    %399 = arith.select %398, %391, %323 : vector<8x128xi1>, vector<8x128xf32>
    %c5_i32 = arith.constant 5 : i32
    %400 = arith.truncf %396 : vector<8x128xf32> to vector<8x128xbf16>
    %c0_101 = arith.constant 0 : index
    %c0_102 = arith.constant 0 : index
    %401 = vector.load %arg5[%c0_101, %c0_102] : memref<128x384xbf16, #tpu.memory_space<vmem>>, vector<128x384xbf16>
    %cst_103 = arith.constant dense<0.000000e+00> : vector<8x384xf32>
    %402 = tpu.matmul %400, %401, %cst_103 {dimension_numbers = #tpu.dot_dimension_numbers<[1], [0], [0], [1], [0, 0, 1, 1], [], []>} : vector<8x128xbf16>, vector<128x384xbf16>, vector<8x384xf32> -> vector<8x384xf32>
    %403 = arith.truncf %399 : vector<8x128xf32> to vector<8x128xbf16>
    %c0_104 = arith.constant 0 : index
    %c0_105 = arith.constant 0 : index
    %404 = vector.load %arg9[%c0_104, %c0_105] : memref<128x384xbf16, #tpu.memory_space<vmem>>, vector<128x384xbf16>
    %cst_106 = arith.constant dense<0.000000e+00> : vector<8x384xf32>
    %405 = tpu.matmul %403, %404, %cst_106 {dimension_numbers = #tpu.dot_dimension_numbers<[1], [0], [0], [1], [0, 0, 1, 1], [], []>} : vector<8x128xbf16>, vector<128x384xbf16>, vector<8x384xf32> -> vector<8x384xf32>
    %c8_i32_107 = arith.constant 8 : i32
    %406 = arith.muli %c5_i32, %c8_i32_107 : i32
    %407 = tpu.assume_multiple %406, 8 : i32
    %408 = arith.index_cast %407 : i32 to index
    %c0_108 = arith.constant 0 : index
    %409 = vector.load %arg15[%408, %c0_108] : memref<64x384xf32, #tpu.memory_space<vmem>>, vector<8x384xf32>
    %410 = vector.extract_strided_slice %409 {offsets = [0, 0], sizes = [8, 128], strides = [1, 1]} : vector<8x384xf32> to vector<8x128xf32>
    %411 = vector.extract_strided_slice %402 {offsets = [0, 0], sizes = [8, 128], strides = [1, 1]} : vector<8x384xf32> to vector<8x128xf32>
    %412 = arith.addf %410, %411 : vector<8x128xf32>
    %413 = arith.negf %412 : vector<8x128xf32>
    %414 = math.exp %413 : vector<8x128xf32>
    %cst_109 = arith.constant 1.000000e+00 : f32
    %415 = vector.broadcast %cst_109 : f32 to vector<8x128xf32>
    %416 = arith.addf %415, %414 : vector<8x128xf32>
    %417 = arith.divf %415, %416 : vector<8x128xf32>
    %418 = vector.extract_strided_slice %409 {offsets = [0, 128], sizes = [8, 128], strides = [1, 1]} : vector<8x384xf32> to vector<8x128xf32>
    %419 = vector.extract_strided_slice %402 {offsets = [0, 128], sizes = [8, 128], strides = [1, 1]} : vector<8x384xf32> to vector<8x128xf32>
    %420 = arith.addf %418, %419 : vector<8x128xf32>
    %421 = arith.negf %420 : vector<8x128xf32>
    %422 = math.exp %421 : vector<8x128xf32>
    %cst_110 = arith.constant 1.000000e+00 : f32
    %423 = vector.broadcast %cst_110 : f32 to vector<8x128xf32>
    %424 = arith.addf %423, %422 : vector<8x128xf32>
    %425 = arith.divf %423, %424 : vector<8x128xf32>
    %426 = vector.extract_strided_slice %409 {offsets = [0, 256], sizes = [8, 128], strides = [1, 1]} : vector<8x384xf32> to vector<8x128xf32>
    %427 = vector.extract_strided_slice %402 {offsets = [0, 256], sizes = [8, 128], strides = [1, 1]} : vector<8x384xf32> to vector<8x128xf32>
    %428 = arith.addf %427, %12 : vector<8x128xf32>
    %429 = arith.mulf %417, %428 : vector<8x128xf32>
    %430 = arith.addf %426, %429 : vector<8x128xf32>
    %431 = math.tanh %430 : vector<8x128xf32>
    %cst_111 = arith.constant 1.000000e+00 : f32
    %432 = vector.broadcast %cst_111 : f32 to vector<8x128xf32>
    %433 = arith.subf %432, %425 : vector<8x128xf32>
    %434 = arith.mulf %433, %431 : vector<8x128xf32>
    %435 = arith.mulf %425, %396 : vector<8x128xf32>
    %436 = arith.addf %434, %435 : vector<8x128xf32>
    %437 = arith.truncf %436 : vector<8x128xf32> to vector<8x128xbf16>
    %c0_112 = arith.constant 0 : index
    %c0_113 = arith.constant 0 : index
    %438 = vector.load %arg8[%c0_112, %c0_113] : memref<128x384xbf16, #tpu.memory_space<vmem>>, vector<128x384xbf16>
    %cst_114 = arith.constant dense<0.000000e+00> : vector<8x384xf32>
    %439 = tpu.matmul %437, %438, %cst_114 {dimension_numbers = #tpu.dot_dimension_numbers<[1], [0], [0], [1], [0, 0, 1, 1], [], []>} : vector<8x128xbf16>, vector<128x384xbf16>, vector<8x384xf32> -> vector<8x384xf32>
    %440 = arith.addf %439, %18 : vector<8x384xf32>
    %441 = vector.extract_strided_slice %440 {offsets = [0, 0], sizes = [8, 128], strides = [1, 1]} : vector<8x384xf32> to vector<8x128xf32>
    %442 = vector.extract_strided_slice %405 {offsets = [0, 0], sizes = [8, 128], strides = [1, 1]} : vector<8x384xf32> to vector<8x128xf32>
    %443 = arith.addf %441, %442 : vector<8x128xf32>
    %444 = arith.negf %443 : vector<8x128xf32>
    %445 = math.exp %444 : vector<8x128xf32>
    %cst_115 = arith.constant 1.000000e+00 : f32
    %446 = vector.broadcast %cst_115 : f32 to vector<8x128xf32>
    %447 = arith.addf %446, %445 : vector<8x128xf32>
    %448 = arith.divf %446, %447 : vector<8x128xf32>
    %449 = vector.extract_strided_slice %440 {offsets = [0, 128], sizes = [8, 128], strides = [1, 1]} : vector<8x384xf32> to vector<8x128xf32>
    %450 = vector.extract_strided_slice %405 {offsets = [0, 128], sizes = [8, 128], strides = [1, 1]} : vector<8x384xf32> to vector<8x128xf32>
    %451 = arith.addf %449, %450 : vector<8x128xf32>
    %452 = arith.negf %451 : vector<8x128xf32>
    %453 = math.exp %452 : vector<8x128xf32>
    %cst_116 = arith.constant 1.000000e+00 : f32
    %454 = vector.broadcast %cst_116 : f32 to vector<8x128xf32>
    %455 = arith.addf %454, %453 : vector<8x128xf32>
    %456 = arith.divf %454, %455 : vector<8x128xf32>
    %457 = vector.extract_strided_slice %440 {offsets = [0, 256], sizes = [8, 128], strides = [1, 1]} : vector<8x384xf32> to vector<8x128xf32>
    %458 = vector.extract_strided_slice %405 {offsets = [0, 256], sizes = [8, 128], strides = [1, 1]} : vector<8x384xf32> to vector<8x128xf32>
    %459 = arith.addf %458, %15 : vector<8x128xf32>
    %460 = arith.mulf %448, %459 : vector<8x128xf32>
    %461 = arith.addf %457, %460 : vector<8x128xf32>
    %462 = math.tanh %461 : vector<8x128xf32>
    %cst_117 = arith.constant 1.000000e+00 : f32
    %463 = vector.broadcast %cst_117 : f32 to vector<8x128xf32>
    %464 = arith.subf %463, %456 : vector<8x128xf32>
    %465 = arith.mulf %464, %462 : vector<8x128xf32>
    %466 = arith.mulf %456, %399 : vector<8x128xf32>
    %467 = arith.addf %465, %466 : vector<8x128xf32>
    %468 = vector.broadcast %c5_i32 : i32 to vector<8x1xi32>
    %469 = arith.cmpi slt, %468, %9 : vector<8x1xi32>
    %470 = vector.shape_cast %469 : vector<8x1xi1> to vector<8x1xi1>
    %471 = vector.broadcast %470 : vector<8x1xi1> to vector<8x128xi1>
    %472 = arith.select %471, %436, %396 : vector<8x128xi1>, vector<8x128xf32>
    %473 = vector.shape_cast %469 : vector<8x1xi1> to vector<8x1xi1>
    %474 = vector.broadcast %473 : vector<8x1xi1> to vector<8x128xi1>
    %475 = arith.select %474, %467, %399 : vector<8x128xi1>, vector<8x128xf32>
    %c6_i32 = arith.constant 6 : i32
    %476 = arith.truncf %472 : vector<8x128xf32> to vector<8x128xbf16>
    %c0_118 = arith.constant 0 : index
    %c0_119 = arith.constant 0 : index
    %477 = vector.load %arg5[%c0_118, %c0_119] : memref<128x384xbf16, #tpu.memory_space<vmem>>, vector<128x384xbf16>
    %cst_120 = arith.constant dense<0.000000e+00> : vector<8x384xf32>
    %478 = tpu.matmul %476, %477, %cst_120 {dimension_numbers = #tpu.dot_dimension_numbers<[1], [0], [0], [1], [0, 0, 1, 1], [], []>} : vector<8x128xbf16>, vector<128x384xbf16>, vector<8x384xf32> -> vector<8x384xf32>
    %479 = arith.truncf %475 : vector<8x128xf32> to vector<8x128xbf16>
    %c0_121 = arith.constant 0 : index
    %c0_122 = arith.constant 0 : index
    %480 = vector.load %arg9[%c0_121, %c0_122] : memref<128x384xbf16, #tpu.memory_space<vmem>>, vector<128x384xbf16>
    %cst_123 = arith.constant dense<0.000000e+00> : vector<8x384xf32>
    %481 = tpu.matmul %479, %480, %cst_123 {dimension_numbers = #tpu.dot_dimension_numbers<[1], [0], [0], [1], [0, 0, 1, 1], [], []>} : vector<8x128xbf16>, vector<128x384xbf16>, vector<8x384xf32> -> vector<8x384xf32>
    %c8_i32_124 = arith.constant 8 : i32
    %482 = arith.muli %c6_i32, %c8_i32_124 : i32
    %483 = tpu.assume_multiple %482, 8 : i32
    %484 = arith.index_cast %483 : i32 to index
    %c0_125 = arith.constant 0 : index
    %485 = vector.load %arg15[%484, %c0_125] : memref<64x384xf32, #tpu.memory_space<vmem>>, vector<8x384xf32>
    %486 = vector.extract_strided_slice %485 {offsets = [0, 0], sizes = [8, 128], strides = [1, 1]} : vector<8x384xf32> to vector<8x128xf32>
    %487 = vector.extract_strided_slice %478 {offsets = [0, 0], sizes = [8, 128], strides = [1, 1]} : vector<8x384xf32> to vector<8x128xf32>
    %488 = arith.addf %486, %487 : vector<8x128xf32>
    %489 = arith.negf %488 : vector<8x128xf32>
    %490 = math.exp %489 : vector<8x128xf32>
    %cst_126 = arith.constant 1.000000e+00 : f32
    %491 = vector.broadcast %cst_126 : f32 to vector<8x128xf32>
    %492 = arith.addf %491, %490 : vector<8x128xf32>
    %493 = arith.divf %491, %492 : vector<8x128xf32>
    %494 = vector.extract_strided_slice %485 {offsets = [0, 128], sizes = [8, 128], strides = [1, 1]} : vector<8x384xf32> to vector<8x128xf32>
    %495 = vector.extract_strided_slice %478 {offsets = [0, 128], sizes = [8, 128], strides = [1, 1]} : vector<8x384xf32> to vector<8x128xf32>
    %496 = arith.addf %494, %495 : vector<8x128xf32>
    %497 = arith.negf %496 : vector<8x128xf32>
    %498 = math.exp %497 : vector<8x128xf32>
    %cst_127 = arith.constant 1.000000e+00 : f32
    %499 = vector.broadcast %cst_127 : f32 to vector<8x128xf32>
    %500 = arith.addf %499, %498 : vector<8x128xf32>
    %501 = arith.divf %499, %500 : vector<8x128xf32>
    %502 = vector.extract_strided_slice %485 {offsets = [0, 256], sizes = [8, 128], strides = [1, 1]} : vector<8x384xf32> to vector<8x128xf32>
    %503 = vector.extract_strided_slice %478 {offsets = [0, 256], sizes = [8, 128], strides = [1, 1]} : vector<8x384xf32> to vector<8x128xf32>
    %504 = arith.addf %503, %12 : vector<8x128xf32>
    %505 = arith.mulf %493, %504 : vector<8x128xf32>
    %506 = arith.addf %502, %505 : vector<8x128xf32>
    %507 = math.tanh %506 : vector<8x128xf32>
    %cst_128 = arith.constant 1.000000e+00 : f32
    %508 = vector.broadcast %cst_128 : f32 to vector<8x128xf32>
    %509 = arith.subf %508, %501 : vector<8x128xf32>
    %510 = arith.mulf %509, %507 : vector<8x128xf32>
    %511 = arith.mulf %501, %472 : vector<8x128xf32>
    %512 = arith.addf %510, %511 : vector<8x128xf32>
    %513 = arith.truncf %512 : vector<8x128xf32> to vector<8x128xbf16>
    %c0_129 = arith.constant 0 : index
    %c0_130 = arith.constant 0 : index
    %514 = vector.load %arg8[%c0_129, %c0_130] : memref<128x384xbf16, #tpu.memory_space<vmem>>, vector<128x384xbf16>
    %cst_131 = arith.constant dense<0.000000e+00> : vector<8x384xf32>
    %515 = tpu.matmul %513, %514, %cst_131 {dimension_numbers = #tpu.dot_dimension_numbers<[1], [0], [0], [1], [0, 0, 1, 1], [], []>} : vector<8x128xbf16>, vector<128x384xbf16>, vector<8x384xf32> -> vector<8x384xf32>
    %516 = arith.addf %515, %18 : vector<8x384xf32>
    %517 = vector.extract_strided_slice %516 {offsets = [0, 0], sizes = [8, 128], strides = [1, 1]} : vector<8x384xf32> to vector<8x128xf32>
    %518 = vector.extract_strided_slice %481 {offsets = [0, 0], sizes = [8, 128], strides = [1, 1]} : vector<8x384xf32> to vector<8x128xf32>
    %519 = arith.addf %517, %518 : vector<8x128xf32>
    %520 = arith.negf %519 : vector<8x128xf32>
    %521 = math.exp %520 : vector<8x128xf32>
    %cst_132 = arith.constant 1.000000e+00 : f32
    %522 = vector.broadcast %cst_132 : f32 to vector<8x128xf32>
    %523 = arith.addf %522, %521 : vector<8x128xf32>
    %524 = arith.divf %522, %523 : vector<8x128xf32>
    %525 = vector.extract_strided_slice %516 {offsets = [0, 128], sizes = [8, 128], strides = [1, 1]} : vector<8x384xf32> to vector<8x128xf32>
    %526 = vector.extract_strided_slice %481 {offsets = [0, 128], sizes = [8, 128], strides = [1, 1]} : vector<8x384xf32> to vector<8x128xf32>
    %527 = arith.addf %525, %526 : vector<8x128xf32>
    %528 = arith.negf %527 : vector<8x128xf32>
    %529 = math.exp %528 : vector<8x128xf32>
    %cst_133 = arith.constant 1.000000e+00 : f32
    %530 = vector.broadcast %cst_133 : f32 to vector<8x128xf32>
    %531 = arith.addf %530, %529 : vector<8x128xf32>
    %532 = arith.divf %530, %531 : vector<8x128xf32>
    %533 = vector.extract_strided_slice %516 {offsets = [0, 256], sizes = [8, 128], strides = [1, 1]} : vector<8x384xf32> to vector<8x128xf32>
    %534 = vector.extract_strided_slice %481 {offsets = [0, 256], sizes = [8, 128], strides = [1, 1]} : vector<8x384xf32> to vector<8x128xf32>
    %535 = arith.addf %534, %15 : vector<8x128xf32>
    %536 = arith.mulf %524, %535 : vector<8x128xf32>
    %537 = arith.addf %533, %536 : vector<8x128xf32>
    %538 = math.tanh %537 : vector<8x128xf32>
    %cst_134 = arith.constant 1.000000e+00 : f32
    %539 = vector.broadcast %cst_134 : f32 to vector<8x128xf32>
    %540 = arith.subf %539, %532 : vector<8x128xf32>
    %541 = arith.mulf %540, %538 : vector<8x128xf32>
    %542 = arith.mulf %532, %475 : vector<8x128xf32>
    %543 = arith.addf %541, %542 : vector<8x128xf32>
    %544 = vector.broadcast %c6_i32 : i32 to vector<8x1xi32>
    %545 = arith.cmpi slt, %544, %9 : vector<8x1xi32>
    %546 = vector.shape_cast %545 : vector<8x1xi1> to vector<8x1xi1>
    %547 = vector.broadcast %546 : vector<8x1xi1> to vector<8x128xi1>
    %548 = arith.select %547, %512, %472 : vector<8x128xi1>, vector<8x128xf32>
    %549 = vector.shape_cast %545 : vector<8x1xi1> to vector<8x1xi1>
    %550 = vector.broadcast %549 : vector<8x1xi1> to vector<8x128xi1>
    %551 = arith.select %550, %543, %475 : vector<8x128xi1>, vector<8x128xf32>
    %c7_i32 = arith.constant 7 : i32
    %552 = arith.truncf %548 : vector<8x128xf32> to vector<8x128xbf16>
    %c0_135 = arith.constant 0 : index
    %c0_136 = arith.constant 0 : index
    %553 = vector.load %arg5[%c0_135, %c0_136] : memref<128x384xbf16, #tpu.memory_space<vmem>>, vector<128x384xbf16>
    %cst_137 = arith.constant dense<0.000000e+00> : vector<8x384xf32>
    %554 = tpu.matmul %552, %553, %cst_137 {dimension_numbers = #tpu.dot_dimension_numbers<[1], [0], [0], [1], [0, 0, 1, 1], [], []>} : vector<8x128xbf16>, vector<128x384xbf16>, vector<8x384xf32> -> vector<8x384xf32>
    %555 = arith.truncf %551 : vector<8x128xf32> to vector<8x128xbf16>
    %c0_138 = arith.constant 0 : index
    %c0_139 = arith.constant 0 : index
    %556 = vector.load %arg9[%c0_138, %c0_139] : memref<128x384xbf16, #tpu.memory_space<vmem>>, vector<128x384xbf16>
    %cst_140 = arith.constant dense<0.000000e+00> : vector<8x384xf32>
    %557 = tpu.matmul %555, %556, %cst_140 {dimension_numbers = #tpu.dot_dimension_numbers<[1], [0], [0], [1], [0, 0, 1, 1], [], []>} : vector<8x128xbf16>, vector<128x384xbf16>, vector<8x384xf32> -> vector<8x384xf32>
    %c8_i32_141 = arith.constant 8 : i32
    %558 = arith.muli %c7_i32, %c8_i32_141 : i32
    %559 = tpu.assume_multiple %558, 8 : i32
    %560 = arith.index_cast %559 : i32 to index
    %c0_142 = arith.constant 0 : index
    %561 = vector.load %arg15[%560, %c0_142] : memref<64x384xf32, #tpu.memory_space<vmem>>, vector<8x384xf32>
    %562 = vector.extract_strided_slice %561 {offsets = [0, 0], sizes = [8, 128], strides = [1, 1]} : vector<8x384xf32> to vector<8x128xf32>
    %563 = vector.extract_strided_slice %554 {offsets = [0, 0], sizes = [8, 128], strides = [1, 1]} : vector<8x384xf32> to vector<8x128xf32>
    %564 = arith.addf %562, %563 : vector<8x128xf32>
    %565 = arith.negf %564 : vector<8x128xf32>
    %566 = math.exp %565 : vector<8x128xf32>
    %cst_143 = arith.constant 1.000000e+00 : f32
    %567 = vector.broadcast %cst_143 : f32 to vector<8x128xf32>
    %568 = arith.addf %567, %566 : vector<8x128xf32>
    %569 = arith.divf %567, %568 : vector<8x128xf32>
    %570 = vector.extract_strided_slice %561 {offsets = [0, 128], sizes = [8, 128], strides = [1, 1]} : vector<8x384xf32> to vector<8x128xf32>
    %571 = vector.extract_strided_slice %554 {offsets = [0, 128], sizes = [8, 128], strides = [1, 1]} : vector<8x384xf32> to vector<8x128xf32>
    %572 = arith.addf %570, %571 : vector<8x128xf32>
    %573 = arith.negf %572 : vector<8x128xf32>
    %574 = math.exp %573 : vector<8x128xf32>
    %cst_144 = arith.constant 1.000000e+00 : f32
    %575 = vector.broadcast %cst_144 : f32 to vector<8x128xf32>
    %576 = arith.addf %575, %574 : vector<8x128xf32>
    %577 = arith.divf %575, %576 : vector<8x128xf32>
    %578 = vector.extract_strided_slice %561 {offsets = [0, 256], sizes = [8, 128], strides = [1, 1]} : vector<8x384xf32> to vector<8x128xf32>
    %579 = vector.extract_strided_slice %554 {offsets = [0, 256], sizes = [8, 128], strides = [1, 1]} : vector<8x384xf32> to vector<8x128xf32>
    %580 = arith.addf %579, %12 : vector<8x128xf32>
    %581 = arith.mulf %569, %580 : vector<8x128xf32>
    %582 = arith.addf %578, %581 : vector<8x128xf32>
    %583 = math.tanh %582 : vector<8x128xf32>
    %cst_145 = arith.constant 1.000000e+00 : f32
    %584 = vector.broadcast %cst_145 : f32 to vector<8x128xf32>
    %585 = arith.subf %584, %577 : vector<8x128xf32>
    %586 = arith.mulf %585, %583 : vector<8x128xf32>
    %587 = arith.mulf %577, %548 : vector<8x128xf32>
    %588 = arith.addf %586, %587 : vector<8x128xf32>
    %589 = arith.truncf %588 : vector<8x128xf32> to vector<8x128xbf16>
    %c0_146 = arith.constant 0 : index
    %c0_147 = arith.constant 0 : index
    %590 = vector.load %arg8[%c0_146, %c0_147] : memref<128x384xbf16, #tpu.memory_space<vmem>>, vector<128x384xbf16>
    %cst_148 = arith.constant dense<0.000000e+00> : vector<8x384xf32>
    %591 = tpu.matmul %589, %590, %cst_148 {dimension_numbers = #tpu.dot_dimension_numbers<[1], [0], [0], [1], [0, 0, 1, 1], [], []>} : vector<8x128xbf16>, vector<128x384xbf16>, vector<8x384xf32> -> vector<8x384xf32>
    %592 = arith.addf %591, %18 : vector<8x384xf32>
    %593 = vector.extract_strided_slice %592 {offsets = [0, 0], sizes = [8, 128], strides = [1, 1]} : vector<8x384xf32> to vector<8x128xf32>
    %594 = vector.extract_strided_slice %557 {offsets = [0, 0], sizes = [8, 128], strides = [1, 1]} : vector<8x384xf32> to vector<8x128xf32>
    %595 = arith.addf %593, %594 : vector<8x128xf32>
    %596 = arith.negf %595 : vector<8x128xf32>
    %597 = math.exp %596 : vector<8x128xf32>
    %cst_149 = arith.constant 1.000000e+00 : f32
    %598 = vector.broadcast %cst_149 : f32 to vector<8x128xf32>
    %599 = arith.addf %598, %597 : vector<8x128xf32>
    %600 = arith.divf %598, %599 : vector<8x128xf32>
    %601 = vector.extract_strided_slice %592 {offsets = [0, 128], sizes = [8, 128], strides = [1, 1]} : vector<8x384xf32> to vector<8x128xf32>
    %602 = vector.extract_strided_slice %557 {offsets = [0, 128], sizes = [8, 128], strides = [1, 1]} : vector<8x384xf32> to vector<8x128xf32>
    %603 = arith.addf %601, %602 : vector<8x128xf32>
    %604 = arith.negf %603 : vector<8x128xf32>
    %605 = math.exp %604 : vector<8x128xf32>
    %cst_150 = arith.constant 1.000000e+00 : f32
    %606 = vector.broadcast %cst_150 : f32 to vector<8x128xf32>
    %607 = arith.addf %606, %605 : vector<8x128xf32>
    %608 = arith.divf %606, %607 : vector<8x128xf32>
    %609 = vector.extract_strided_slice %592 {offsets = [0, 256], sizes = [8, 128], strides = [1, 1]} : vector<8x384xf32> to vector<8x128xf32>
    %610 = vector.extract_strided_slice %557 {offsets = [0, 256], sizes = [8, 128], strides = [1, 1]} : vector<8x384xf32> to vector<8x128xf32>
    %611 = arith.addf %610, %15 : vector<8x128xf32>
    %612 = arith.mulf %600, %611 : vector<8x128xf32>
    %613 = arith.addf %609, %612 : vector<8x128xf32>
    %614 = math.tanh %613 : vector<8x128xf32>
    %cst_151 = arith.constant 1.000000e+00 : f32
    %615 = vector.broadcast %cst_151 : f32 to vector<8x128xf32>
    %616 = arith.subf %615, %608 : vector<8x128xf32>
    %617 = arith.mulf %616, %614 : vector<8x128xf32>
    %618 = arith.mulf %608, %551 : vector<8x128xf32>
    %619 = arith.addf %617, %618 : vector<8x128xf32>
    %620 = vector.broadcast %c7_i32 : i32 to vector<8x1xi32>
    %621 = arith.cmpi slt, %620, %9 : vector<8x1xi32>
    %622 = vector.shape_cast %621 : vector<8x1xi1> to vector<8x1xi1>
    %623 = vector.broadcast %622 : vector<8x1xi1> to vector<8x128xi1>
    %624 = arith.select %623, %588, %548 : vector<8x128xi1>, vector<8x128xf32>
    %625 = vector.shape_cast %621 : vector<8x1xi1> to vector<8x1xi1>
    %626 = vector.broadcast %625 : vector<8x1xi1> to vector<8x128xi1>
    %627 = arith.select %626, %619, %551 : vector<8x128xi1>, vector<8x128xf32>
    %c8_i32_152 = arith.constant 8 : i32
    %c0_153 = arith.constant 0 : index
    %c0_154 = arith.constant 0 : index
    %628 = vector.load %arg3[%c0_153, %c0_154] : memref<8x128xf32, #tpu.memory_space<vmem>>, vector<8x128xf32>
    %629 = arith.truncf %627 : vector<8x128xf32> to vector<8x128xbf16>
    %c0_155 = arith.constant 0 : index
    %c0_156 = arith.constant 0 : index
    %630 = vector.load %arg12[%c0_155, %c0_156] : memref<128x128xbf16, #tpu.memory_space<vmem>>, vector<128x128xbf16>
    %cst_157 = arith.constant dense<0.000000e+00> : vector<8x128xf32>
    %631 = tpu.matmul %629, %630, %cst_157 {dimension_numbers = #tpu.dot_dimension_numbers<[1], [0], [0], [1], [0, 0, 1, 1], [], []>} : vector<8x128xbf16>, vector<128x128xbf16>, vector<8x128xf32> -> vector<8x128xf32>
    %632 = arith.addf %628, %631 : vector<8x128xf32>
    %c0_158 = arith.constant 0 : index
    %c0_159 = arith.constant 0 : index
    %633 = vector.load %arg13[%c0_158, %c0_159] : memref<1x128xf32, #tpu.memory_space<vmem>>, vector<1x128xf32>
    %634 = vector.broadcast %633 : vector<1x128xf32> to vector<8x128xf32>
    %635 = arith.addf %632, %634 : vector<8x128xf32>
    %c0_160 = arith.constant 0 : index
    %c0_161 = arith.constant 0 : index
    %636 = vector.load %arg14[%c0_160, %c0_161] : memref<8x128xf32, #tpu.memory_space<vmem>>, vector<8x128xf32>
    tpu.vector_store %arg14[%c0_160, %c0_161], %635 {strides = array<i32>} : memref<8x128xf32, #tpu.memory_space<vmem>>, vector<8x128xf32>,
    return
  }
  func.func @transform_0(%arg0: i32) -> (i32, i32, i32) {
    %c0_i32 = arith.constant 0 : i32
    %c0_i32_0 = arith.constant 0 : i32
    %c0_i32_1 = arith.constant 0 : i32
    return %arg0, %c0_i32, %c0_i32_0 : i32, i32, i32
  }
  func.func @transform_1(%arg0: i32) -> (i32, i32) {
    %c0_i32 = arith.constant 0 : i32
    %c0_i32_0 = arith.constant 0 : i32
    return %arg0, %c0_i32 : i32, i32
  }
  func.func @transform_2(%arg0: i32) -> (i32, i32) {
    %c0_i32 = arith.constant 0 : i32
    %c0_i32_0 = arith.constant 0 : i32
    return %arg0, %c0_i32 : i32, i32
  }
  func.func @transform_3(%arg0: i32) -> (i32, i32) {
    %c0_i32 = arith.constant 0 : i32
    %c0_i32_0 = arith.constant 0 : i32
    %c0_i32_1 = arith.constant 0 : i32
    return %c0_i32, %c0_i32_0 : i32, i32
  }
  func.func @transform_4(%arg0: i32) -> (i32, i32) {
    %c0_i32 = arith.constant 0 : i32
    %c0_i32_0 = arith.constant 0 : i32
    %c0_i32_1 = arith.constant 0 : i32
    return %c0_i32, %c0_i32_0 : i32, i32
  }
  func.func @transform_5(%arg0: i32) -> (i32, i32) {
    %c0_i32 = arith.constant 0 : i32
    %c0_i32_0 = arith.constant 0 : i32
    %c0_i32_1 = arith.constant 0 : i32
    return %c0_i32, %c0_i32_0 : i32, i32
  }
  func.func @transform_6(%arg0: i32) -> (i32, i32) {
    %c0_i32 = arith.constant 0 : i32
    %c0_i32_0 = arith.constant 0 : i32
    %c0_i32_1 = arith.constant 0 : i32
    return %c0_i32, %c0_i32_0 : i32, i32
  }
  func.func @transform_7(%arg0: i32) -> (i32, i32) {
    %c0_i32 = arith.constant 0 : i32
    %c0_i32_0 = arith.constant 0 : i32
    %c0_i32_1 = arith.constant 0 : i32
    return %c0_i32, %c0_i32_0 : i32, i32
  }
  func.func @transform_8(%arg0: i32) -> (i32, i32) {
    %c0_i32 = arith.constant 0 : i32
    %c0_i32_0 = arith.constant 0 : i32
    %c0_i32_1 = arith.constant 0 : i32
    return %c0_i32, %c0_i32_0 : i32, i32
  }
  func.func @transform_9(%arg0: i32) -> (i32, i32) {
    %c0_i32 = arith.constant 0 : i32
    %c0_i32_0 = arith.constant 0 : i32
    %c0_i32_1 = arith.constant 0 : i32
    return %c0_i32, %c0_i32_0 : i32, i32
  }
  func.func @transform_10(%arg0: i32) -> (i32, i32) {
    %c0_i32 = arith.constant 0 : i32
    %c0_i32_0 = arith.constant 0 : i32
    %c0_i32_1 = arith.constant 0 : i32
    return %c0_i32, %c0_i32_0 : i32, i32
  }
  func.func @transform_11(%arg0: i32) -> (i32, i32) {
    %c0_i32 = arith.constant 0 : i32
    %c0_i32_0 = arith.constant 0 : i32
    %c0_i32_1 = arith.constant 0 : i32
    return %c0_i32, %c0_i32_0 : i32, i32
  }
  func.func @transform_12(%arg0: i32) -> (i32, i32) {
    %c0_i32 = arith.constant 0 : i32
    %c0_i32_0 = arith.constant 0 : i32
    %c0_i32_1 = arith.constant 0 : i32
    return %c0_i32, %c0_i32_0 : i32, i32
  }
  func.func @transform_13(%arg0: i32) -> (i32, i32) {
    %c0_i32 = arith.constant 0 : i32
    %c0_i32_0 = arith.constant 0 : i32
    return %arg0, %c0_i32 : i32, i32
  }
}

</mosaic_0001>

<llo_original>
// kernel: tpu_custom_call.1
$region0: #{tpu_custom_call.1}
  #allocation0 [shape = 'u32[]', space=smem, size = 0x4, offset = 0x4, fixed_abs, tag = 'smem constant byte address 0x4 - core index']
  #allocation1 [shape = 'u32[72,128]{1,0:T(1,128)}', space=vmem, size = 0x9000, scoped, tag = 'internal scratch']
  #allocation2 [shape = 'f32[64,384]{1,0:T(8,128)}', space=vmem, size = 0x18000, scoped, tag = 'scratch operand']
  %s0 = inlined_call_operand.hbm [shape: bf16[1,64,128], index: 0, kind: input, shape index: {}]
  %s1 = inlined_call_operand.vmem [shape: s32[8,1], index: 1, kind: input, shape index: {}]
  %s2 = inlined_call_operand.vmem [shape: f32[8,128], index: 2, kind: input, shape index: {}]
  %s3 = inlined_call_operand.hbm [shape: bf16[128,384], index: 3, kind: input, shape index: {}]
  %s4 = inlined_call_operand.hbm [shape: bf16[128,384], index: 4, kind: input, shape index: {}]
  %s5 = inlined_call_operand.vmem [shape: f32[1,384], index: 5, kind: input, shape index: {}]
  %s6 = inlined_call_operand.hbm [shape: f32[1,128], index: 6, kind: input, shape index: {}]
  %s7 = inlined_call_operand.hbm [shape: bf16[128,384], index: 7, kind: input, shape index: {}]
  %s8 = inlined_call_operand.hbm [shape: bf16[128,384], index: 8, kind: input, shape index: {}]
  %s9 = inlined_call_operand.vmem [shape: f32[1,384], index: 9, kind: input, shape index: {}]
  %s10 = inlined_call_operand.vmem [shape: f32[1,128], index: 10, kind: input, shape index: {}]
  %s11 = inlined_call_operand.hbm [shape: bf16[128,128], index: 11, kind: input, shape index: {}]
  %s12 = inlined_call_operand.vmem [shape: f32[1,128], index: 12, kind: input, shape index: {}]
  %s13 = inlined_call_operand.hbm [shape: f32[8,128], index: 13, kind: output, shape index: {}]
  %s14 = sld [smem:[#allocation0]]
  $region90: #{tpu_custom_call.1} parent=0
    _
  %s16 = ssub.s32 1, %s14
  %s17 = scalar_select 0, %s16, %s14
  $region1: #{tpu_custom_call.1} parent=0
    #allocation3 [shape = 'u8[16384]{0}', space=vmem, size = 0x4000, scoped, tag = 'input window, operand 0, single buffered']
    #allocation4 [shape = 's32[1]{0}', space=sflag, size = 0x4, scoped, tag = 'scoped memory for tpu_custom_call.1']
    #allocation5 [shape = 's32[1]{0}', space=sflag, size = 0x4, scoped, tag = 'scoped memory for tpu_custom_call.1']
    #allocation6 [shape = 'u8[98304]{0}', space=vmem, size = 0x18000, scoped, tag = 'input window, operand 3, single buffered']
    #allocation7 [shape = 's32[1]{0}', space=sflag, size = 0x4, scoped, tag = 'scoped memory for tpu_custom_call.1']
    #allocation8 [shape = 'u8[98304]{0}', space=vmem, size = 0x18000, scoped, tag = 'input window, operand 4, single buffered']
    #allocation9 [shape = 'u8[512]{0}', space=vmem, size = 0x400, scoped, tag = 'input window, operand 6, single buffered']
    #allocation10 [shape = 's32[1]{0}', space=sflag, size = 0x4, scoped, tag = 'scoped memory for tpu_custom_call.1']
    #allocation11 [shape = 'u8[98304]{0}', space=vmem, size = 0x18000, scoped, tag = 'input window, operand 7, single buffered']
    #allocation12 [shape = 'u8[98304]{0}', space=vmem, size = 0x18000, scoped, tag = 'input window, operand 8, single buffered']
    #allocation13 [shape = 's32[1]{0}', space=sflag, size = 0x4, scoped, tag = 'scoped memory for tpu_custom_call.1']
    #allocation14 [shape = 'u8[32768]{0}', space=vmem, size = 0x8000, scoped, tag = 'input window, operand 11, single buffered']
    #allocation15 [shape = 'u8[4096]{0}', space=vmem, size = 0x1000, scoped, tag = 'output window, operand 0, single buffered']
    %18 = vsyncpa [#allocation4], 0
    %19 = vsyncpa [#allocation7], 0
    %20 = vsyncpa [#allocation10], 0
    %21 = vsyncpa [#allocation13], 0
    %22 = vsyncpa [#allocation5], 0
    // Predicated region
    $region2: #{tpu_custom_call.1} parent=1 // pred_check
      _
    $region3: #{tpu_custom_call.1} parent=1 // pred_check_branch
      %24 = sbr.rel (0) target = $region5
    $region4: #{tpu_custom_call.1} parent=1 // pred_region
      %26 = vsyncadd [#allocation4], 0
      %s27 = sshll.u32 %s0, 4
      %s28 = int_to_ptr.hbm [resolvable:$true] %s27
      %s29 = sshll.u32 [#allocation3], 4
      %s30 = int_to_ptr.vmem [resolvable:$true] %s29
      %35 = dma.hbm_to_vmem [thread:$0]  %s28, 512, %s30, [#allocation4], 64, 64, 4
    $region5: #{tpu_custom_call.1} parent=1 // pred_fallthru
      _
    // Predicated region
    $region6: #{tpu_custom_call.1} parent=1 // pred_check
      _
    $region7: #{tpu_custom_call.1} parent=1 // pred_check_branch
      %37 = sbr.rel (0) target = $region9
    $region8: #{tpu_custom_call.1} parent=1 // pred_region
      _
    $region9: #{tpu_custom_call.1} parent=1 // pred_fallthru
      _
    // Predicated region
    $region10: #{tpu_custom_call.1} parent=1 // pred_check
      _
    $region11: #{tpu_custom_call.1} parent=1 // pred_check_branch
      %39 = sbr.rel (0) target = $region13
    $region12: #{tpu_custom_call.1} parent=1 // pred_region
      _
    $region13: #{tpu_custom_call.1} parent=1 // pred_fallthru
      _
    // Predicated region
    $region14: #{tpu_custom_call.1} parent=1 // pred_check
      _
    $region15: #{tpu_custom_call.1} parent=1 // pred_check_branch
      %41 = sbr.rel (0) target = $region17
    $region16: #{tpu_custom_call.1} parent=1 // pred_region
      %43 = vsyncadd [#allocation7], 0
      %s44 = sshll.u32 %s3, 4
      %s45 = int_to_ptr.hbm [resolvable:$true] %s44
      %s46 = sshll.u32 [#allocation6], 4
      %s47 = int_to_ptr.vmem [resolvable:$true] %s46
      %52 = dma.hbm_to_vmem [thread:$0]  %s45, 3072, %s47, [#allocation7], 192, 192, 12
    $region17: #{tpu_custom_call.1} parent=1 // pred_fallthru
      _
    // Predicated region
    $region18: #{tpu_custom_call.1} parent=1 // pred_check
      _
    $region19: #{tpu_custom_call.1} parent=1 // pred_check_branch
      %54 = sbr.rel (0) target = $region21
    $region20: #{tpu_custom_call.1} parent=1 // pred_region
      %56 = vsyncadd [#allocation7], 0
      %s57 = sshll.u32 %s4, 4
      %s58 = int_to_ptr.hbm [resolvable:$true] %s57
      %s59 = sshll.u32 [#allocation8], 4
      %s60 = int_to_ptr.vmem [resolvable:$true] %s59
      %65 = dma.hbm_to_vmem [thread:$0]  %s58, 3072, %s60, [#allocation7], 192, 192, 12
    $region21: #{tpu_custom_call.1} parent=1 // pred_fallthru
      _
    // Predicated region
    $region22: #{tpu_custom_call.1} parent=1 // pred_check
      _
    $region23: #{tpu_custom_call.1} parent=1 // pred_check_branch
      %67 = sbr.rel (0) target = $region25
    $region24: #{tpu_custom_call.1} parent=1 // pred_region
      _
    $region25: #{tpu_custom_call.1} parent=1 // pred_fallthru
      _
    // Predicated region
    $region26: #{tpu_custom_call.1} parent=1 // pred_check
      _
    $region27: #{tpu_custom_call.1} parent=1 // pred_check_branch
      %69 = sbr.rel (0) target = $region29
    $region28: #{tpu_custom_call.1} parent=1 // pred_region
      %71 = vsyncadd [#allocation10], 0
      %s73 = sshll.u32 %s6, 4
      %s74 = int_to_ptr.hbm [resolvable:$true] %s73
      %s75 = sshll.u32 [#allocation9], 4
      %s76 = int_to_ptr.vmem [resolvable:$true] %s75
      %78 = dma.hbm_to_vmem [thread:$0]  %s74, 16, %s76, [#allocation10]
    $region29: #{tpu_custom_call.1} parent=1 // pred_fallthru
      _
    // Predicated region
    $region30: #{tpu_custom_call.1} parent=1 // pred_check
      _
    $region31: #{tpu_custom_call.1} parent=1 // pred_check_branch
      %80 = sbr.rel (0) target = $region33
    $region32: #{tpu_custom_call.1} parent=1 // pred_region
      %82 = vsyncadd [#allocation10], 0
      %s83 = sshll.u32 %s7, 4
      %s84 = int_to_ptr.hbm [resolvable:$true] %s83
      %s85 = sshll.u32 [#allocation11], 4
      %s86 = int_to_ptr.vmem [resolvable:$true] %s85
      %91 = dma.hbm_to_vmem [thread:$0]  %s84, 3072, %s86, [#allocation10], 192, 192, 12
    $region33: #{tpu_custom_call.1} parent=1 // pred_fallthru
      _
    // Predicated region
    $region34: #{tpu_custom_call.1} parent=1 // pred_check
      _
    $region35: #{tpu_custom_call.1} parent=1 // pred_check_branch
      %93 = sbr.rel (0) target = $region37
    $region36: #{tpu_custom_call.1} parent=1 // pred_region
      %95 = vsyncadd [#allocation13], 0
      %s96 = sshll.u32 %s8, 4
      %s97 = int_to_ptr.hbm [resolvable:$true] %s96
      %s98 = sshll.u32 [#allocation12], 4
      %s99 = int_to_ptr.vmem [resolvable:$true] %s98
      %104 = dma.hbm_to_vmem [thread:$0]  %s97, 3072, %s99, [#allocation13], 192, 192, 12
    $region37: #{tpu_custom_call.1} parent=1 // pred_fallthru
      _
    // Predicated region
    $region38: #{tpu_custom_call.1} parent=1 // pred_check
      _
    $region39: #{tpu_custom_call.1} parent=1 // pred_check_branch
      %106 = sbr.rel (0) target = $region41
    $region40: #{tpu_custom_call.1} parent=1 // pred_region
      _
    $region41: #{tpu_custom_call.1} parent=1 // pred_fallthru
      _
    // Predicated region
    $region42: #{tpu_custom_call.1} parent=1 // pred_check
      _
    $region43: #{tpu_custom_call.1} parent=1 // pred_check_branch
      %108 = sbr.rel (0) target = $region45
    $region44: #{tpu_custom_call.1} parent=1 // pred_region
      _
    $region45: #{tpu_custom_call.1} parent=1 // pred_fallthru
      _
    // Predicated region
    $region46: #{tpu_custom_call.1} parent=1 // pred_check
      _
    $region47: #{tpu_custom_call.1} parent=1 // pred_check_branch
      %110 = sbr.rel (0) target = $region49
    $region48: #{tpu_custom_call.1} parent=1 // pred_region
      %112 = vsyncadd [#allocation13], 0
      %s113 = sshll.u32 %s11, 4
      %s114 = int_to_ptr.hbm [resolvable:$true] %s113
      %s115 = sshll.u32 [#allocation14], 4
      %s116 = int_to_ptr.vmem [resolvable:$true] %s115
      %121 = dma.hbm_to_vmem [thread:$0]  %s114, 1024, %s116, [#allocation13], 64, 64, 4
    $region49: #{tpu_custom_call.1} parent=1 // pred_fallthru
      _
    // Predicated region
    $region50: #{tpu_custom_call.1} parent=1 // pred_check
      _
    $region51: #{tpu_custom_call.1} parent=1 // pred_check_branch
      %123 = sbr.rel (0) target = $region53
    $region52: #{tpu_custom_call.1} parent=1 // pred_region
      _
    $region53: #{tpu_custom_call.1} parent=1 // pred_fallthru
      _
    // Predicated region
    $region54: #{tpu_custom_call.1} parent=1 // pred_check
      _
    $region55: #{tpu_custom_call.1} parent=1 // pred_check_branch
      %125 = sbr.rel (0) target = $region57
    $region56: #{tpu_custom_call.1} parent=1 // pred_region
      %127 = dma.done [#allocation4], 512
    $region57: #{tpu_custom_call.1} parent=1 // pred_fallthru
      _
    // Predicated region
    $region58: #{tpu_custom_call.1} parent=1 // pred_check
      _
    $region59: #{tpu_custom_call.1} parent=1 // pred_check_branch
      %129 = sbr.rel (0) target = $region61
    $region60: #{tpu_custom_call.1} parent=1 // pred_region
      %131 = dma.done [#allocation7], 3072
    $region61: #{tpu_custom_call.1} parent=1 // pred_fallthru
      _
    // Predicated region
    $region62: #{tpu_custom_call.1} parent=1 // pred_check
      _
    $region63: #{tpu_custom_call.1} parent=1 // pred_check_branch
      %133 = sbr.rel (0) target = $region65
    $region64: #{tpu_custom_call.1} parent=1 // pred_region
      %135 = dma.done [#allocation7], 3072
    $region65: #{tpu_custom_call.1} parent=1 // pred_fallthru
      _
    // Predicated region
    $region66: #{tpu_custom_call.1} parent=1 // pred_check
      _
    $region67: #{tpu_custom_call.1} parent=1 // pred_check_branch
      %137 = sbr.rel (0) target = $region69
    $region68: #{tpu_custom_call.1} parent=1 // pred_region
      %139 = dma.done [#allocation10], 16
    $region69: #{tpu_custom_call.1} parent=1 // pred_fallthru
      _
    // Predicated region
    $region70: #{tpu_custom_call.1} parent=1 // pred_check
      _
    $region71: #{tpu_custom_call.1} parent=1 // pred_check_branch
      %141 = sbr.rel (0) target = $region73
    $region72: #{tpu_custom_call.1} parent=1 // pred_region
      %143 = dma.done [#allocation10], 3072
    $region73: #{tpu_custom_call.1} parent=1 // pred_fallthru
      _
    // Predicated region
    $region74: #{tpu_custom_call.1} parent=1 // pred_check
      _
    $region75: #{tpu_custom_call.1} parent=1 // pred_check_branch
      %145 = sbr.rel (0) target = $region77
    $region76: #{tpu_custom_call.1} parent=1 // pred_region
      %147 = dma.done [#allocation13], 3072
    $region77: #{tpu_custom_call.1} parent=1 // pred_fallthru
      _
    // Predicated region
    $region78: #{tpu_custom_call.1} parent=1 // pred_check
      _
    $region79: #{tpu_custom_call.1} parent=1 // pred_check_branch
      %149 = sbr.rel (0) target = $region81
    $region80: #{tpu_custom_call.1} parent=1 // pred_region
      %151 = dma.done [#allocation13], 1024
    $region81: #{tpu_custom_call.1} parent=1 // pred_fallthru
      _
    %v153 = vld [vmem:[%s5] sm:$0x7]
    %v155 = vperm.slane %v153, 0
    %v156 = vperm.slane %v153, 1
    %v157 = vperm.slane %v153, 2
    %v161 = vld [vmem:[#allocation3] sm:$0xf]
    %v162 = vld [vmem:[#allocation3 + $0x4] sm:$0xf]
    %v163 = vld [vmem:[#allocation3 + $0x8] sm:$0xf]
    %v164 = vld [vmem:[#allocation3 + $0xc] sm:$0xf]
    %v165 = vld [vmem:[#allocation3 + $0x10] sm:$0xf]
    %v166 = vld [vmem:[#allocation3 + $0x14] sm:$0xf]
    %v167 = vld [vmem:[#allocation3 + $0x18] sm:$0xf]
    %v168 = vld [vmem:[#allocation3 + $0x1c] sm:$0xf]
    %v169 = vld [vmem:[#allocation6] sm:$0xff]
    %v170 = vld [vmem:[#allocation6 + $0x8] sm:$0xf]
    %v171 = vld [vmem:[#allocation6 + $0xc] sm:$0xff]
    %v172 = vld [vmem:[#allocation6 + $0x14] sm:$0xf]
    %v173 = vld [vmem:[#allocation6 + $0x18] sm:$0xff]
    %v174 = vld [vmem:[#allocation6 + $0x20] sm:$0xf]
    %v175 = vld [vmem:[#allocation6 + $0x24] sm:$0xff]
    %v176 = vld [vmem:[#allocation6 + $0x2c] sm:$0xf]
    %v177 = vld [vmem:[#allocation6 + $0x30] sm:$0xff]
    %v178 = vld [vmem:[#allocation6 + $0x38] sm:$0xf]
    %v179 = vld [vmem:[#allocation6 + $0x3c] sm:$0xff]
    %v180 = vld [vmem:[#allocation6 + $0x44] sm:$0xf]
    %v181 = vld [vmem:[#allocation6 + $0x48] sm:$0xff]
    %v182 = vld [vmem:[#allocation6 + $0x50] sm:$0xf]
    %v183 = vld [vmem:[#allocation6 + $0x54] sm:$0xff]
    %v184 = vld [vmem:[#allocation6 + $0x5c] sm:$0xf]
    %v185 = vld [vmem:[#allocation6 + $0x60] sm:$0xff]
    %v186 = vld [vmem:[#allocation6 + $0x68] sm:$0xf]
    %v187 = vld [vmem:[#allocation6 + $0x6c] sm:$0xff]
    %v188 = vld [vmem:[#allocation6 + $0x74] sm:$0xf]
    %v189 = vld [vmem:[#allocation6 + $0x78] sm:$0xff]
    %v190 = vld [vmem:[#allocation6 + $0x80] sm:$0xf]
    %v191 = vld [vmem:[#allocation6 + $0x84] sm:$0xff]
    %v192 = vld [vmem:[#allocation6 + $0x8c] sm:$0xf]
    %v193 = vld [vmem:[#allocation6 + $0x90] sm:$0xff]
    %v194 = vld [vmem:[#allocation6 + $0x98] sm:$0xf]
    %v195 = vld [vmem:[#allocation6 + $0x9c] sm:$0xff]
    %v196 = vld [vmem:[#allocation6 + $0xa4] sm:$0xf]
    %v197 = vld [vmem:[#allocation6 + $0xa8] sm:$0xff]
    %v198 = vld [vmem:[#allocation6 + $0xb0] sm:$0xf]
    %v199 = vld [vmem:[#allocation6 + $0xb4] sm:$0xff]
    %v200 = vld [vmem:[#allocation6 + $0xbc] sm:$0xf]
    %v209 = vunpack.c.l.b16 %v161
    %v210 = vunpack.c.l.b16 %v162
    %v211 = vunpack.c.l.b16 %v163
    %v212 = vunpack.c.l.b16 %v164
    %v213 = vunpack.c.l.b16 %v165
    %v214 = vunpack.c.l.b16 %v166
    %v215 = vunpack.c.l.b16 %v167
    %v216 = vunpack.c.l.b16 %v168
    %v217 = vpack.c.b16 %v210, %v209
    %v218 = vpack.c.b16 %v212, %v211
    %v219 = vpack.c.b16 %v214, %v213
    %v220 = vpack.c.b16 %v216, %v215
    %v257 = vunpack.c.l.b16 %v169
    %v258 = vunpack.c.h.b16 %v169
    %v259 = vunpack.c.l.b16 %v170
    %v260 = vunpack.c.l.b16 %v171
    %v261 = vunpack.c.h.b16 %v171
    %v262 = vunpack.c.l.b16 %v172
    %v263 = vunpack.c.l.b16 %v173
    %v264 = vunpack.c.h.b16 %v173
    %v265 = vunpack.c.l.b16 %v174
    %v266 = vunpack.c.l.b16 %v175
    %v267 = vunpack.c.h.b16 %v175
    %v268 = vunpack.c.l.b16 %v176
    %v269 = vunpack.c.l.b16 %v177
    %v270 = vunpack.c.h.b16 %v177
    %v271 = vunpack.c.l.b16 %v178
    %v272 = vunpack.c.l.b16 %v179
    %v273 = vunpack.c.h.b16 %v179
    %v274 = vunpack.c.l.b16 %v180
    %v275 = vunpack.c.l.b16 %v181
    %v276 = vunpack.c.h.b16 %v181
    %v277 = vunpack.c.l.b16 %v182
    %v278 = vunpack.c.l.b16 %v183
    %v279 = vunpack.c.h.b16 %v183
    %v280 = vunpack.c.l.b16 %v184
    %v281 = vunpack.c.l.b16 %v185
    %v282 = vunpack.c.h.b16 %v185
    %v283 = vunpack.c.l.b16 %v186
    %v284 = vunpack.c.l.b16 %v187
    %v285 = vunpack.c.h.b16 %v187
    %v286 = vunpack.c.l.b16 %v188
    %v287 = vunpack.c.l.b16 %v189
    %v288 = vunpack.c.h.b16 %v189
    %v289 = vunpack.c.l.b16 %v190
    %v290 = vunpack.c.l.b16 %v191
    %v291 = vunpack.c.h.b16 %v191
    %v292 = vunpack.c.l.b16 %v192
    %v293 = vunpack.c.l.b16 %v193
    %v294 = vunpack.c.h.b16 %v193
    %v295 = vunpack.c.l.b16 %v194
    %v296 = vunpack.c.l.b16 %v195
    %v297 = vunpack.c.h.b16 %v195
    %v298 = vunpack.c.l.b16 %v196
    %v299 = vunpack.c.l.b16 %v197
    %v300 = vunpack.c.h.b16 %v197
    %v301 = vunpack.c.l.b16 %v198
    %v302 = vunpack.c.l.b16 %v199
    %v303 = vunpack.c.h.b16 %v199
    %v304 = vunpack.c.l.b16 %v200
    %v305 = vpack.c.b16 %v260, %v257
    %v306 = vpack.c.b16 %v261, %v258
    %v307 = vpack.c.b16 %v262, %v259
    %v308 = vpack.c.b16 %v266, %v263
    %v309 = vpack.c.b16 %v267, %v264
    %v310 = vpack.c.b16 %v268, %v265
    %v311 = vpack.c.b16 %v272, %v269
    %v312 = vpack.c.b16 %v273, %v270
    %v313 = vpack.c.b16 %v274, %v271
    %v314 = vpack.c.b16 %v278, %v275
    %v315 = vpack.c.b16 %v279, %v276
    %v316 = vpack.c.b16 %v280, %v277
    %v317 = vpack.c.b16 %v284, %v281
    %v318 = vpack.c.b16 %v285, %v282
    %v319 = vpack.c.b16 %v286, %v283
    %v320 = vpack.c.b16 %v290, %v287
    %v321 = vpack.c.b16 %v291, %v288
    %v322 = vpack.c.b16 %v292, %v289
    %v323 = vpack.c.b16 %v296, %v293
    %v324 = vpack.c.b16 %v297, %v294
    %v325 = vpack.c.b16 %v298, %v295
    %v326 = vpack.c.b16 %v302, %v299
    %v327 = vpack.c.b16 %v303, %v300
    %v328 = vpack.c.b16 %v304, %v301
    %353 = vmatpush.bf16.msra.mxu0 %v326
    %354 = vmatpush.bf16.msra.mxu0 %v323
    %355 = vmatpush.bf16.msra.mxu0 %v320
    %356 = vmatpush.bf16.msra.mxu0 %v317
    %357 = vmatpush.bf16.msra.mxu0 %v314
    %358 = vmatpush.bf16.msra.mxu0 %v311
    %359 = vmatpush.bf16.msra.mxu0 %v308
    %360 = vmatpush.bf16.msra.mxu0 %v305
    %361 = vmatmul.bf16.gmra.mxu0 %v217
    %v362 = vpop.f32.mrf.mxu0
    %v363 = vadd.f32 %v155, %v362
    %v364 = vpop.f32.mrf.mxu0
    %v365 = vadd.f32 %v155, %v364
    %366 = vmatmul.bf16.gmra.mxu0 %v218
    %v367 = vpop.f32.mrf.mxu0
    %v368 = vadd.f32 %v155, %v367
    %v369 = vpop.f32.mrf.mxu0
    %v370 = vadd.f32 %v155, %v369
    %371 = vmatmul.bf16.gmra.mxu0 %v219
    %v372 = vpop.f32.mrf.mxu0
    %v373 = vadd.f32 %v155, %v372
    %v374 = vpop.f32.mrf.mxu0
    %v375 = vadd.f32 %v155, %v374
    %376 = vmatmul.bf16.gmra.mxu0 %v220
    %v377 = vpop.f32.mrf.mxu0
    %v378 = vadd.f32 %v155, %v377
    %v379 = vpop.f32.mrf.mxu0
    %v380 = vadd.f32 %v155, %v379
    %381 = vdwg.mxu0
    %382 = vmatpush.bf16.msra.mxu0 %v327
    %383 = vmatpush.bf16.msra.mxu0 %v324
    %384 = vmatpush.bf16.msra.mxu0 %v321
    %385 = vmatpush.bf16.msra.mxu0 %v318
    %386 = vmatpush.bf16.msra.mxu0 %v315
    %387 = vmatpush.bf16.msra.mxu0 %v312
    %388 = vmatpush.bf16.msra.mxu0 %v309
    %389 = vmatpush.bf16.msra.mxu0 %v306
    %390 = vmatmul.bf16.gmra.mxu0 %v217
    %v391 = vpop.f32.mrf.mxu0
    %v392 = vadd.f32 %v156, %v391
    %v393 = vpop.f32.mrf.mxu0
    %v394 = vadd.f32 %v156, %v393
    %395 = vmatmul.bf16.gmra.mxu0 %v218
    %v396 = vpop.f32.mrf.mxu0
    %v397 = vadd.f32 %v156, %v396
    %v398 = vpop.f32.mrf.mxu0
    %v399 = vadd.f32 %v156, %v398
    %400 = vmatmul.bf16.gmra.mxu0 %v219
    %v401 = vpop.f32.mrf.mxu0
    %v402 = vadd.f32 %v156, %v401
    %v403 = vpop.f32.mrf.mxu0
    %v404 = vadd.f32 %v156, %v403
    %405 = vmatmul.bf16.gmra.mxu0 %v220
    %v406 = vpop.f32.mrf.mxu0
    %v407 = vadd.f32 %v156, %v406
    %v408 = vpop.f32.mrf.mxu0
    %v409 = vadd.f32 %v156, %v408
    %410 = vdwg.mxu0
    %411 = vmatpush.bf16.msra.mxu0 %v328
    %412 = vmatpush.bf16.msra.mxu0 %v325
    %413 = vmatpush.bf16.msra.mxu0 %v322
    %414 = vmatpush.bf16.msra.mxu0 %v319
    %415 = vmatpush.bf16.msra.mxu0 %v316
    %416 = vmatpush.bf16.msra.mxu0 %v313
    %417 = vmatpush.bf16.msra.mxu0 %v310
    %418 = vmatpush.bf16.msra.mxu0 %v307
    %419 = vmatmul.bf16.gmra.mxu0 %v217
    %v420 = vpop.f32.mrf.mxu0
    %v421 = vadd.f32 %v157, %v420
    %v422 = vpop.f32.mrf.mxu0
    %v423 = vadd.f32 %v157, %v422
    %424 = vmatmul.bf16.gmra.mxu0 %v218
    %v425 = vpop.f32.mrf.mxu0
    %v426 = vadd.f32 %v157, %v425
    %v427 = vpop.f32.mrf.mxu0
    %v428 = vadd.f32 %v157, %v427
    %429 = vmatmul.bf16.gmra.mxu0 %v219
    %v430 = vpop.f32.mrf.mxu0
    %v431 = vadd.f32 %v157, %v430
    %v432 = vpop.f32.mrf.mxu0
    %v433 = vadd.f32 %v157, %v432
    %434 = vmatmul.bf16.gmra.mxu0 %v220
    %v435 = vpop.f32.mrf.mxu0
    %v436 = vadd.f32 %v157, %v435
    %v437 = vpop.f32.mrf.mxu0
    %v438 = vadd.f32 %v157, %v437
    %439 = vdwg.mxu0
    %440 = vst [vmem:[#allocation2] sm:$0xff] %v363
    %441 = vst [vmem:[#allocation2 + $0x8] sm:$0xff] %v392
    %442 = vst [vmem:[#allocation2 + $0x10] sm:$0xff] %v421
    %443 = vst [vmem:[#allocation2 + $0x18] sm:$0xff] %v365
    %444 = vst [vmem:[#allocation2 + $0x20] sm:$0xff] %v394
    %445 = vst [vmem:[#allocation2 + $0x28] sm:$0xff] %v423
    %446 = vst [vmem:[#allocation2 + $0x30] sm:$0xff] %v368
    %447 = vst [vmem:[#allocation2 + $0x38] sm:$0xff] %v397
    %448 = vst [vmem:[#allocation2 + $0x40] sm:$0xff] %v426
    %449 = vst [vmem:[#allocation2 + $0x48] sm:$0xff] %v370
    %450 = vst [vmem:[#allocation2 + $0x50] sm:$0xff] %v399
    %451 = vst [vmem:[#allocation2 + $0x58] sm:$0xff] %v428
    %452 = vst [vmem:[#allocation2 + $0x60] sm:$0xff] %v373
    %453 = vst [vmem:[#allocation2 + $0x68] sm:$0xff] %v402
    %454 = vst [vmem:[#allocation2 + $0x70] sm:$0xff] %v431
    %455 = vst [vmem:[#allocation2 + $0x78] sm:$0xff] %v375
    %456 = vst [vmem:[#allocation2 + $0x80] sm:$0xff] %v404
    %457 = vst [vmem:[#allocation2 + $0x88] sm:$0xff] %v433
    %458 = vst [vmem:[#allocation2 + $0x90] sm:$0xff] %v378
    %459 = vst [vmem:[#allocation2 + $0x98] sm:$0xff] %v407
    %460 = vst [vmem:[#allocation2 + $0xa0] sm:$0xff] %v436
    %461 = vst [vmem:[#allocation2 + $0xa8] sm:$0xff] %v380
    %462 = vst [vmem:[#allocation2 + $0xb0] sm:$0xff] %v409
    %463 = vst [vmem:[#allocation2 + $0xb8] sm:$0xff] %v438
    %v464 = vld [vmem:[%s1] sm:$0xff]
    %v465 = vld [vmem:[#allocation9] sm:$0x1]
    %v467 = vperm.slane %v465, 0
    %v469 = vld [vmem:[%s10] sm:$0x1]
    %v471 = vperm.slane %v469, 0
    %v473 = vld [vmem:[%s9] sm:$0x7]
    %v475 = vperm.slane %v473, 0
    %v476 = vperm.slane %v473, 1
    %v477 = vperm.slane %v473, 2
    %v481 = vld [vmem:[#allocation8] sm:$0xff]
    %v482 = vld [vmem:[#allocation8 + $0x8] sm:$0xf]
    %v483 = vld [vmem:[#allocation8 + $0xc] sm:$0xff]
    %v484 = vld [vmem:[#allocation8 + $0x14] sm:$0xf]
    %v485 = vld [vmem:[#allocation8 + $0x18] sm:$0xff]
    %v486 = vld [vmem:[#allocation8 + $0x20] sm:$0xf]
    %v487 = vld [vmem:[#allocation8 + $0x24] sm:$0xff]
    %v488 = vld [vmem:[#allocation8 + $0x2c] sm:$0xf]
    %v489 = vld [vmem:[#allocation8 + $0x30] sm:$0xff]
    %v490 = vld [vmem:[#allocation8 + $0x38] sm:$0xf]
    %v491 = vld [vmem:[#allocation8 + $0x3c] sm:$0xff]
    %v492 = vld [vmem:[#allocation8 + $0x44] sm:$0xf]
    %v493 = vld [vmem:[#allocation8 + $0x48] sm:$0xff]
    %v494 = vld [vmem:[#allocation8 + $0x50] sm:$0xf]
    %v495 = vld [vmem:[#allocation8 + $0x54] sm:$0xff]
    %v496 = vld [vmem:[#allocation8 + $0x5c] sm:$0xf]
    %v497 = vld [vmem:[#allocation8 + $0x60] sm:$0xff]
    %v498 = vld [vmem:[#allocation8 + $0x68] sm:$0xf]
    %v499 = vld [vmem:[#allocation8 + $0x6c] sm:$0xff]
    %v500 = vld [vmem:[#allocation8 + $0x74] sm:$0xf]
    %v501 = vld [vmem:[#allocation8 + $0x78] sm:$0xff]
    %v502 = vld [vmem:[#allocation8 + $0x80] sm:$0xf]
    %v503 = vld [vmem:[#allocation8 + $0x84] sm:$0xff]
    %v504 = vld [vmem:[#allocation8 + $0x8c] sm:$0xf]
    %v505 = vld [vmem:[#allocation8 + $0x90] sm:$0xff]
    %v506 = vld [vmem:[#allocation8 + $0x98] sm:$0xf]
    %v507 = vld [vmem:[#allocation8 + $0x9c] sm:$0xff]
    %v508 = vld [vmem:[#allocation8 + $0xa4] sm:$0xf]
    %v509 = vld [vmem:[#allocation8 + $0xa8] sm:$0xff]
    %v510 = vld [vmem:[#allocation8 + $0xb0] sm:$0xf]
    %v511 = vld [vmem:[#allocation8 + $0xb4] sm:$0xff]
    %v512 = vld [vmem:[#allocation8 + $0xbc] sm:$0xf]
    %v545 = vunpack.c.l.b16 %v481
    %v546 = vunpack.c.h.b16 %v481
    %v547 = vunpack.c.l.b16 %v482
    %v548 = vunpack.c.l.b16 %v483
    %v549 = vunpack.c.h.b16 %v483
    %v550 = vunpack.c.l.b16 %v484
    %v551 = vunpack.c.l.b16 %v485
    %v552 = vunpack.c.h.b16 %v485
    %v553 = vunpack.c.l.b16 %v486
    %v554 = vunpack.c.l.b16 %v487
    %v555 = vunpack.c.h.b16 %v487
    %v556 = vunpack.c.l.b16 %v488
    %v557 = vunpack.c.l.b16 %v489
    %v558 = vunpack.c.h.b16 %v489
    %v559 = vunpack.c.l.b16 %v490
    %v560 = vunpack.c.l.b16 %v491
    %v561 = vunpack.c.h.b16 %v491
    %v562 = vunpack.c.l.b16 %v492
    %v563 = vunpack.c.l.b16 %v493
    %v564 = vunpack.c.h.b16 %v493
    %v565 = vunpack.c.l.b16 %v494
    %v566 = vunpack.c.l.b16 %v495
    %v567 = vunpack.c.h.b16 %v495
    %v568 = vunpack.c.l.b16 %v496
    %v569 = vunpack.c.l.b16 %v497
    %v570 = vunpack.c.h.b16 %v497
    %v571 = vunpack.c.l.b16 %v498
    %v572 = vunpack.c.l.b16 %v499
    %v573 = vunpack.c.h.b16 %v499
    %v574 = vunpack.c.l.b16 %v500
    %v575 = vunpack.c.l.b16 %v501
    %v576 = vunpack.c.h.b16 %v501
    %v577 = vunpack.c.l.b16 %v502
    %v578 = vunpack.c.l.b16 %v503
    %v579 = vunpack.c.h.b16 %v503
    %v580 = vunpack.c.l.b16 %v504
    %v581 = vunpack.c.l.b16 %v505
    %v582 = vunpack.c.h.b16 %v505
    %v583 = vunpack.c.l.b16 %v506
    %v584 = vunpack.c.l.b16 %v507
    %v585 = vunpack.c.h.b16 %v507
    %v586 = vunpack.c.l.b16 %v508
    %v587 = vunpack.c.l.b16 %v509
    %v588 = vunpack.c.h.b16 %v509
    %v589 = vunpack.c.l.b16 %v510
    %v590 = vunpack.c.l.b16 %v511
    %v591 = vunpack.c.h.b16 %v511
    %v592 = vunpack.c.l.b16 %v512
    %v593 = vpack.c.b16 %v548, %v545
    %v594 = vpack.c.b16 %v549, %v546
    %v595 = vpack.c.b16 %v550, %v547
    %v596 = vpack.c.b16 %v554, %v551
    %v597 = vpack.c.b16 %v555, %v552
    %v598 = vpack.c.b16 %v556, %v553
    %v599 = vpack.c.b16 %v560, %v557
    %v600 = vpack.c.b16 %v561, %v558
    %v601 = vpack.c.b16 %v562, %v559
    %v602 = vpack.c.b16 %v566, %v563
    %v603 = vpack.c.b16 %v567, %v564
    %v604 = vpack.c.b16 %v568, %v565
    %v605 = vpack.c.b16 %v572, %v569
    %v606 = vpack.c.b16 %v573, %v570
    %v607 = vpack.c.b16 %v574, %v571
    %v608 = vpack.c.b16 %v578, %v575
    %v609 = vpack.c.b16 %v579, %v576
    %v610 = vpack.c.b16 %v580, %v577
    %v611 = vpack.c.b16 %v584, %v581
    %v612 = vpack.c.b16 %v585, %v582
    %v613 = vpack.c.b16 %v586, %v583
    %v614 = vpack.c.b16 %v590, %v587
    %v615 = vpack.c.b16 %v591, %v588
    %v616 = vpack.c.b16 %v592, %v589
    %641 = vmatpush.bf16.msra.mxu0 %v614
    %642 = vmatpush.bf16.msra.mxu0 %v611
    %643 = vmatpush.bf16.msra.mxu0 %v608
    %644 = vmatpush.bf16.msra.mxu0 %v605
    %645 = vmatpush.bf16.msra.mxu0 %v602
    %646 = vmatpush.bf16.msra.mxu0 %v599
    %647 = vmatpush.bf16.msra.mxu0 %v596
    %648 = vmatpush.bf16.msra.mxu0 %v593
    %649 = vmatmul.bf16.gmra.mxu0 0
    %v650 = vpop.f32.mrf.mxu0
    %v651 = vadd.f32 0.0, %v650
    %v652 = vpop.f32.mrf.mxu0
    %653 = vdwg.mxu0
    %654 = vmatpush.bf16.msra.mxu0 %v615
    %655 = vmatpush.bf16.msra.mxu0 %v612
    %656 = vmatpush.bf16.msra.mxu0 %v609
    %657 = vmatpush.bf16.msra.mxu0 %v606
    %658 = vmatpush.bf16.msra.mxu0 %v603
    %659 = vmatpush.bf16.msra.mxu0 %v600
    %660 = vmatpush.bf16.msra.mxu0 %v597
    %661 = vmatpush.bf16.msra.mxu0 %v594
    %662 = vmatmul.bf16.gmra.mxu0 0
    %v663 = vpop.f32.mrf.mxu0
    %v664 = vadd.f32 0.0, %v663
    %v665 = vpop.f32.mrf.mxu0
    %666 = vdwg.mxu0
    %667 = vmatpush.bf16.msra.mxu0 %v616
    %668 = vmatpush.bf16.msra.mxu0 %v613
    %669 = vmatpush.bf16.msra.mxu0 %v610
    %670 = vmatpush.bf16.msra.mxu0 %v607
    %671 = vmatpush.bf16.msra.mxu0 %v604
    %672 = vmatpush.bf16.msra.mxu0 %v601
    %673 = vmatpush.bf16.msra.mxu0 %v598
    %674 = vmatpush.bf16.msra.mxu0 %v595
    %675 = vmatmul.bf16.gmra.mxu0 0
    %v676 = vpop.f32.mrf.mxu0
    %v677 = vadd.f32 0.0, %v676
    %v678 = vpop.f32.mrf.mxu0
    %679 = vdwg.mxu0
    %v680 = vld [vmem:[#allocation12] sm:$0xff]
    %v681 = vld [vmem:[#allocation12 + $0x8] sm:$0xf]
    %v682 = vld [vmem:[#allocation12 + $0xc] sm:$0xff]
    %v683 = vld [vmem:[#allocation12 + $0x14] sm:$0xf]
    %v684 = vld [vmem:[#allocation12 + $0x18] sm:$0xff]
    %v685 = vld [vmem:[#allocation12 + $0x20] sm:$0xf]
    %v686 = vld [vmem:[#allocation12 + $0x24] sm:$0xff]
    %v687 = vld [vmem:[#allocation12 + $0x2c] sm:$0xf]
    %v688 = vld [vmem:[#allocation12 + $0x30] sm:$0xff]
    %v689 = vld [vmem:[#allocation12 + $0x38] sm:$0xf]
    %v690 = vld [vmem:[#allocation12 + $0x3c] sm:$0xff]
    %v691 = vld [vmem:[#allocation12 + $0x44] sm:$0xf]
    %v692 = vld [vmem:[#allocation12 + $0x48] sm:$0xff]
    %v693 = vld [vmem:[#allocation12 + $0x50] sm:$0xf]
    %v694 = vld [vmem:[#allocation12 + $0x54] sm:$0xff]
    %v695 = vld [vmem:[#allocation12 + $0x5c] sm:$0xf]
    %v696 = vld [vmem:[#allocation12 + $0x60] sm:$0xff]
    %v697 = vld [vmem:[#allocation12 + $0x68] sm:$0xf]
    %v698 = vld [vmem:[#allocation12 + $0x6c] sm:$0xff]
    %v699 = vld [vmem:[#allocation12 + $0x74] sm:$0xf]
    %v700 = vld [vmem:[#allocation12 + $0x78] sm:$0xff]
    %v701 = vld [vmem:[#allocation12 + $0x80] sm:$0xf]
    %v702 = vld [vmem:[#allocation12 + $0x84] sm:$0xff]
    %v703 = vld [vmem:[#allocation12 + $0x8c] sm:$0xf]
    %v704 = vld [vmem:[#allocation12 + $0x90] sm:$0xff]
    %v705 = vld [vmem:[#allocation12 + $0x98] sm:$0xf]
    %v706 = vld [vmem:[#allocation12 + $0x9c] sm:$0xff]
    %v707 = vld [vmem:[#allocation12 + $0xa4] sm:$0xf]
    %v708 = vld [vmem:[#allocation12 + $0xa8] sm:$0xff]
    %v709 = vld [vmem:[#allocation12 + $0xb0] sm:$0xf]
    %v710 = vld [vmem:[#allocation12 + $0xb4] sm:$0xff]
    %v711 = vld [vmem:[#allocation12 + $0xbc] sm:$0xf]
    %v744 = vunpack.c.l.b16 %v680
    %v745 = vunpack.c.h.b16 %v680
    %v746 = vunpack.c.l.b16 %v681
    %v747 = vunpack.c.l.b16 %v682
    %v748 = vunpack.c.h.b16 %v682
    %v749 = vunpack.c.l.b16 %v683
    %v750 = vunpack.c.l.b16 %v684
    %v751 = vunpack.c.h.b16 %v684
    %v752 = vunpack.c.l.b16 %v685
    %v753 = vunpack.c.l.b16 %v686
    %v754 = vunpack.c.h.b16 %v686
    %v755 = vunpack.c.l.b16 %v687
    %v756 = vunpack.c.l.b16 %v688
    %v757 = vunpack.c.h.b16 %v688
    %v758 = vunpack.c.l.b16 %v689
    %v759 = vunpack.c.l.b16 %v690
    %v760 = vunpack.c.h.b16 %v690
    %v761 = vunpack.c.l.b16 %v691
    %v762 = vunpack.c.l.b16 %v692
    %v763 = vunpack.c.h.b16 %v692
    %v764 = vunpack.c.l.b16 %v693
    %v765 = vunpack.c.l.b16 %v694
    %v766 = vunpack.c.h.b16 %v694
    %v767 = vunpack.c.l.b16 %v695
    %v768 = vunpack.c.l.b16 %v696
    %v769 = vunpack.c.h.b16 %v696
    %v770 = vunpack.c.l.b16 %v697
    %v771 = vunpack.c.l.b16 %v698
    %v772 = vunpack.c.h.b16 %v698
    %v773 = vunpack.c.l.b16 %v699
    %v774 = vunpack.c.l.b16 %v700
    %v775 = vunpack.c.h.b16 %v700
    %v776 = vunpack.c.l.b16 %v701
    %v777 = vunpack.c.l.b16 %v702
    %v778 = vunpack.c.h.b16 %v702
    %v779 = vunpack.c.l.b16 %v703
    %v780 = vunpack.c.l.b16 %v704
    %v781 = vunpack.c.h.b16 %v704
    %v782 = vunpack.c.l.b16 %v705
    %v783 = vunpack.c.l.b16 %v706
    %v784 = vunpack.c.h.b16 %v706
    %v785 = vunpack.c.l.b16 %v707
    %v786 = vunpack.c.l.b16 %v708
    %v787 = vunpack.c.h.b16 %v708
    %v788 = vunpack.c.l.b16 %v709
    %v789 = vunpack.c.l.b16 %v710
    %v790 = vunpack.c.h.b16 %v710
    %v791 = vunpack.c.l.b16 %v711
    %v792 = vpack.c.b16 %v747, %v744
    %v793 = vpack.c.b16 %v748, %v745
    %v794 = vpack.c.b16 %v749, %v746
    %v795 = vpack.c.b16 %v753, %v750
    %v796 = vpack.c.b16 %v754, %v751
    %v797 = vpack.c.b16 %v755, %v752
    %v798 = vpack.c.b16 %v759, %v756
    %v799 = vpack.c.b16 %v760, %v757
    %v800 = vpack.c.b16 %v761, %v758
    %v801 = vpack.c.b16 %v765, %v762
    %v802 = vpack.c.b16 %v766, %v763
    %v803 = vpack.c.b16 %v767, %v764
    %v804 = vpack.c.b16 %v771, %v768
    %v805 = vpack.c.b16 %v772, %v769
    %v806 = vpack.c.b16 %v773, %v770
    %v807 = vpack.c.b16 %v777, %v774
    %v808 = vpack.c.b16 %v778, %v775
    %v809 = vpack.c.b16 %v779, %v776
    %v810 = vpack.c.b16 %v783, %v780
    %v811 = vpack.c.b16 %v784, %v781
    %v812 = vpack.c.b16 %v785, %v782
    %v813 = vpack.c.b16 %v789, %v786
    %v814 = vpack.c.b16 %v790, %v787
    %v815 = vpack.c.b16 %v791, %v788
    %840 = vmatpush.bf16.msra.mxu0 %v813
    %841 = vmatpush.bf16.msra.mxu0 %v810
    %842 = vmatpush.bf16.msra.mxu0 %v807
    %843 = vmatpush.bf16.msra.mxu0 %v804
    %844 = vmatpush.bf16.msra.mxu0 %v801
    %845 = vmatpush.bf16.msra.mxu0 %v798
    %846 = vmatpush.bf16.msra.mxu0 %v795
    %847 = vmatpush.bf16.msra.mxu0 %v792
    %848 = vmatmul.bf16.gmra.mxu0 0
    %v849 = vpop.f32.mrf.mxu0
    %v850 = vadd.f32 0.0, %v849
    %v851 = vpop.f32.mrf.mxu0
    %852 = vdwg.mxu0
    %853 = vmatpush.bf16.msra.mxu0 %v814
    %854 = vmatpush.bf16.msra.mxu0 %v811
    %855 = vmatpush.bf16.msra.mxu0 %v808
    %856 = vmatpush.bf16.msra.mxu0 %v805
    %857 = vmatpush.bf16.msra.mxu0 %v802
    %858 = vmatpush.bf16.msra.mxu0 %v799
    %859 = vmatpush.bf16.msra.mxu0 %v796
    %860 = vmatpush.bf16.msra.mxu0 %v793
    %861 = vmatmul.bf16.gmra.mxu0 0
    %v862 = vpop.f32.mrf.mxu0
    %v863 = vadd.f32 0.0, %v862
    %v864 = vpop.f32.mrf.mxu0
    %865 = vdwg.mxu0
    %866 = vmatpush.bf16.msra.mxu0 %v815
    %867 = vmatpush.bf16.msra.mxu0 %v812
    %868 = vmatpush.bf16.msra.mxu0 %v809
    %869 = vmatpush.bf16.msra.mxu0 %v806
    %870 = vmatpush.bf16.msra.mxu0 %v803
    %871 = vmatpush.bf16.msra.mxu0 %v800
    %872 = vmatpush.bf16.msra.mxu0 %v797
    %873 = vmatpush.bf16.msra.mxu0 %v794
    %874 = vmatmul.bf16.gmra.mxu0 0
    %v875 = vpop.f32.mrf.mxu0
    %v876 = vadd.f32 0.0, %v875
    %v877 = vpop.f32.mrf.mxu0
    %878 = vdwg.mxu0
    %s879 = smul.u32 0, 3
    %s880 = smul.addr %s879, 8
    %s881 = scalar_lea.vmem [#allocation2], %s880
    %v882 = vld [vmem:[%s881] sm:$0xff]
    %v883 = vld [vmem:[%s881 + $0x8] sm:$0xff]
    %v884 = vld [vmem:[%s881 + $0x10] sm:$0xff]
    %v885 = vadd.f32 %v882, %v651
    %v886 = vxor.u32 %v885, 2147483648
    %v887 = vmul.f32 %v886, 1.442695
    %v888 = vpow.pop %v887
    %v889 = vadd.f32 %v888, 1.0
    %v890 = vrcp.pop %v889
    %v891 = vmul.f32 %v889, %v890
    %v892 = vsub.f32 1.0, %v891
    %v893 = vmul.f32 %v890, %v892
    %v894 = vadd.f32 %v890, %v893
    %vm895 = vweird.f32 %v889
    %vm896 = vweird.f32 %v890
    %vm897 = vmor %vm895, %vm896
    %v898 = vsel %vm897, %v890, %v894
    %v899 = vand.u32 2147483647, %v889
    %vm900 = vcmp.eq.f32.partialorder %v899, 8.507059e+37
    %v901 = vand.u32 %v889, 2147483648
    %v902 = vor.u32 1.1754944e-38, %v901
    %v903 = vsel %vm900, %v902, %v898
    %v904 = vmul.f32 1.0, %v903
    %v905 = vadd.f32 %v883, %v664
    %v906 = vxor.u32 %v905, 2147483648
    %v907 = vmul.f32 %v906, 1.442695
    %v908 = vpow.pop %v907
    %v909 = vadd.f32 %v908, 1.0
    %v910 = vrcp.pop %v909
    %v911 = vmul.f32 %v909, %v910
    %v912 = vsub.f32 1.0, %v911
    %v913 = vmul.f32 %v910, %v912
    %v914 = vadd.f32 %v910, %v913
    %vm915 = vweird.f32 %v909
    %vm916 = vweird.f32 %v910
    %vm917 = vmor %vm915, %vm916
    %v918 = vsel %vm917, %v910, %v914
    %v919 = vand.u32 2147483647, %v909
    %vm920 = vcmp.eq.f32.partialorder %v919, 8.507059e+37
    %v921 = vand.u32 %v909, 2147483648
    %v922 = vor.u32 1.1754944e-38, %v921
    %v923 = vsel %vm920, %v922, %v918
    %v924 = vmul.f32 1.0, %v923
    %v925 = vadd.f32 %v677, %v467
    %v926 = vmul.f32 %v904, %v925
    %v927 = vadd.f32 %v884, %v926
    %v928 = vtanh.pop %v927
    %v929 = vsub.f32 1.0, %v924
    %v930 = vmul.f32 %v929, %v928
    %v931 = vmul.f32 %v924, 0.0
    %v932 = vadd.f32 %v930, %v931
    %v933 = vpack.c.bf16 %v932, %v932
    %v934 = vld [vmem:[#allocation11] sm:$0xff]
    %v935 = vld [vmem:[#allocation11 + $0x8] sm:$0xf]
    %v936 = vld [vmem:[#allocation11 + $0xc] sm:$0xff]
    %v937 = vld [vmem:[#allocation11 + $0x14] sm:$0xf]
    %v938 = vld [vmem:[#allocation11 + $0x18] sm:$0xff]
    %v939 = vld [vmem:[#allocation11 + $0x20] sm:$0xf]
    %v940 = vld [vmem:[#allocation11 + $0x24] sm:$0xff]
    %v941 = vld [vmem:[#allocation11 + $0x2c] sm:$0xf]
    %v942 = vld [vmem:[#allocation11 + $0x30] sm:$0xff]
    %v943 = vld [vmem:[#allocation11 + $0x38] sm:$0xf]
    %v944 = vld [vmem:[#allocation11 + $0x3c] sm:$0xff]
    %v945 = vld [vmem:[#allocation11 + $0x44] sm:$0xf]
    %v946 = vld [vmem:[#allocation11 + $0x48] sm:$0xff]
    %v947 = vld [vmem:[#allocation11 + $0x50] sm:$0xf]
    %v948 = vld [vmem:[#allocation11 + $0x54] sm:$0xff]
    %v949 = vld [vmem:[#allocation11 + $0x5c] sm:$0xf]
    %v950 = vld [vmem:[#allocation11 + $0x60] sm:$0xff]
    %v951 = vld [vmem:[#allocation11 + $0x68] sm:$0xf]
    %v952 = vld [vmem:[#allocation11 + $0x6c] sm:$0xff]
    %v953 = vld [vmem:[#allocation11 + $0x74] sm:$0xf]
    %v954 = vld [vmem:[#allocation11 + $0x78] sm:$0xff]
    %v955 = vld [vmem:[#allocation11 + $0x80] sm:$0xf]
    %v956 = vld [vmem:[#allocation11 + $0x84] sm:$0xff]
    %v957 = vld [vmem:[#allocation11 + $0x8c] sm:$0xf]
    %v958 = vld [vmem:[#allocation11 + $0x90] sm:$0xff]
    %v959 = vld [vmem:[#allocation11 + $0x98] sm:$0xf]
    %v960 = vld [vmem:[#allocation11 + $0x9c] sm:$0xff]
    %v961 = vld [vmem:[#allocation11 + $0xa4] sm:$0xf]
    %v962 = vld [vmem:[#allocation11 + $0xa8] sm:$0xff]
    %v963 = vld [vmem:[#allocation11 + $0xb0] sm:$0xf]
    %v964 = vld [vmem:[#allocation11 + $0xb4] sm:$0xff]
    %v965 = vld [vmem:[#allocation11 + $0xbc] sm:$0xf]
    %v998 = vunpack.c.l.b16 %v934
    %v999 = vunpack.c.h.b16 %v934
    %v1000 = vunpack.c.l.b16 %v935
    %v1001 = vunpack.c.l.b16 %v936
    %v1002 = vunpack.c.h.b16 %v936
    %v1003 = vunpack.c.l.b16 %v937
    %v1004 = vunpack.c.l.b16 %v938
    %v1005 = vunpack.c.h.b16 %v938
    %v1006 = vunpack.c.l.b16 %v939
    %v1007 = vunpack.c.l.b16 %v940
    %v1008 = vunpack.c.h.b16 %v940
    %v1009 = vunpack.c.l.b16 %v941
    %v1010 = vunpack.c.l.b16 %v942
    %v1011 = vunpack.c.h.b16 %v942
    %v1012 = vunpack.c.l.b16 %v943
    %v1013 = vunpack.c.l.b16 %v944
    %v1014 = vunpack.c.h.b16 %v944
    %v1015 = vunpack.c.l.b16 %v945
    %v1016 = vunpack.c.l.b16 %v946
    %v1017 = vunpack.c.h.b16 %v946
    %v1018 = vunpack.c.l.b16 %v947
    %v1019 = vunpack.c.l.b16 %v948
    %v1020 = vunpack.c.h.b16 %v948
    %v1021 = vunpack.c.l.b16 %v949
    %v1022 = vunpack.c.l.b16 %v950
    %v1023 = vunpack.c.h.b16 %v950
    %v1024 = vunpack.c.l.b16 %v951
    %v1025 = vunpack.c.l.b16 %v952
    %v1026 = vunpack.c.h.b16 %v952
    %v1027 = vunpack.c.l.b16 %v953
    %v1028 = vunpack.c.l.b16 %v954
    %v1029 = vunpack.c.h.b16 %v954
    %v1030 = vunpack.c.l.b16 %v955
    %v1031 = vunpack.c.l.b16 %v956
    %v1032 = vunpack.c.h.b16 %v956
    %v1033 = vunpack.c.l.b16 %v957
    %v1034 = vunpack.c.l.b16 %v958
    %v1035 = vunpack.c.h.b16 %v958
    %v1036 = vunpack.c.l.b16 %v959
    %v1037 = vunpack.c.l.b16 %v960
    %v1038 = vunpack.c.h.b16 %v960
    %v1039 = vunpack.c.l.b16 %v961
    %v1040 = vunpack.c.l.b16 %v962
    %v1041 = vunpack.c.h.b16 %v962
    %v1042 = vunpack.c.l.b16 %v963
    %v1043 = vunpack.c.l.b16 %v964
    %v1044 = vunpack.c.h.b16 %v964
    %v1045 = vunpack.c.l.b16 %v965
    %v1046 = vpack.c.b16 %v1001, %v998
    %v1047 = vpack.c.b16 %v1002, %v999
    %v1048 = vpack.c.b16 %v1003, %v1000
    %v1049 = vpack.c.b16 %v1007, %v1004
    %v1050 = vpack.c.b16 %v1008, %v1005
    %v1051 = vpack.c.b16 %v1009, %v1006
    %v1052 = vpack.c.b16 %v1013, %v1010
    %v1053 = vpack.c.b16 %v1014, %v1011
    %v1054 = vpack.c.b16 %v1015, %v1012
    %v1055 = vpack.c.b16 %v1019, %v1016
    %v1056 = vpack.c.b16 %v1020, %v1017
    %v1057 = vpack.c.b16 %v1021, %v1018
    %v1058 = vpack.c.b16 %v1025, %v1022
    %v1059 = vpack.c.b16 %v1026, %v1023
    %v1060 = vpack.c.b16 %v1027, %v1024
    %v1061 = vpack.c.b16 %v1031, %v1028
    %v1062 = vpack.c.b16 %v1032, %v1029
    %v1063 = vpack.c.b16 %v1033, %v1030
    %v1064 = vpack.c.b16 %v1037, %v1034
    %v1065 = vpack.c.b16 %v1038, %v1035
    %v1066 = vpack.c.b16 %v1039, %v1036
    %v1067 = vpack.c.b16 %v1043, %v1040
    %v1068 = vpack.c.b16 %v1044, %v1041
    %v1069 = vpack.c.b16 %v1045, %v1042
    %1094 = vmatpush.bf16.msra.mxu0 %v1067
    %1095 = vmatpush.bf16.msra.mxu0 %v1064
    %1096 = vmatpush.bf16.msra.mxu0 %v1061
    %1097 = vmatpush.bf16.msra.mxu0 %v1058
    %1098 = vmatpush.bf16.msra.mxu0 %v1055
    %1099 = vmatpush.bf16.msra.mxu0 %v1052
    %1100 = vmatpush.bf16.msra.mxu0 %v1049
    %1101 = vmatpush.bf16.msra.mxu0 %v1046
    %1102 = vmatmul.bf16.gmra.mxu0 %v933
    %v1103 = vpop.f32.mrf.mxu0
    %v1104 = vadd.f32 %v475, %v1103
    %v1105 = vpop.f32.mrf.mxu0
    %1106 = vdwg.mxu0
    %1107 = vmatpush.bf16.msra.mxu0 %v1068
    %1108 = vmatpush.bf16.msra.mxu0 %v1065
    %1109 = vmatpush.bf16.msra.mxu0 %v1062
    %1110 = vmatpush.bf16.msra.mxu0 %v1059
    %1111 = vmatpush.bf16.msra.mxu0 %v1056
    %1112 = vmatpush.bf16.msra.mxu0 %v1053
    %1113 = vmatpush.bf16.msra.mxu0 %v1050
    %1114 = vmatpush.bf16.msra.mxu0 %v1047
    %1115 = vmatmul.bf16.gmra.mxu0 %v933
    %v1116 = vpop.f32.mrf.mxu0
    %v1117 = vadd.f32 %v476, %v1116
    %v1118 = vpop.f32.mrf.mxu0
    %1119 = vdwg.mxu0
    %1120 = vmatpush.bf16.msra.mxu0 %v1069
    %1121 = vmatpush.bf16.msra.mxu0 %v1066
    %1122 = vmatpush.bf16.msra.mxu0 %v1063
    %1123 = vmatpush.bf16.msra.mxu0 %v1060
    %1124 = vmatpush.bf16.msra.mxu0 %v1057
    %1125 = vmatpush.bf16.msra.mxu0 %v1054
    %1126 = vmatpush.bf16.msra.mxu0 %v1051
    %1127 = vmatpush.bf16.msra.mxu0 %v1048
    %1128 = vmatmul.bf16.gmra.mxu0 %v933
    %v1129 = vpop.f32.mrf.mxu0
    %v1130 = vadd.f32 %v477, %v1129
    %v1131 = vpop.f32.mrf.mxu0
    %1132 = vdwg.mxu0
    %v1133 = vadd.f32 %v1104, %v850
    %v1134 = vxor.u32 %v1133, 2147483648
    %v1135 = vmul.f32 %v1134, 1.442695
    %v1136 = vpow.pop %v1135
    %v1137 = vadd.f32 %v1136, 1.0
    %v1138 = vrcp.pop %v1137
    %v1139 = vmul.f32 %v1137, %v1138
    %v1140 = vsub.f32 1.0, %v1139
    %v1141 = vmul.f32 %v1138, %v1140
    %v1142 = vadd.f32 %v1138, %v1141
    %vm1143 = vweird.f32 %v1137
    %vm1144 = vweird.f32 %v1138
    %vm1145 = vmor %vm1143, %vm1144
    %v1146 = vsel %vm1145, %v1138, %v1142
    %v1147 = vand.u32 2147483647, %v1137
    %vm1148 = vcmp.eq.f32.partialorder %v1147, 8.507059e+37
    %v1149 = vand.u32 %v1137, 2147483648
    %v1150 = vor.u32 1.1754944e-38, %v1149
    %v1151 = vsel %vm1148, %v1150, %v1146
    %v1152 = vmul.f32 1.0, %v1151
    %v1153 = vadd.f32 %v1117, %v863
    %v1154 = vxor.u32 %v1153, 2147483648
    %v1155 = vmul.f32 %v1154, 1.442695
    %v1156 = vpow.pop %v1155
    %v1157 = vadd.f32 %v1156, 1.0
    %v1158 = vrcp.pop %v1157
    %v1159 = vmul.f32 %v1157, %v1158
    %v1160 = vsub.f32 1.0, %v1159
    %v1161 = vmul.f32 %v1158, %v1160
    %v1162 = vadd.f32 %v1158, %v1161
    %vm1163 = vweird.f32 %v1157
    %vm1164 = vweird.f32 %v1158
    %vm1165 = vmor %vm1163, %vm1164
    %v1166 = vsel %vm1165, %v1158, %v1162
    %v1167 = vand.u32 2147483647, %v1157
    %vm1168 = vcmp.eq.f32.partialorder %v1167, 8.507059e+37
    %v1169 = vand.u32 %v1157, 2147483648
    %v1170 = vor.u32 1.1754944e-38, %v1169
    %v1171 = vsel %vm1168, %v1170, %v1166
    %v1172 = vmul.f32 1.0, %v1171
    %v1173 = vadd.f32 %v876, %v471
    %v1174 = vmul.f32 %v1152, %v1173
    %v1175 = vadd.f32 %v1130, %v1174
    %v1176 = vtanh.pop %v1175
    %v1177 = vsub.f32 1.0, %v1172
    %v1178 = vmul.f32 %v1177, %v1176
    %v1179 = vmul.f32 %v1172, 0.0
    %v1180 = vadd.f32 %v1178, %v1179
    %vm1181 = vcmp.gt.s32.totalorder %v464, 0
    %v1182 = vsel %vm1181, 1, 0
    %1183 = vset.pattern.permute.xlu0 0
    %1184 = vperm.xlu0 %1183, %v1182
    %v1185 = vpop.permute.xlu0 %1184
    %vm1186 = vcmp.eq.s32.totalorder %v1185, 1
    %v1187 = vsel %vm1186, %v932, 0.0
    %v1188 = vsel %vm1186, %v1180, 0.0
    %v1189 = vpack.c.bf16 %v1187, %v1187
    %1190 = vmatpush.bf16.msra.mxu0 %v614
    %1191 = vmatpush.bf16.msra.mxu0 %v611
    %1192 = vmatpush.bf16.msra.mxu0 %v608
    %1193 = vmatpush.bf16.msra.mxu0 %v605
    %1194 = vmatpush.bf16.msra.mxu0 %v602
    %1195 = vmatpush.bf16.msra.mxu0 %v599
    %1196 = vmatpush.bf16.msra.mxu0 %v596
    %1197 = vmatpush.bf16.msra.mxu0 %v593
    %1198 = vmatmul.bf16.gmra.mxu0 %v1189
    %v1199 = vpop.f32.mrf.mxu0
    %v1200 = vadd.f32 0.0, %v1199
    %v1201 = vpop.f32.mrf.mxu0
    %1202 = vdwg.mxu0
    %1203 = vmatpush.bf16.msra.mxu0 %v615
    %1204 = vmatpush.bf16.msra.mxu0 %v612
    %1205 = vmatpush.bf16.msra.mxu0 %v609
    %1206 = vmatpush.bf16.msra.mxu0 %v606
    %1207 = vmatpush.bf16.msra.mxu0 %v603
    %1208 = vmatpush.bf16.msra.mxu0 %v600
    %1209 = vmatpush.bf16.msra.mxu0 %v597
    %1210 = vmatpush.bf16.msra.mxu0 %v594
    %1211 = vmatmul.bf16.gmra.mxu0 %v1189
    %v1212 = vpop.f32.mrf.mxu0
    %v1213 = vadd.f32 0.0, %v1212
    %v1214 = vpop.f32.mrf.mxu0
    %1215 = vdwg.mxu0
    %1216 = vmatpush.bf16.msra.mxu0 %v616
    %1217 = vmatpush.bf16.msra.mxu0 %v613
    %1218 = vmatpush.bf16.msra.mxu0 %v610
    %1219 = vmatpush.bf16.msra.mxu0 %v607
    %1220 = vmatpush.bf16.msra.mxu0 %v604
    %1221 = vmatpush.bf16.msra.mxu0 %v601
    %1222 = vmatpush.bf16.msra.mxu0 %v598
    %1223 = vmatpush.bf16.msra.mxu0 %v595
    %1224 = vmatmul.bf16.gmra.mxu0 %v1189
    %v1225 = vpop.f32.mrf.mxu0
    %v1226 = vadd.f32 0.0, %v1225
    %v1227 = vpop.f32.mrf.mxu0
    %1228 = vdwg.mxu0
    %v1229 = vpack.c.bf16 %v1188, %v1188
    %1230 = vmatpush.bf16.msra.mxu0 %v813
    %1231 = vmatpush.bf16.msra.mxu0 %v810
    %1232 = vmatpush.bf16.msra.mxu0 %v807
    %1233 = vmatpush.bf16.msra.mxu0 %v804
    %1234 = vmatpush.bf16.msra.mxu0 %v801
    %1235 = vmatpush.bf16.msra.mxu0 %v798
    %1236 = vmatpush.bf16.msra.mxu0 %v795
    %1237 = vmatpush.bf16.msra.mxu0 %v792
    %1238 = vmatmul.bf16.gmra.mxu0 %v1229
    %v1239 = vpop.f32.mrf.mxu0
    %v1240 = vadd.f32 0.0, %v1239
    %v1241 = vpop.f32.mrf.mxu0
    %1242 = vdwg.mxu0
    %1243 = vmatpush.bf16.msra.mxu0 %v814
    %1244 = vmatpush.bf16.msra.mxu0 %v811
    %1245 = vmatpush.bf16.msra.mxu0 %v808
    %1246 = vmatpush.bf16.msra.mxu0 %v805
    %1247 = vmatpush.bf16.msra.mxu0 %v802
    %1248 = vmatpush.bf16.msra.mxu0 %v799
    %1249 = vmatpush.bf16.msra.mxu0 %v796
    %1250 = vmatpush.bf16.msra.mxu0 %v793
    %1251 = vmatmul.bf16.gmra.mxu0 %v1229
    %v1252 = vpop.f32.mrf.mxu0
    %v1253 = vadd.f32 0.0, %v1252
    %v1254 = vpop.f32.mrf.mxu0
    %1255 = vdwg.mxu0
    %1256 = vmatpush.bf16.msra.mxu0 %v815
    %1257 = vmatpush.bf16.msra.mxu0 %v812
    %1258 = vmatpush.bf16.msra.mxu0 %v809
    %1259 = vmatpush.bf16.msra.mxu0 %v806
    %1260 = vmatpush.bf16.msra.mxu0 %v803
    %1261 = vmatpush.bf16.msra.mxu0 %v800
    %1262 = vmatpush.bf16.msra.mxu0 %v797
    %1263 = vmatpush.bf16.msra.mxu0 %v794
    %1264 = vmatmul.bf16.gmra.mxu0 %v1229
    %v1265 = vpop.f32.mrf.mxu0
    %v1266 = vadd.f32 0.0, %v1265
    %v1267 = vpop.f32.mrf.mxu0
    %1268 = vdwg.mxu0
    %s1269 = smul.u32 1, 3
    %s1270 = smul.addr %s1269, 8
    %s1271 = scalar_lea.vmem [#allocation2], %s1270
    %v1272 = vld [vmem:[%s1271] sm:$0xff]
    %v1273 = vld [vmem:[%s1271 + $0x8] sm:$0xff]
    %v1274 = vld [vmem:[%s1271 + $0x10] sm:$0xff]
    %v1275 = vadd.f32 %v1272, %v1200
    %v1276 = vxor.u32 %v1275, 2147483648
    %v1277 = vmul.f32 %v1276, 1.442695
    %v1278 = vpow.pop %v1277
    %v1279 = vadd.f32 %v1278, 1.0
    %v1280 = vrcp.pop %v1279
    %v1281 = vmul.f32 %v1279, %v1280
    %v1282 = vsub.f32 1.0, %v1281
    %v1283 = vmul.f32 %v1280, %v1282
    %v1284 = vadd.f32 %v1280, %v1283
    %vm1285 = vweird.f32 %v1279
    %vm1286 = vweird.f32 %v1280
    %vm1287 = vmor %vm1285, %vm1286
    %v1288 = vsel %vm1287, %v1280, %v1284
    %v1289 = vand.u32 2147483647, %v1279
    %vm1290 = vcmp.eq.f32.partialorder %v1289, 8.507059e+37
    %v1291 = vand.u32 %v1279, 2147483648
    %v1292 = vor.u32 1.1754944e-38, %v1291
    %v1293 = vsel %vm1290, %v1292, %v1288
    %v1294 = vmul.f32 1.0, %v1293
    %v1295 = vadd.f32 %v1273, %v1213
    %v1296 = vxor.u32 %v1295, 2147483648
    %v1297 = vmul.f32 %v1296, 1.442695
    %v1298 = vpow.pop %v1297
    %v1299 = vadd.f32 %v1298, 1.0
    %v1300 = vrcp.pop %v1299
    %v1301 = vmul.f32 %v1299, %v1300
    %v1302 = vsub.f32 1.0, %v1301
    %v1303 = vmul.f32 %v1300, %v1302
    %v1304 = vadd.f32 %v1300, %v1303
    %vm1305 = vweird.f32 %v1299
    %vm1306 = vweird.f32 %v1300
    %vm1307 = vmor %vm1305, %vm1306
    %v1308 = vsel %vm1307, %v1300, %v1304
    %v1309 = vand.u32 2147483647, %v1299
    %vm1310 = vcmp.eq.f32.partialorder %v1309, 8.507059e+37
    %v1311 = vand.u32 %v1299, 2147483648
    %v1312 = vor.u32 1.1754944e-38, %v1311
    %v1313 = vsel %vm1310, %v1312, %v1308
    %v1314 = vmul.f32 1.0, %v1313
    %v1315 = vadd.f32 %v1226, %v467
    %v1316 = vmul.f32 %v1294, %v1315
    %v1317 = vadd.f32 %v1274, %v1316
    %v1318 = vtanh.pop %v1317
    %v1319 = vsub.f32 1.0, %v1314
    %v1320 = vmul.f32 %v1319, %v1318
    %v1321 = vmul.f32 %v1314, %v1187
    %v1322 = vadd.f32 %v1320, %v1321
    %v1323 = vpack.c.bf16 %v1322, %v1322
    %1324 = vmatpush.bf16.msra.mxu0 %v1067
    %1325 = vmatpush.bf16.msra.mxu0 %v1064
    %1326 = vmatpush.bf16.msra.mxu0 %v1061
    %1327 = vmatpush.bf16.msra.mxu0 %v1058
    %1328 = vmatpush.bf16.msra.mxu0 %v1055
    %1329 = vmatpush.bf16.msra.mxu0 %v1052
    %1330 = vmatpush.bf16.msra.mxu0 %v1049
    %1331 = vmatpush.bf16.msra.mxu0 %v1046
    %1332 = vmatmul.bf16.gmra.mxu0 %v1323
    %v1333 = vpop.f32.mrf.mxu0
    %v1334 = vadd.f32 %v475, %v1333
    %v1335 = vpop.f32.mrf.mxu0
    %1336 = vdwg.mxu0
    %1337 = vmatpush.bf16.msra.mxu0 %v1068
    %1338 = vmatpush.bf16.msra.mxu0 %v1065
    %1339 = vmatpush.bf16.msra.mxu0 %v1062
    %1340 = vmatpush.bf16.msra.mxu0 %v1059
    %1341 = vmatpush.bf16.msra.mxu0 %v1056
    %1342 = vmatpush.bf16.msra.mxu0 %v1053
    %1343 = vmatpush.bf16.msra.mxu0 %v1050
    %1344 = vmatpush.bf16.msra.mxu0 %v1047
    %1345 = vmatmul.bf16.gmra.mxu0 %v1323
    %v1346 = vpop.f32.mrf.mxu0
    %v1347 = vadd.f32 %v476, %v1346
    %v1348 = vpop.f32.mrf.mxu0
    %1349 = vdwg.mxu0
    %1350 = vmatpush.bf16.msra.mxu0 %v1069
    %1351 = vmatpush.bf16.msra.mxu0 %v1066
    %1352 = vmatpush.bf16.msra.mxu0 %v1063
    %1353 = vmatpush.bf16.msra.mxu0 %v1060
    %1354 = vmatpush.bf16.msra.mxu0 %v1057
    %1355 = vmatpush.bf16.msra.mxu0 %v1054
    %1356 = vmatpush.bf16.msra.mxu0 %v1051
    %1357 = vmatpush.bf16.msra.mxu0 %v1048
    %1358 = vmatmul.bf16.gmra.mxu0 %v1323
    %v1359 = vpop.f32.mrf.mxu0
    %v1360 = vadd.f32 %v477, %v1359
    %v1361 = vpop.f32.mrf.mxu0
    %1362 = vdwg.mxu0
    %v1363 = vadd.f32 %v1334, %v1240
    %v1364 = vxor.u32 %v1363, 2147483648
    %v1365 = vmul.f32 %v1364, 1.442695
    %v1366 = vpow.pop %v1365
    %v1367 = vadd.f32 %v1366, 1.0
    %v1368 = vrcp.pop %v1367
    %v1369 = vmul.f32 %v1367, %v1368
    %v1370 = vsub.f32 1.0, %v1369
    %v1371 = vmul.f32 %v1368, %v1370
    %v1372 = vadd.f32 %v1368, %v1371
    %vm1373 = vweird.f32 %v1367
    %vm1374 = vweird.f32 %v1368
    %vm1375 = vmor %vm1373, %vm1374
    %v1376 = vsel %vm1375, %v1368, %v1372
    %v1377 = vand.u32 2147483647, %v1367
    %vm1378 = vcmp.eq.f32.partialorder %v1377, 8.507059e+37
    %v1379 = vand.u32 %v1367, 2147483648
    %v1380 = vor.u32 1.1754944e-38, %v1379
    %v1381 = vsel %vm1378, %v1380, %v1376
    %v1382 = vmul.f32 1.0, %v1381
    %v1383 = vadd.f32 %v1347, %v1253
    %v1384 = vxor.u32 %v1383, 2147483648
    %v1385 = vmul.f32 %v1384, 1.442695
    %v1386 = vpow.pop %v1385
    %v1387 = vadd.f32 %v1386, 1.0
    %v1388 = vrcp.pop %v1387
    %v1389 = vmul.f32 %v1387, %v1388
    %v1390 = vsub.f32 1.0, %v1389
    %v1391 = vmul.f32 %v1388, %v1390
    %v1392 = vadd.f32 %v1388, %v1391
    %vm1393 = vweird.f32 %v1387
    %vm1394 = vweird.f32 %v1388
    %vm1395 = vmor %vm1393, %vm1394
    %v1396 = vsel %vm1395, %v1388, %v1392
    %v1397 = vand.u32 2147483647, %v1387
    %vm1398 = vcmp.eq.f32.partialorder %v1397, 8.507059e+37
    %v1399 = vand.u32 %v1387, 2147483648
    %v1400 = vor.u32 1.1754944e-38, %v1399
    %v1401 = vsel %vm1398, %v1400, %v1396
    %v1402 = vmul.f32 1.0, %v1401
    %v1403 = vadd.f32 %v1266, %v471
    %v1404 = vmul.f32 %v1382, %v1403
    %v1405 = vadd.f32 %v1360, %v1404
    %v1406 = vtanh.pop %v1405
    %v1407 = vsub.f32 1.0, %v1402
    %v1408 = vmul.f32 %v1407, %v1406
    %v1409 = vmul.f32 %v1402, %v1188
    %v1410 = vadd.f32 %v1408, %v1409
    %vm1411 = vcmp.gt.s32.totalorder %v464, 1
    %v1412 = vsel %vm1411, 1, 0
    %1413 = vset.pattern.permute.xlu0 0
    %1414 = vperm.xlu0 %1413, %v1412
    %v1415 = vpop.permute.xlu0 %1414
    %vm1416 = vcmp.eq.s32.totalorder %v1415, 1
    %v1417 = vsel %vm1416, %v1322, %v1187
    %v1418 = vsel %vm1416, %v1410, %v1188
    %v1419 = vpack.c.bf16 %v1417, %v1417
    %1420 = vmatpush.bf16.msra.mxu0 %v614
    %1421 = vmatpush.bf16.msra.mxu0 %v611
    %1422 = vmatpush.bf16.msra.mxu0 %v608
    %1423 = vmatpush.bf16.msra.mxu0 %v605
    %1424 = vmatpush.bf16.msra.mxu0 %v602
    %1425 = vmatpush.bf16.msra.mxu0 %v599
    %1426 = vmatpush.bf16.msra.mxu0 %v596
    %1427 = vmatpush.bf16.msra.mxu0 %v593
    %1428 = vmatmul.bf16.gmra.mxu0 %v1419
    %v1429 = vpop.f32.mrf.mxu0
    %v1430 = vadd.f32 0.0, %v1429
    %v1431 = vpop.f32.mrf.mxu0
    %1432 = vdwg.mxu0
    %1433 = vmatpush.bf16.msra.mxu0 %v615
    %1434 = vmatpush.bf16.msra.mxu0 %v612
    %1435 = vmatpush.bf16.msra.mxu0 %v609
    %1436 = vmatpush.bf16.msra.mxu0 %v606
    %1437 = vmatpush.bf16.msra.mxu0 %v603
    %1438 = vmatpush.bf16.msra.mxu0 %v600
    %1439 = vmatpush.bf16.msra.mxu0 %v597
    %1440 = vmatpush.bf16.msra.mxu0 %v594
    %1441 = vmatmul.bf16.gmra.mxu0 %v1419
    %v1442 = vpop.f32.mrf.mxu0
    %v1443 = vadd.f32 0.0, %v1442
    %v1444 = vpop.f32.mrf.mxu0
    %1445 = vdwg.mxu0
    %1446 = vmatpush.bf16.msra.mxu0 %v616
    %1447 = vmatpush.bf16.msra.mxu0 %v613
    %1448 = vmatpush.bf16.msra.mxu0 %v610
    %1449 = vmatpush.bf16.msra.mxu0 %v607
    %1450 = vmatpush.bf16.msra.mxu0 %v604
    %1451 = vmatpush.bf16.msra.mxu0 %v601
    %1452 = vmatpush.bf16.msra.mxu0 %v598
    %1453 = vmatpush.bf16.msra.mxu0 %v595
    %1454 = vmatmul.bf16.gmra.mxu0 %v1419
    %v1455 = vpop.f32.mrf.mxu0
    %v1456 = vadd.f32 0.0, %v1455
    %v1457 = vpop.f32.mrf.mxu0
    %1458 = vdwg.mxu0
    %v1459 = vpack.c.bf16 %v1418, %v1418
    %1460 = vmatpush.bf16.msra.mxu0 %v813
    %1461 = vmatpush.bf16.msra.mxu0 %v810
    %1462 = vmatpush.bf16.msra.mxu0 %v807
    %1463 = vmatpush.bf16.msra.mxu0 %v804
    %1464 = vmatpush.bf16.msra.mxu0 %v801
    %1465 = vmatpush.bf16.msra.mxu0 %v798
    %1466 = vmatpush.bf16.msra.mxu0 %v795
    %1467 = vmatpush.bf16.msra.mxu0 %v792
    %1468 = vmatmul.bf16.gmra.mxu0 %v1459
    %v1469 = vpop.f32.mrf.mxu0
    %v1470 = vadd.f32 0.0, %v1469
    %v1471 = vpop.f32.mrf.mxu0
    %1472 = vdwg.mxu0
    %1473 = vmatpush.bf16.msra.mxu0 %v814
    %1474 = vmatpush.bf16.msra.mxu0 %v811
    %1475 = vmatpush.bf16.msra.mxu0 %v808
    %1476 = vmatpush.bf16.msra.mxu0 %v805
    %1477 = vmatpush.bf16.msra.mxu0 %v802
    %1478 = vmatpush.bf16.msra.mxu0 %v799
    %1479 = vmatpush.bf16.msra.mxu0 %v796
    %1480 = vmatpush.bf16.msra.mxu0 %v793
    %1481 = vmatmul.bf16.gmra.mxu0 %v1459
    %v1482 = vpop.f32.mrf.mxu0
    %v1483 = vadd.f32 0.0, %v1482
    %v1484 = vpop.f32.mrf.mxu0
    %1485 = vdwg.mxu0
    %1486 = vmatpush.bf16.msra.mxu0 %v815
    %1487 = vmatpush.bf16.msra.mxu0 %v812
    %1488 = vmatpush.bf16.msra.mxu0 %v809
    %1489 = vmatpush.bf16.msra.mxu0 %v806
    %1490 = vmatpush.bf16.msra.mxu0 %v803
    %1491 = vmatpush.bf16.msra.mxu0 %v800
    %1492 = vmatpush.bf16.msra.mxu0 %v797
    %1493 = vmatpush.bf16.msra.mxu0 %v794
    %1494 = vmatmul.bf16.gmra.mxu0 %v1459
    %v1495 = vpop.f32.mrf.mxu0
    %v1496 = vadd.f32 0.0, %v1495
    %v1497 = vpop.f32.mrf.mxu0
    %1498 = vdwg.mxu0
    %s1499 = smul.u32 2, 3
    %s1500 = smul.addr %s1499, 8
    %s1501 = scalar_lea.vmem [#allocation2], %s1500
    %v1502 = vld [vmem:[%s1501] sm:$0xff]
    %v1503 = vld [vmem:[%s1501 + $0x8] sm:$0xff]
    %v1504 = vld [vmem:[%s1501 + $0x10] sm:$0xff]
    %v1505 = vadd.f32 %v1502, %v1430
    %v1506 = vxor.u32 %v1505, 2147483648
    %v1507 = vmul.f32 %v1506, 1.442695
    %v1508 = vpow.pop %v1507
    %v1509 = vadd.f32 %v1508, 1.0
    %v1510 = vrcp.pop %v1509
    %v1511 = vmul.f32 %v1509, %v1510
    %v1512 = vsub.f32 1.0, %v1511
    %v1513 = vmul.f32 %v1510, %v1512
    %v1514 = vadd.f32 %v1510, %v1513
    %vm1515 = vweird.f32 %v1509
    %vm1516 = vweird.f32 %v1510
    %vm1517 = vmor %vm1515, %vm1516
    %v1518 = vsel %vm1517, %v1510, %v1514
    %v1519 = vand.u32 2147483647, %v1509
    %vm1520 = vcmp.eq.f32.partialorder %v1519, 8.507059e+37
    %v1521 = vand.u32 %v1509, 2147483648
    %v1522 = vor.u32 1.1754944e-38, %v1521
    %v1523 = vsel %vm1520, %v1522, %v1518
    %v1524 = vmul.f32 1.0, %v1523
    %v1525 = vadd.f32 %v1503, %v1443
    %v1526 = vxor.u32 %v1525, 2147483648
    %v1527 = vmul.f32 %v1526, 1.442695
    %v1528 = vpow.pop %v1527
    %v1529 = vadd.f32 %v1528, 1.0
    %v1530 = vrcp.pop %v1529
    %v1531 = vmul.f32 %v1529, %v1530
    %v1532 = vsub.f32 1.0, %v1531
    %v1533 = vmul.f32 %v1530, %v1532
    %v1534 = vadd.f32 %v1530, %v1533
    %vm1535 = vweird.f32 %v1529
    %vm1536 = vweird.f32 %v1530
    %vm1537 = vmor %vm1535, %vm1536
    %v1538 = vsel %vm1537, %v1530, %v1534
    %v1539 = vand.u32 2147483647, %v1529
    %vm1540 = vcmp.eq.f32.partialorder %v1539, 8.507059e+37
    %v1541 = vand.u32 %v1529, 2147483648
    %v1542 = vor.u32 1.1754944e-38, %v1541
    %v1543 = vsel %vm1540, %v1542, %v1538
    %v1544 = vmul.f32 1.0, %v1543
    %v1545 = vadd.f32 %v1456, %v467
    %v1546 = vmul.f32 %v1524, %v1545
    %v1547 = vadd.f32 %v1504, %v1546
    %v1548 = vtanh.pop %v1547
    %v1549 = vsub.f32 1.0, %v1544
    %v1550 = vmul.f32 %v1549, %v1548
    %v1551 = vmul.f32 %v1544, %v1417
    %v1552 = vadd.f32 %v1550, %v1551
    %v1553 = vpack.c.bf16 %v1552, %v1552
    %1554 = vmatpush.bf16.msra.mxu0 %v1067
    %1555 = vmatpush.bf16.msra.mxu0 %v1064
    %1556 = vmatpush.bf16.msra.mxu0 %v1061
    %1557 = vmatpush.bf16.msra.mxu0 %v1058
    %1558 = vmatpush.bf16.msra.mxu0 %v1055
    %1559 = vmatpush.bf16.msra.mxu0 %v1052
    %1560 = vmatpush.bf16.msra.mxu0 %v1049
    %1561 = vmatpush.bf16.msra.mxu0 %v1046
    %1562 = vmatmul.bf16.gmra.mxu0 %v1553
    %v1563 = vpop.f32.mrf.mxu0
    %v1564 = vadd.f32 %v475, %v1563
    %v1565 = vpop.f32.mrf.mxu0
    %1566 = vdwg.mxu0
    %1567 = vmatpush.bf16.msra.mxu0 %v1068
    %1568 = vmatpush.bf16.msra.mxu0 %v1065
    %1569 = vmatpush.bf16.msra.mxu0 %v1062
    %1570 = vmatpush.bf16.msra.mxu0 %v1059
    %1571 = vmatpush.bf16.msra.mxu0 %v1056
    %1572 = vmatpush.bf16.msra.mxu0 %v1053
    %1573 = vmatpush.bf16.msra.mxu0 %v1050
    %1574 = vmatpush.bf16.msra.mxu0 %v1047
    %1575 = vmatmul.bf16.gmra.mxu0 %v1553
    %v1576 = vpop.f32.mrf.mxu0
    %v1577 = vadd.f32 %v476, %v1576
    %v1578 = vpop.f32.mrf.mxu0
    %1579 = vdwg.mxu0
    %1580 = vmatpush.bf16.msra.mxu0 %v1069
    %1581 = vmatpush.bf16.msra.mxu0 %v1066
    %1582 = vmatpush.bf16.msra.mxu0 %v1063
    %1583 = vmatpush.bf16.msra.mxu0 %v1060
    %1584 = vmatpush.bf16.msra.mxu0 %v1057
    %1585 = vmatpush.bf16.msra.mxu0 %v1054
    %1586 = vmatpush.bf16.msra.mxu0 %v1051
    %1587 = vmatpush.bf16.msra.mxu0 %v1048
    %1588 = vmatmul.bf16.gmra.mxu0 %v1553
    %v1589 = vpop.f32.mrf.mxu0
    %v1590 = vadd.f32 %v477, %v1589
    %v1591 = vpop.f32.mrf.mxu0
    %1592 = vdwg.mxu0
    %v1593 = vadd.f32 %v1564, %v1470
    %v1594 = vxor.u32 %v1593, 2147483648
    %v1595 = vmul.f32 %v1594, 1.442695
    %v1596 = vpow.pop %v1595
    %v1597 = vadd.f32 %v1596, 1.0
    %v1598 = vrcp.pop %v1597
    %v1599 = vmul.f32 %v1597, %v1598
    %v1600 = vsub.f32 1.0, %v1599
    %v1601 = vmul.f32 %v1598, %v1600
    %v1602 = vadd.f32 %v1598, %v1601
    %vm1603 = vweird.f32 %v1597
    %vm1604 = vweird.f32 %v1598
    %vm1605 = vmor %vm1603, %vm1604
    %v1606 = vsel %vm1605, %v1598, %v1602
    %v1607 = vand.u32 2147483647, %v1597
    %vm1608 = vcmp.eq.f32.partialorder %v1607, 8.507059e+37
    %v1609 = vand.u32 %v1597, 2147483648
    %v1610 = vor.u32 1.1754944e-38, %v1609
    %v1611 = vsel %vm1608, %v1610, %v1606
    %v1612 = vmul.f32 1.0, %v1611
    %v1613 = vadd.f32 %v1577, %v1483
    %v1614 = vxor.u32 %v1613, 2147483648
    %v1615 = vmul.f32 %v1614, 1.442695
    %v1616 = vpow.pop %v1615
    %v1617 = vadd.f32 %v1616, 1.0
    %v1618 = vrcp.pop %v1617
    %v1619 = vmul.f32 %v1617, %v1618
    %v1620 = vsub.f32 1.0, %v1619
    %v1621 = vmul.f32 %v1618, %v1620
    %v1622 = vadd.f32 %v1618, %v1621
    %vm1623 = vweird.f32 %v1617
    %vm1624 = vweird.f32 %v1618
    %vm1625 = vmor %vm1623, %vm1624
    %v1626 = vsel %vm1625, %v1618, %v1622
    %v1627 = vand.u32 2147483647, %v1617
    %vm1628 = vcmp.eq.f32.partialorder %v1627, 8.507059e+37
    %v1629 = vand.u32 %v1617, 2147483648
    %v1630 = vor.u32 1.1754944e-38, %v1629
    %v1631 = vsel %vm1628, %v1630, %v1626
    %v1632 = vmul.f32 1.0, %v1631
    %v1633 = vadd.f32 %v1496, %v471
    %v1634 = vmul.f32 %v1612, %v1633
    %v1635 = vadd.f32 %v1590, %v1634
    %v1636 = vtanh.pop %v1635
    %v1637 = vsub.f32 1.0, %v1632
    %v1638 = vmul.f32 %v1637, %v1636
    %v1639 = vmul.f32 %v1632, %v1418
    %v1640 = vadd.f32 %v1638, %v1639
    %vm1641 = vcmp.gt.s32.totalorder %v464, 2
    %v1642 = vsel %vm1641, 1, 0
    %1643 = vset.pattern.permute.xlu0 0
    %1644 = vperm.xlu0 %1643, %v1642
    %v1645 = vpop.permute.xlu0 %1644
    %vm1646 = vcmp.eq.s32.totalorder %v1645, 1
    %v1647 = vsel %vm1646, %v1552, %v1417
    %v1648 = vsel %vm1646, %v1640, %v1418
    %v1649 = vpack.c.bf16 %v1647, %v1647
    %1650 = vmatpush.bf16.msra.mxu0 %v614
    %1651 = vmatpush.bf16.msra.mxu0 %v611
    %1652 = vmatpush.bf16.msra.mxu0 %v608
    %1653 = vmatpush.bf16.msra.mxu0 %v605
    %1654 = vmatpush.bf16.msra.mxu0 %v602
    %1655 = vmatpush.bf16.msra.mxu0 %v599
    %1656 = vmatpush.bf16.msra.mxu0 %v596
    %1657 = vmatpush.bf16.msra.mxu0 %v593
    %1658 = vmatmul.bf16.gmra.mxu0 %v1649
    %v1659 = vpop.f32.mrf.mxu0
    %v1660 = vadd.f32 0.0, %v1659
    %v1661 = vpop.f32.mrf.mxu0
    %1662 = vdwg.mxu0
    %1663 = vmatpush.bf16.msra.mxu0 %v615
    %1664 = vmatpush.bf16.msra.mxu0 %v612
    %1665 = vmatpush.bf16.msra.mxu0 %v609
    %1666 = vmatpush.bf16.msra.mxu0 %v606
    %1667 = vmatpush.bf16.msra.mxu0 %v603
    %1668 = vmatpush.bf16.msra.mxu0 %v600
    %1669 = vmatpush.bf16.msra.mxu0 %v597
    %1670 = vmatpush.bf16.msra.mxu0 %v594
    %1671 = vmatmul.bf16.gmra.mxu0 %v1649
    %v1672 = vpop.f32.mrf.mxu0
    %v1673 = vadd.f32 0.0, %v1672
    %v1674 = vpop.f32.mrf.mxu0
    %1675 = vdwg.mxu0
    %1676 = vmatpush.bf16.msra.mxu0 %v616
    %1677 = vmatpush.bf16.msra.mxu0 %v613
    %1678 = vmatpush.bf16.msra.mxu0 %v610
    %1679 = vmatpush.bf16.msra.mxu0 %v607
    %1680 = vmatpush.bf16.msra.mxu0 %v604
    %1681 = vmatpush.bf16.msra.mxu0 %v601
    %1682 = vmatpush.bf16.msra.mxu0 %v598
    %1683 = vmatpush.bf16.msra.mxu0 %v595
    %1684 = vmatmul.bf16.gmra.mxu0 %v1649
    %v1685 = vpop.f32.mrf.mxu0
    %v1686 = vadd.f32 0.0, %v1685
    %v1687 = vpop.f32.mrf.mxu0
    %1688 = vdwg.mxu0
    %v1689 = vpack.c.bf16 %v1648, %v1648
    %1690 = vmatpush.bf16.msra.mxu0 %v813
    %1691 = vmatpush.bf16.msra.mxu0 %v810
    %1692 = vmatpush.bf16.msra.mxu0 %v807
    %1693 = vmatpush.bf16.msra.mxu0 %v804
    %1694 = vmatpush.bf16.msra.mxu0 %v801
    %1695 = vmatpush.bf16.msra.mxu0 %v798
    %1696 = vmatpush.bf16.msra.mxu0 %v795
    %1697 = vmatpush.bf16.msra.mxu0 %v792
    %1698 = vmatmul.bf16.gmra.mxu0 %v1689
    %v1699 = vpop.f32.mrf.mxu0
    %v1700 = vadd.f32 0.0, %v1699
    %v1701 = vpop.f32.mrf.mxu0
    %1702 = vdwg.mxu0
    %1703 = vmatpush.bf16.msra.mxu0 %v814
    %1704 = vmatpush.bf16.msra.mxu0 %v811
    %1705 = vmatpush.bf16.msra.mxu0 %v808
    %1706 = vmatpush.bf16.msra.mxu0 %v805
    %1707 = vmatpush.bf16.msra.mxu0 %v802
    %1708 = vmatpush.bf16.msra.mxu0 %v799
    %1709 = vmatpush.bf16.msra.mxu0 %v796
    %1710 = vmatpush.bf16.msra.mxu0 %v793
    %1711 = vmatmul.bf16.gmra.mxu0 %v1689
    %v1712 = vpop.f32.mrf.mxu0
    %v1713 = vadd.f32 0.0, %v1712
    %v1714 = vpop.f32.mrf.mxu0
    %1715 = vdwg.mxu0
    %1716 = vmatpush.bf16.msra.mxu0 %v815
    %1717 = vmatpush.bf16.msra.mxu0 %v812
    %1718 = vmatpush.bf16.msra.mxu0 %v809
    %1719 = vmatpush.bf16.msra.mxu0 %v806
    %1720 = vmatpush.bf16.msra.mxu0 %v803
    %1721 = vmatpush.bf16.msra.mxu0 %v800
    %1722 = vmatpush.bf16.msra.mxu0 %v797
    %1723 = vmatpush.bf16.msra.mxu0 %v794
    %1724 = vmatmul.bf16.gmra.mxu0 %v1689
    %v1725 = vpop.f32.mrf.mxu0
    %v1726 = vadd.f32 0.0, %v1725
    %v1727 = vpop.f32.mrf.mxu0
    %1728 = vdwg.mxu0
    %s1729 = smul.u32 3, 3
    %s1730 = smul.addr %s1729, 8
    %s1731 = scalar_lea.vmem [#allocation2], %s1730
    %v1732 = vld [vmem:[%s1731] sm:$0xff]
    %v1733 = vld [vmem:[%s1731 + $0x8] sm:$0xff]
    %v1734 = vld [vmem:[%s1731 + $0x10] sm:$0xff]
    %v1735 = vadd.f32 %v1732, %v1660
    %v1736 = vxor.u32 %v1735, 2147483648
    %v1737 = vmul.f32 %v1736, 1.442695
    %v1738 = vpow.pop %v1737
    %v1739 = vadd.f32 %v1738, 1.0
    %v1740 = vrcp.pop %v1739
    %v1741 = vmul.f32 %v1739, %v1740
    %v1742 = vsub.f32 1.0, %v1741
    %v1743 = vmul.f32 %v1740, %v1742
    %v1744 = vadd.f32 %v1740, %v1743
    %vm1745 = vweird.f32 %v1739
    %vm1746 = vweird.f32 %v1740
    %vm1747 = vmor %vm1745, %vm1746
    %v1748 = vsel %vm1747, %v1740, %v1744
    %v1749 = vand.u32 2147483647, %v1739
    %vm1750 = vcmp.eq.f32.partialorder %v1749, 8.507059e+37
    %v1751 = vand.u32 %v1739, 2147483648
    %v1752 = vor.u32 1.1754944e-38, %v1751
    %v1753 = vsel %vm1750, %v1752, %v1748
    %v1754 = vmul.f32 1.0, %v1753
    %v1755 = vadd.f32 %v1733, %v1673
    %v1756 = vxor.u32 %v1755, 2147483648
    %v1757 = vmul.f32 %v1756, 1.442695
    %v1758 = vpow.pop %v1757
    %v1759 = vadd.f32 %v1758, 1.0
    %v1760 = vrcp.pop %v1759
    %v1761 = vmul.f32 %v1759, %v1760
    %v1762 = vsub.f32 1.0, %v1761
    %v1763 = vmul.f32 %v1760, %v1762
    %v1764 = vadd.f32 %v1760, %v1763
    %vm1765 = vweird.f32 %v1759
    %vm1766 = vweird.f32 %v1760
    %vm1767 = vmor %vm1765, %vm1766
    %v1768 = vsel %vm1767, %v1760, %v1764
    %v1769 = vand.u32 2147483647, %v1759
    %vm1770 = vcmp.eq.f32.partialorder %v1769, 8.507059e+37
    %v1771 = vand.u32 %v1759, 2147483648
    %v1772 = vor.u32 1.1754944e-38, %v1771
    %v1773 = vsel %vm1770, %v1772, %v1768
    %v1774 = vmul.f32 1.0, %v1773
    %v1775 = vadd.f32 %v1686, %v467
    %v1776 = vmul.f32 %v1754, %v1775
    %v1777 = vadd.f32 %v1734, %v1776
    %v1778 = vtanh.pop %v1777
    %v1779 = vsub.f32 1.0, %v1774
    %v1780 = vmul.f32 %v1779, %v1778
    %v1781 = vmul.f32 %v1774, %v1647
    %v1782 = vadd.f32 %v1780, %v1781
    %v1783 = vpack.c.bf16 %v1782, %v1782
    %1784 = vmatpush.bf16.msra.mxu0 %v1067
    %1785 = vmatpush.bf16.msra.mxu0 %v1064
    %1786 = vmatpush.bf16.msra.mxu0 %v1061
    %1787 = vmatpush.bf16.msra.mxu0 %v1058
    %1788 = vmatpush.bf16.msra.mxu0 %v1055
    %1789 = vmatpush.bf16.msra.mxu0 %v1052
    %1790 = vmatpush.bf16.msra.mxu0 %v1049
    %1791 = vmatpush.bf16.msra.mxu0 %v1046
    %1792 = vmatmul.bf16.gmra.mxu0 %v1783
    %v1793 = vpop.f32.mrf.mxu0
    %v1794 = vadd.f32 %v475, %v1793
    %v1795 = vpop.f32.mrf.mxu0
    %1796 = vdwg.mxu0
    %1797 = vmatpush.bf16.msra.mxu0 %v1068
    %1798 = vmatpush.bf16.msra.mxu0 %v1065
    %1799 = vmatpush.bf16.msra.mxu0 %v1062
    %1800 = vmatpush.bf16.msra.mxu0 %v1059
    %1801 = vmatpush.bf16.msra.mxu0 %v1056
    %1802 = vmatpush.bf16.msra.mxu0 %v1053
    %1803 = vmatpush.bf16.msra.mxu0 %v1050
    %1804 = vmatpush.bf16.msra.mxu0 %v1047
    %1805 = vmatmul.bf16.gmra.mxu0 %v1783
    %v1806 = vpop.f32.mrf.mxu0
    %v1807 = vadd.f32 %v476, %v1806
    %v1808 = vpop.f32.mrf.mxu0
    %1809 = vdwg.mxu0
    %1810 = vmatpush.bf16.msra.mxu0 %v1069
    %1811 = vmatpush.bf16.msra.mxu0 %v1066
    %1812 = vmatpush.bf16.msra.mxu0 %v1063
    %1813 = vmatpush.bf16.msra.mxu0 %v1060
    %1814 = vmatpush.bf16.msra.mxu0 %v1057
    %1815 = vmatpush.bf16.msra.mxu0 %v1054
    %1816 = vmatpush.bf16.msra.mxu0 %v1051
    %1817 = vmatpush.bf16.msra.mxu0 %v1048
    %1818 = vmatmul.bf16.gmra.mxu0 %v1783
    %v1819 = vpop.f32.mrf.mxu0
    %v1820 = vadd.f32 %v477, %v1819
    %v1821 = vpop.f32.mrf.mxu0
    %1822 = vdwg.mxu0
    %v1823 = vadd.f32 %v1794, %v1700
    %v1824 = vxor.u32 %v1823, 2147483648
    %v1825 = vmul.f32 %v1824, 1.442695
    %v1826 = vpow.pop %v1825
    %v1827 = vadd.f32 %v1826, 1.0
    %v1828 = vrcp.pop %v1827
    %v1829 = vmul.f32 %v1827, %v1828
    %v1830 = vsub.f32 1.0, %v1829
    %v1831 = vmul.f32 %v1828, %v1830
    %v1832 = vadd.f32 %v1828, %v1831
    %vm1833 = vweird.f32 %v1827
    %vm1834 = vweird.f32 %v1828
    %vm1835 = vmor %vm1833, %vm1834
    %v1836 = vsel %vm1835, %v1828, %v1832
    %v1837 = vand.u32 2147483647, %v1827
    %vm1838 = vcmp.eq.f32.partialorder %v1837, 8.507059e+37
    %v1839 = vand.u32 %v1827, 2147483648
    %v1840 = vor.u32 1.1754944e-38, %v1839
    %v1841 = vsel %vm1838, %v1840, %v1836
    %v1842 = vmul.f32 1.0, %v1841
    %v1843 = vadd.f32 %v1807, %v1713
    %v1844 = vxor.u32 %v1843, 2147483648
    %v1845 = vmul.f32 %v1844, 1.442695
    %v1846 = vpow.pop %v1845
    %v1847 = vadd.f32 %v1846, 1.0
    %v1848 = vrcp.pop %v1847
    %v1849 = vmul.f32 %v1847, %v1848
    %v1850 = vsub.f32 1.0, %v1849
    %v1851 = vmul.f32 %v1848, %v1850
    %v1852 = vadd.f32 %v1848, %v1851
    %vm1853 = vweird.f32 %v1847
    %vm1854 = vweird.f32 %v1848
    %vm1855 = vmor %vm1853, %vm1854
    %v1856 = vsel %vm1855, %v1848, %v1852
    %v1857 = vand.u32 2147483647, %v1847
    %vm1858 = vcmp.eq.f32.partialorder %v1857, 8.507059e+37
    %v1859 = vand.u32 %v1847, 2147483648
    %v1860 = vor.u32 1.1754944e-38, %v1859
    %v1861 = vsel %vm1858, %v1860, %v1856
    %v1862 = vmul.f32 1.0, %v1861
    %v1863 = vadd.f32 %v1726, %v471
    %v1864 = vmul.f32 %v1842, %v1863
    %v1865 = vadd.f32 %v1820, %v1864
    %v1866 = vtanh.pop %v1865
    %v1867 = vsub.f32 1.0, %v1862
    %v1868 = vmul.f32 %v1867, %v1866
    %v1869 = vmul.f32 %v1862, %v1648
    %v1870 = vadd.f32 %v1868, %v1869
    %vm1871 = vcmp.gt.s32.totalorder %v464, 3
    %v1872 = vsel %vm1871, 1, 0
    %1873 = vset.pattern.permute.xlu0 0
    %1874 = vperm.xlu0 %1873, %v1872
    %v1875 = vpop.permute.xlu0 %1874
    %vm1876 = vcmp.eq.s32.totalorder %v1875, 1
    %v1877 = vsel %vm1876, %v1782, %v1647
    %v1878 = vsel %vm1876, %v1870, %v1648
    %v1879 = vpack.c.bf16 %v1877, %v1877
    %1880 = vmatpush.bf16.msra.mxu0 %v614
    %1881 = vmatpush.bf16.msra.mxu0 %v611
    %1882 = vmatpush.bf16.msra.mxu0 %v608
    %1883 = vmatpush.bf16.msra.mxu0 %v605
    %1884 = vmatpush.bf16.msra.mxu0 %v602
    %1885 = vmatpush.bf16.msra.mxu0 %v599
    %1886 = vmatpush.bf16.msra.mxu0 %v596
    %1887 = vmatpush.bf16.msra.mxu0 %v593
    %1888 = vmatmul.bf16.gmra.mxu0 %v1879
    %v1889 = vpop.f32.mrf.mxu0
    %v1890 = vadd.f32 0.0, %v1889
    %v1891 = vpop.f32.mrf.mxu0
    %1892 = vdwg.mxu0
    %1893 = vmatpush.bf16.msra.mxu0 %v615
    %1894 = vmatpush.bf16.msra.mxu0 %v612
    %1895 = vmatpush.bf16.msra.mxu0 %v609
    %1896 = vmatpush.bf16.msra.mxu0 %v606
    %1897 = vmatpush.bf16.msra.mxu0 %v603
    %1898 = vmatpush.bf16.msra.mxu0 %v600
    %1899 = vmatpush.bf16.msra.mxu0 %v597
    %1900 = vmatpush.bf16.msra.mxu0 %v594
    %1901 = vmatmul.bf16.gmra.mxu0 %v1879
    %v1902 = vpop.f32.mrf.mxu0
    %v1903 = vadd.f32 0.0, %v1902
    %v1904 = vpop.f32.mrf.mxu0
    %1905 = vdwg.mxu0
    %1906 = vmatpush.bf16.msra.mxu0 %v616
    %1907 = vmatpush.bf16.msra.mxu0 %v613
    %1908 = vmatpush.bf16.msra.mxu0 %v610
    %1909 = vmatpush.bf16.msra.mxu0 %v607
    %1910 = vmatpush.bf16.msra.mxu0 %v604
    %1911 = vmatpush.bf16.msra.mxu0 %v601
    %1912 = vmatpush.bf16.msra.mxu0 %v598
    %1913 = vmatpush.bf16.msra.mxu0 %v595
    %1914 = vmatmul.bf16.gmra.mxu0 %v1879
    %v1915 = vpop.f32.mrf.mxu0
    %v1916 = vadd.f32 0.0, %v1915
    %v1917 = vpop.f32.mrf.mxu0
    %1918 = vdwg.mxu0
    %v1919 = vpack.c.bf16 %v1878, %v1878
    %1920 = vmatpush.bf16.msra.mxu0 %v813
    %1921 = vmatpush.bf16.msra.mxu0 %v810
    %1922 = vmatpush.bf16.msra.mxu0 %v807
    %1923 = vmatpush.bf16.msra.mxu0 %v804
    %1924 = vmatpush.bf16.msra.mxu0 %v801
    %1925 = vmatpush.bf16.msra.mxu0 %v798
    %1926 = vmatpush.bf16.msra.mxu0 %v795
    %1927 = vmatpush.bf16.msra.mxu0 %v792
    %1928 = vmatmul.bf16.gmra.mxu0 %v1919
    %v1929 = vpop.f32.mrf.mxu0
    %v1930 = vadd.f32 0.0, %v1929
    %v1931 = vpop.f32.mrf.mxu0
    %1932 = vdwg.mxu0
    %1933 = vmatpush.bf16.msra.mxu0 %v814
    %1934 = vmatpush.bf16.msra.mxu0 %v811
    %1935 = vmatpush.bf16.msra.mxu0 %v808
    %1936 = vmatpush.bf16.msra.mxu0 %v805
    %1937 = vmatpush.bf16.msra.mxu0 %v802
    %1938 = vmatpush.bf16.msra.mxu0 %v799
    %1939 = vmatpush.bf16.msra.mxu0 %v796
    %1940 = vmatpush.bf16.msra.mxu0 %v793
    %1941 = vmatmul.bf16.gmra.mxu0 %v1919
    %v1942 = vpop.f32.mrf.mxu0
    %v1943 = vadd.f32 0.0, %v1942
    %v1944 = vpop.f32.mrf.mxu0
    %1945 = vdwg.mxu0
    %1946 = vmatpush.bf16.msra.mxu0 %v815
    %1947 = vmatpush.bf16.msra.mxu0 %v812
    %1948 = vmatpush.bf16.msra.mxu0 %v809
    %1949 = vmatpush.bf16.msra.mxu0 %v806
    %1950 = vmatpush.bf16.msra.mxu0 %v803
    %1951 = vmatpush.bf16.msra.mxu0 %v800
    %1952 = vmatpush.bf16.msra.mxu0 %v797
    %1953 = vmatpush.bf16.msra.mxu0 %v794
    %1954 = vmatmul.bf16.gmra.mxu0 %v1919
    %v1955 = vpop.f32.mrf.mxu0
    %v1956 = vadd.f32 0.0, %v1955
    %v1957 = vpop.f32.mrf.mxu0
    %1958 = vdwg.mxu0
    %s1959 = smul.u32 4, 3
    %s1960 = smul.addr %s1959, 8
    %s1961 = scalar_lea.vmem [#allocation2], %s1960
    %v1962 = vld [vmem:[%s1961] sm:$0xff]
    %v1963 = vld [vmem:[%s1961 + $0x8] sm:$0xff]
    %v1964 = vld [vmem:[%s1961 + $0x10] sm:$0xff]
    %v1965 = vadd.f32 %v1962, %v1890
    %v1966 = vxor.u32 %v1965, 2147483648
    %v1967 = vmul.f32 %v1966, 1.442695
    %v1968 = vpow.pop %v1967
    %v1969 = vadd.f32 %v1968, 1.0
    %v1970 = vrcp.pop %v1969
    %v1971 = vmul.f32 %v1969, %v1970
    %v1972 = vsub.f32 1.0, %v1971
    %v1973 = vmul.f32 %v1970, %v1972
    %v1974 = vadd.f32 %v1970, %v1973
    %vm1975 = vweird.f32 %v1969
    %vm1976 = vweird.f32 %v1970
    %vm1977 = vmor %vm1975, %vm1976
    %v1978 = vsel %vm1977, %v1970, %v1974
    %v1979 = vand.u32 2147483647, %v1969
    %vm1980 = vcmp.eq.f32.partialorder %v1979, 8.507059e+37
    %v1981 = vand.u32 %v1969, 2147483648
    %v1982 = vor.u32 1.1754944e-38, %v1981
    %v1983 = vsel %vm1980, %v1982, %v1978
    %v1984 = vmul.f32 1.0, %v1983
    %v1985 = vadd.f32 %v1963, %v1903
    %v1986 = vxor.u32 %v1985, 2147483648
    %v1987 = vmul.f32 %v1986, 1.442695
    %v1988 = vpow.pop %v1987
    %v1989 = vadd.f32 %v1988, 1.0
    %v1990 = vrcp.pop %v1989
    %v1991 = vmul.f32 %v1989, %v1990
    %v1992 = vsub.f32 1.0, %v1991
    %v1993 = vmul.f32 %v1990, %v1992
    %v1994 = vadd.f32 %v1990, %v1993
    %vm1995 = vweird.f32 %v1989
    %vm1996 = vweird.f32 %v1990
    %vm1997 = vmor %vm1995, %vm1996
    %v1998 = vsel %vm1997, %v1990, %v1994
    %v1999 = vand.u32 2147483647, %v1989
    %vm2000 = vcmp.eq.f32.partialorder %v1999, 8.507059e+37
    %v2001 = vand.u32 %v1989, 2147483648
    %v2002 = vor.u32 1.1754944e-38, %v2001
    %v2003 = vsel %vm2000, %v2002, %v1998
    %v2004 = vmul.f32 1.0, %v2003
    %v2005 = vadd.f32 %v1916, %v467
    %v2006 = vmul.f32 %v1984, %v2005
    %v2007 = vadd.f32 %v1964, %v2006
    %v2008 = vtanh.pop %v2007
    %v2009 = vsub.f32 1.0, %v2004
    %v2010 = vmul.f32 %v2009, %v2008
    %v2011 = vmul.f32 %v2004, %v1877
    %v2012 = vadd.f32 %v2010, %v2011
    %v2013 = vpack.c.bf16 %v2012, %v2012
    %2014 = vmatpush.bf16.msra.mxu0 %v1067
    %2015 = vmatpush.bf16.msra.mxu0 %v1064
    %2016 = vmatpush.bf16.msra.mxu0 %v1061
    %2017 = vmatpush.bf16.msra.mxu0 %v1058
    %2018 = vmatpush.bf16.msra.mxu0 %v1055
    %2019 = vmatpush.bf16.msra.mxu0 %v1052
    %2020 = vmatpush.bf16.msra.mxu0 %v1049
    %2021 = vmatpush.bf16.msra.mxu0 %v1046
    %2022 = vmatmul.bf16.gmra.mxu0 %v2013
    %v2023 = vpop.f32.mrf.mxu0
    %v2024 = vadd.f32 %v475, %v2023
    %v2025 = vpop.f32.mrf.mxu0
    %2026 = vdwg.mxu0
    %2027 = vmatpush.bf16.msra.mxu0 %v1068
    %2028 = vmatpush.bf16.msra.mxu0 %v1065
    %2029 = vmatpush.bf16.msra.mxu0 %v1062
    %2030 = vmatpush.bf16.msra.mxu0 %v1059
    %2031 = vmatpush.bf16.msra.mxu0 %v1056
    %2032 = vmatpush.bf16.msra.mxu0 %v1053
    %2033 = vmatpush.bf16.msra.mxu0 %v1050
    %2034 = vmatpush.bf16.msra.mxu0 %v1047
    %2035 = vmatmul.bf16.gmra.mxu0 %v2013
    %v2036 = vpop.f32.mrf.mxu0
    %v2037 = vadd.f32 %v476, %v2036
    %v2038 = vpop.f32.mrf.mxu0
    %2039 = vdwg.mxu0
    %2040 = vmatpush.bf16.msra.mxu0 %v1069
    %2041 = vmatpush.bf16.msra.mxu0 %v1066
    %2042 = vmatpush.bf16.msra.mxu0 %v1063
    %2043 = vmatpush.bf16.msra.mxu0 %v1060
    %2044 = vmatpush.bf16.msra.mxu0 %v1057
    %2045 = vmatpush.bf16.msra.mxu0 %v1054
    %2046 = vmatpush.bf16.msra.mxu0 %v1051
    %2047 = vmatpush.bf16.msra.mxu0 %v1048
    %2048 = vmatmul.bf16.gmra.mxu0 %v2013
    %v2049 = vpop.f32.mrf.mxu0
    %v2050 = vadd.f32 %v477, %v2049
    %v2051 = vpop.f32.mrf.mxu0
    %2052 = vdwg.mxu0
    %v2053 = vadd.f32 %v2024, %v1930
    %v2054 = vxor.u32 %v2053, 2147483648
    %v2055 = vmul.f32 %v2054, 1.442695
    %v2056 = vpow.pop %v2055
    %v2057 = vadd.f32 %v2056, 1.0
    %v2058 = vrcp.pop %v2057
    %v2059 = vmul.f32 %v2057, %v2058
    %v2060 = vsub.f32 1.0, %v2059
    %v2061 = vmul.f32 %v2058, %v2060
    %v2062 = vadd.f32 %v2058, %v2061
    %vm2063 = vweird.f32 %v2057
    %vm2064 = vweird.f32 %v2058
    %vm2065 = vmor %vm2063, %vm2064
    %v2066 = vsel %vm2065, %v2058, %v2062
    %v2067 = vand.u32 2147483647, %v2057
    %vm2068 = vcmp.eq.f32.partialorder %v2067, 8.507059e+37
    %v2069 = vand.u32 %v2057, 2147483648
    %v2070 = vor.u32 1.1754944e-38, %v2069
    %v2071 = vsel %vm2068, %v2070, %v2066
    %v2072 = vmul.f32 1.0, %v2071
    %v2073 = vadd.f32 %v2037, %v1943
    %v2074 = vxor.u32 %v2073, 2147483648
    %v2075 = vmul.f32 %v2074, 1.442695
    %v2076 = vpow.pop %v2075
    %v2077 = vadd.f32 %v2076, 1.0
    %v2078 = vrcp.pop %v2077
    %v2079 = vmul.f32 %v2077, %v2078
    %v2080 = vsub.f32 1.0, %v2079
    %v2081 = vmul.f32 %v2078, %v2080
    %v2082 = vadd.f32 %v2078, %v2081
    %vm2083 = vweird.f32 %v2077
    %vm2084 = vweird.f32 %v2078
    %vm2085 = vmor %vm2083, %vm2084
    %v2086 = vsel %vm2085, %v2078, %v2082
    %v2087 = vand.u32 2147483647, %v2077
    %vm2088 = vcmp.eq.f32.partialorder %v2087, 8.507059e+37
    %v2089 = vand.u32 %v2077, 2147483648
    %v2090 = vor.u32 1.1754944e-38, %v2089
    %v2091 = vsel %vm2088, %v2090, %v2086
    %v2092 = vmul.f32 1.0, %v2091
    %v2093 = vadd.f32 %v1956, %v471
    %v2094 = vmul.f32 %v2072, %v2093
    %v2095 = vadd.f32 %v2050, %v2094
    %v2096 = vtanh.pop %v2095
    %v2097 = vsub.f32 1.0, %v2092
    %v2098 = vmul.f32 %v2097, %v2096
    %v2099 = vmul.f32 %v2092, %v1878
    %v2100 = vadd.f32 %v2098, %v2099
    %vm2101 = vcmp.gt.s32.totalorder %v464, 4
    %v2102 = vsel %vm2101, 1, 0
    %2103 = vset.pattern.permute.xlu0 0
    %2104 = vperm.xlu0 %2103, %v2102
    %v2105 = vpop.permute.xlu0 %2104
    %vm2106 = vcmp.eq.s32.totalorder %v2105, 1
    %v2107 = vsel %vm2106, %v2012, %v1877
    %v2108 = vsel %vm2106, %v2100, %v1878
    %v2109 = vpack.c.bf16 %v2107, %v2107
    %2110 = vmatpush.bf16.msra.mxu0 %v614
    %2111 = vmatpush.bf16.msra.mxu0 %v611
    %2112 = vmatpush.bf16.msra.mxu0 %v608
    %2113 = vmatpush.bf16.msra.mxu0 %v605
    %2114 = vmatpush.bf16.msra.mxu0 %v602
    %2115 = vmatpush.bf16.msra.mxu0 %v599
    %2116 = vmatpush.bf16.msra.mxu0 %v596
    %2117 = vmatpush.bf16.msra.mxu0 %v593
    %2118 = vmatmul.bf16.gmra.mxu0 %v2109
    %v2119 = vpop.f32.mrf.mxu0
    %v2120 = vadd.f32 0.0, %v2119
    %v2121 = vpop.f32.mrf.mxu0
    %2122 = vdwg.mxu0
    %2123 = vmatpush.bf16.msra.mxu0 %v615
    %2124 = vmatpush.bf16.msra.mxu0 %v612
    %2125 = vmatpush.bf16.msra.mxu0 %v609
    %2126 = vmatpush.bf16.msra.mxu0 %v606
    %2127 = vmatpush.bf16.msra.mxu0 %v603
    %2128 = vmatpush.bf16.msra.mxu0 %v600
    %2129 = vmatpush.bf16.msra.mxu0 %v597
    %2130 = vmatpush.bf16.msra.mxu0 %v594
    %2131 = vmatmul.bf16.gmra.mxu0 %v2109
    %v2132 = vpop.f32.mrf.mxu0
    %v2133 = vadd.f32 0.0, %v2132
    %v2134 = vpop.f32.mrf.mxu0
    %2135 = vdwg.mxu0
    %2136 = vmatpush.bf16.msra.mxu0 %v616
    %2137 = vmatpush.bf16.msra.mxu0 %v613
    %2138 = vmatpush.bf16.msra.mxu0 %v610
    %2139 = vmatpush.bf16.msra.mxu0 %v607
    %2140 = vmatpush.bf16.msra.mxu0 %v604
    %2141 = vmatpush.bf16.msra.mxu0 %v601
    %2142 = vmatpush.bf16.msra.mxu0 %v598
    %2143 = vmatpush.bf16.msra.mxu0 %v595
    %2144 = vmatmul.bf16.gmra.mxu0 %v2109
    %v2145 = vpop.f32.mrf.mxu0
    %v2146 = vadd.f32 0.0, %v2145
    %v2147 = vpop.f32.mrf.mxu0
    %2148 = vdwg.mxu0
    %v2149 = vpack.c.bf16 %v2108, %v2108
    %2150 = vmatpush.bf16.msra.mxu0 %v813
    %2151 = vmatpush.bf16.msra.mxu0 %v810
    %2152 = vmatpush.bf16.msra.mxu0 %v807
    %2153 = vmatpush.bf16.msra.mxu0 %v804
    %2154 = vmatpush.bf16.msra.mxu0 %v801
    %2155 = vmatpush.bf16.msra.mxu0 %v798
    %2156 = vmatpush.bf16.msra.mxu0 %v795
    %2157 = vmatpush.bf16.msra.mxu0 %v792
    %2158 = vmatmul.bf16.gmra.mxu0 %v2149
    %v2159 = vpop.f32.mrf.mxu0
    %v2160 = vadd.f32 0.0, %v2159
    %v2161 = vpop.f32.mrf.mxu0
    %2162 = vdwg.mxu0
    %2163 = vmatpush.bf16.msra.mxu0 %v814
    %2164 = vmatpush.bf16.msra.mxu0 %v811
    %2165 = vmatpush.bf16.msra.mxu0 %v808
    %2166 = vmatpush.bf16.msra.mxu0 %v805
    %2167 = vmatpush.bf16.msra.mxu0 %v802
    %2168 = vmatpush.bf16.msra.mxu0 %v799
    %2169 = vmatpush.bf16.msra.mxu0 %v796
    %2170 = vmatpush.bf16.msra.mxu0 %v793
    %2171 = vmatmul.bf16.gmra.mxu0 %v2149
    %v2172 = vpop.f32.mrf.mxu0
    %v2173 = vadd.f32 0.0, %v2172
    %v2174 = vpop.f32.mrf.mxu0
    %2175 = vdwg.mxu0
    %2176 = vmatpush.bf16.msra.mxu0 %v815
    %2177 = vmatpush.bf16.msra.mxu0 %v812
    %2178 = vmatpush.bf16.msra.mxu0 %v809
    %2179 = vmatpush.bf16.msra.mxu0 %v806
    %2180 = vmatpush.bf16.msra.mxu0 %v803
    %2181 = vmatpush.bf16.msra.mxu0 %v800
    %2182 = vmatpush.bf16.msra.mxu0 %v797
    %2183 = vmatpush.bf16.msra.mxu0 %v794
    %2184 = vmatmul.bf16.gmra.mxu0 %v2149
    %v2185 = vpop.f32.mrf.mxu0
    %v2186 = vadd.f32 0.0, %v2185
    %v2187 = vpop.f32.mrf.mxu0
    %2188 = vdwg.mxu0
    %s2189 = smul.u32 5, 3
    %s2190 = smul.addr %s2189, 8
    %s2191 = scalar_lea.vmem [#allocation2], %s2190
    %v2192 = vld [vmem:[%s2191] sm:$0xff]
    %v2193 = vld [vmem:[%s2191 + $0x8] sm:$0xff]
    %v2194 = vld [vmem:[%s2191 + $0x10] sm:$0xff]
    %v2195 = vadd.f32 %v2192, %v2120
    %v2196 = vxor.u32 %v2195, 2147483648
    %v2197 = vmul.f32 %v2196, 1.442695
    %v2198 = vpow.pop %v2197
    %v2199 = vadd.f32 %v2198, 1.0
    %v2200 = vrcp.pop %v2199
    %v2201 = vmul.f32 %v2199, %v2200
    %v2202 = vsub.f32 1.0, %v2201
    %v2203 = vmul.f32 %v2200, %v2202
    %v2204 = vadd.f32 %v2200, %v2203
    %vm2205 = vweird.f32 %v2199
    %vm2206 = vweird.f32 %v2200
    %vm2207 = vmor %vm2205, %vm2206
    %v2208 = vsel %vm2207, %v2200, %v2204
    %v2209 = vand.u32 2147483647, %v2199
    %vm2210 = vcmp.eq.f32.partialorder %v2209, 8.507059e+37
    %v2211 = vand.u32 %v2199, 2147483648
    %v2212 = vor.u32 1.1754944e-38, %v2211
    %v2213 = vsel %vm2210, %v2212, %v2208
    %v2214 = vmul.f32 1.0, %v2213
    %v2215 = vadd.f32 %v2193, %v2133
    %v2216 = vxor.u32 %v2215, 2147483648
    %v2217 = vmul.f32 %v2216, 1.442695
    %v2218 = vpow.pop %v2217
    %v2219 = vadd.f32 %v2218, 1.0
    %v2220 = vrcp.pop %v2219
    %v2221 = vmul.f32 %v2219, %v2220
    %v2222 = vsub.f32 1.0, %v2221
    %v2223 = vmul.f32 %v2220, %v2222
    %v2224 = vadd.f32 %v2220, %v2223
    %vm2225 = vweird.f32 %v2219
    %vm2226 = vweird.f32 %v2220
    %vm2227 = vmor %vm2225, %vm2226
    %v2228 = vsel %vm2227, %v2220, %v2224
    %v2229 = vand.u32 2147483647, %v2219
    %vm2230 = vcmp.eq.f32.partialorder %v2229, 8.507059e+37
    %v2231 = vand.u32 %v2219, 2147483648
    %v2232 = vor.u32 1.1754944e-38, %v2231
    %v2233 = vsel %vm2230, %v2232, %v2228
    %v2234 = vmul.f32 1.0, %v2233
    %v2235 = vadd.f32 %v2146, %v467
    %v2236 = vmul.f32 %v2214, %v2235
    %v2237 = vadd.f32 %v2194, %v2236
    %v2238 = vtanh.pop %v2237
    %v2239 = vsub.f32 1.0, %v2234
    %v2240 = vmul.f32 %v2239, %v2238
    %v2241 = vmul.f32 %v2234, %v2107
    %v2242 = vadd.f32 %v2240, %v2241
    %v2243 = vpack.c.bf16 %v2242, %v2242
    %2244 = vmatpush.bf16.msra.mxu0 %v1067
    %2245 = vmatpush.bf16.msra.mxu0 %v1064
    %2246 = vmatpush.bf16.msra.mxu0 %v1061
    %2247 = vmatpush.bf16.msra.mxu0 %v1058
    %2248 = vmatpush.bf16.msra.mxu0 %v1055
    %2249 = vmatpush.bf16.msra.mxu0 %v1052
    %2250 = vmatpush.bf16.msra.mxu0 %v1049
    %2251 = vmatpush.bf16.msra.mxu0 %v1046
    %2252 = vmatmul.bf16.gmra.mxu0 %v2243
    %v2253 = vpop.f32.mrf.mxu0
    %v2254 = vadd.f32 %v475, %v2253
    %v2255 = vpop.f32.mrf.mxu0
    %2256 = vdwg.mxu0
    %2257 = vmatpush.bf16.msra.mxu0 %v1068
    %2258 = vmatpush.bf16.msra.mxu0 %v1065
    %2259 = vmatpush.bf16.msra.mxu0 %v1062
    %2260 = vmatpush.bf16.msra.mxu0 %v1059
    %2261 = vmatpush.bf16.msra.mxu0 %v1056
    %2262 = vmatpush.bf16.msra.mxu0 %v1053
    %2263 = vmatpush.bf16.msra.mxu0 %v1050
    %2264 = vmatpush.bf16.msra.mxu0 %v1047
    %2265 = vmatmul.bf16.gmra.mxu0 %v2243
    %v2266 = vpop.f32.mrf.mxu0
    %v2267 = vadd.f32 %v476, %v2266
    %v2268 = vpop.f32.mrf.mxu0
    %2269 = vdwg.mxu0
    %2270 = vmatpush.bf16.msra.mxu0 %v1069
    %2271 = vmatpush.bf16.msra.mxu0 %v1066
    %2272 = vmatpush.bf16.msra.mxu0 %v1063
    %2273 = vmatpush.bf16.msra.mxu0 %v1060
    %2274 = vmatpush.bf16.msra.mxu0 %v1057
    %2275 = vmatpush.bf16.msra.mxu0 %v1054
    %2276 = vmatpush.bf16.msra.mxu0 %v1051
    %2277 = vmatpush.bf16.msra.mxu0 %v1048
    %2278 = vmatmul.bf16.gmra.mxu0 %v2243
    %v2279 = vpop.f32.mrf.mxu0
    %v2280 = vadd.f32 %v477, %v2279
    %v2281 = vpop.f32.mrf.mxu0
    %2282 = vdwg.mxu0
    %v2283 = vadd.f32 %v2254, %v2160
    %v2284 = vxor.u32 %v2283, 2147483648
    %v2285 = vmul.f32 %v2284, 1.442695
    %v2286 = vpow.pop %v2285
    %v2287 = vadd.f32 %v2286, 1.0
    %v2288 = vrcp.pop %v2287
    %v2289 = vmul.f32 %v2287, %v2288
    %v2290 = vsub.f32 1.0, %v2289
    %v2291 = vmul.f32 %v2288, %v2290
    %v2292 = vadd.f32 %v2288, %v2291
    %vm2293 = vweird.f32 %v2287
    %vm2294 = vweird.f32 %v2288
    %vm2295 = vmor %vm2293, %vm2294
    %v2296 = vsel %vm2295, %v2288, %v2292
    %v2297 = vand.u32 2147483647, %v2287
    %vm2298 = vcmp.eq.f32.partialorder %v2297, 8.507059e+37
    %v2299 = vand.u32 %v2287, 2147483648
    %v2300 = vor.u32 1.1754944e-38, %v2299
    %v2301 = vsel %vm2298, %v2300, %v2296
    %v2302 = vmul.f32 1.0, %v2301
    %v2303 = vadd.f32 %v2267, %v2173
    %v2304 = vxor.u32 %v2303, 2147483648
    %v2305 = vmul.f32 %v2304, 1.442695
    %v2306 = vpow.pop %v2305
    %v2307 = vadd.f32 %v2306, 1.0
    %v2308 = vrcp.pop %v2307
    %v2309 = vmul.f32 %v2307, %v2308
    %v2310 = vsub.f32 1.0, %v2309
    %v2311 = vmul.f32 %v2308, %v2310
    %v2312 = vadd.f32 %v2308, %v2311
    %vm2313 = vweird.f32 %v2307
    %vm2314 = vweird.f32 %v2308
    %vm2315 = vmor %vm2313, %vm2314
    %v2316 = vsel %vm2315, %v2308, %v2312
    %v2317 = vand.u32 2147483647, %v2307
    %vm2318 = vcmp.eq.f32.partialorder %v2317, 8.507059e+37
    %v2319 = vand.u32 %v2307, 2147483648
    %v2320 = vor.u32 1.1754944e-38, %v2319
    %v2321 = vsel %vm2318, %v2320, %v2316
    %v2322 = vmul.f32 1.0, %v2321
    %v2323 = vadd.f32 %v2186, %v471
    %v2324 = vmul.f32 %v2302, %v2323
    %v2325 = vadd.f32 %v2280, %v2324
    %v2326 = vtanh.pop %v2325
    %v2327 = vsub.f32 1.0, %v2322
    %v2328 = vmul.f32 %v2327, %v2326
    %v2329 = vmul.f32 %v2322, %v2108
    %v2330 = vadd.f32 %v2328, %v2329
    %vm2331 = vcmp.gt.s32.totalorder %v464, 5
    %v2332 = vsel %vm2331, 1, 0
    %2333 = vset.pattern.permute.xlu0 0
    %2334 = vperm.xlu0 %2333, %v2332
    %v2335 = vpop.permute.xlu0 %2334
    %vm2336 = vcmp.eq.s32.totalorder %v2335, 1
    %v2337 = vsel %vm2336, %v2242, %v2107
    %v2338 = vsel %vm2336, %v2330, %v2108
    %v2339 = vpack.c.bf16 %v2337, %v2337
    %2340 = vmatpush.bf16.msra.mxu0 %v614
    %2341 = vmatpush.bf16.msra.mxu0 %v611
    %2342 = vmatpush.bf16.msra.mxu0 %v608
    %2343 = vmatpush.bf16.msra.mxu0 %v605
    %2344 = vmatpush.bf16.msra.mxu0 %v602
    %2345 = vmatpush.bf16.msra.mxu0 %v599
    %2346 = vmatpush.bf16.msra.mxu0 %v596
    %2347 = vmatpush.bf16.msra.mxu0 %v593
    %2348 = vmatmul.bf16.gmra.mxu0 %v2339
    %v2349 = vpop.f32.mrf.mxu0
    %v2350 = vadd.f32 0.0, %v2349
    %v2351 = vpop.f32.mrf.mxu0
    %2352 = vdwg.mxu0
    %2353 = vmatpush.bf16.msra.mxu0 %v615
    %2354 = vmatpush.bf16.msra.mxu0 %v612
    %2355 = vmatpush.bf16.msra.mxu0 %v609
    %2356 = vmatpush.bf16.msra.mxu0 %v606
    %2357 = vmatpush.bf16.msra.mxu0 %v603
    %2358 = vmatpush.bf16.msra.mxu0 %v600
    %2359 = vmatpush.bf16.msra.mxu0 %v597
    %2360 = vmatpush.bf16.msra.mxu0 %v594
    %2361 = vmatmul.bf16.gmra.mxu0 %v2339
    %v2362 = vpop.f32.mrf.mxu0
    %v2363 = vadd.f32 0.0, %v2362
    %v2364 = vpop.f32.mrf.mxu0
    %2365 = vdwg.mxu0
    %2366 = vmatpush.bf16.msra.mxu0 %v616
    %2367 = vmatpush.bf16.msra.mxu0 %v613
    %2368 = vmatpush.bf16.msra.mxu0 %v610
    %2369 = vmatpush.bf16.msra.mxu0 %v607
    %2370 = vmatpush.bf16.msra.mxu0 %v604
    %2371 = vmatpush.bf16.msra.mxu0 %v601
    %2372 = vmatpush.bf16.msra.mxu0 %v598
    %2373 = vmatpush.bf16.msra.mxu0 %v595
    %2374 = vmatmul.bf16.gmra.mxu0 %v2339
    %v2375 = vpop.f32.mrf.mxu0
    %v2376 = vadd.f32 0.0, %v2375
    %v2377 = vpop.f32.mrf.mxu0
    %2378 = vdwg.mxu0
    %v2379 = vpack.c.bf16 %v2338, %v2338
    %2380 = vmatpush.bf16.msra.mxu0 %v813
    %2381 = vmatpush.bf16.msra.mxu0 %v810
    %2382 = vmatpush.bf16.msra.mxu0 %v807
    %2383 = vmatpush.bf16.msra.mxu0 %v804
    %2384 = vmatpush.bf16.msra.mxu0 %v801
    %2385 = vmatpush.bf16.msra.mxu0 %v798
    %2386 = vmatpush.bf16.msra.mxu0 %v795
    %2387 = vmatpush.bf16.msra.mxu0 %v792
    %2388 = vmatmul.bf16.gmra.mxu0 %v2379
    %v2389 = vpop.f32.mrf.mxu0
    %v2390 = vadd.f32 0.0, %v2389
    %v2391 = vpop.f32.mrf.mxu0
    %2392 = vdwg.mxu0
    %2393 = vmatpush.bf16.msra.mxu0 %v814
    %2394 = vmatpush.bf16.msra.mxu0 %v811
    %2395 = vmatpush.bf16.msra.mxu0 %v808
    %2396 = vmatpush.bf16.msra.mxu0 %v805
    %2397 = vmatpush.bf16.msra.mxu0 %v802
    %2398 = vmatpush.bf16.msra.mxu0 %v799
    %2399 = vmatpush.bf16.msra.mxu0 %v796
    %2400 = vmatpush.bf16.msra.mxu0 %v793
    %2401 = vmatmul.bf16.gmra.mxu0 %v2379
    %v2402 = vpop.f32.mrf.mxu0
    %v2403 = vadd.f32 0.0, %v2402
    %v2404 = vpop.f32.mrf.mxu0
    %2405 = vdwg.mxu0
    %2406 = vmatpush.bf16.msra.mxu0 %v815
    %2407 = vmatpush.bf16.msra.mxu0 %v812
    %2408 = vmatpush.bf16.msra.mxu0 %v809
    %2409 = vmatpush.bf16.msra.mxu0 %v806
    %2410 = vmatpush.bf16.msra.mxu0 %v803
    %2411 = vmatpush.bf16.msra.mxu0 %v800
    %2412 = vmatpush.bf16.msra.mxu0 %v797
    %2413 = vmatpush.bf16.msra.mxu0 %v794
    %2414 = vmatmul.bf16.gmra.mxu0 %v2379
    %v2415 = vpop.f32.mrf.mxu0
    %v2416 = vadd.f32 0.0, %v2415
    %v2417 = vpop.f32.mrf.mxu0
    %2418 = vdwg.mxu0
    %s2419 = smul.u32 6, 3
    %s2420 = smul.addr %s2419, 8
    %s2421 = scalar_lea.vmem [#allocation2], %s2420
    %v2422 = vld [vmem:[%s2421] sm:$0xff]
    %v2423 = vld [vmem:[%s2421 + $0x8] sm:$0xff]
    %v2424 = vld [vmem:[%s2421 + $0x10] sm:$0xff]
    %v2425 = vadd.f32 %v2422, %v2350
    %v2426 = vxor.u32 %v2425, 2147483648
    %v2427 = vmul.f32 %v2426, 1.442695
    %v2428 = vpow.pop %v2427
    %v2429 = vadd.f32 %v2428, 1.0
    %v2430 = vrcp.pop %v2429
    %v2431 = vmul.f32 %v2429, %v2430
    %v2432 = vsub.f32 1.0, %v2431
    %v2433 = vmul.f32 %v2430, %v2432
    %v2434 = vadd.f32 %v2430, %v2433
    %vm2435 = vweird.f32 %v2429
    %vm2436 = vweird.f32 %v2430
    %vm2437 = vmor %vm2435, %vm2436
    %v2438 = vsel %vm2437, %v2430, %v2434
    %v2439 = vand.u32 2147483647, %v2429
    %vm2440 = vcmp.eq.f32.partialorder %v2439, 8.507059e+37
    %v2441 = vand.u32 %v2429, 2147483648
    %v2442 = vor.u32 1.1754944e-38, %v2441
    %v2443 = vsel %vm2440, %v2442, %v2438
    %v2444 = vmul.f32 1.0, %v2443
    %v2445 = vadd.f32 %v2423, %v2363
    %v2446 = vxor.u32 %v2445, 2147483648
    %v2447 = vmul.f32 %v2446, 1.442695
    %v2448 = vpow.pop %v2447
    %v2449 = vadd.f32 %v2448, 1.0
    %v2450 = vrcp.pop %v2449
    %v2451 = vmul.f32 %v2449, %v2450
    %v2452 = vsub.f32 1.0, %v2451
    %v2453 = vmul.f32 %v2450, %v2452
    %v2454 = vadd.f32 %v2450, %v2453
    %vm2455 = vweird.f32 %v2449
    %vm2456 = vweird.f32 %v2450
    %vm2457 = vmor %vm2455, %vm2456
    %v2458 = vsel %vm2457, %v2450, %v2454
    %v2459 = vand.u32 2147483647, %v2449
    %vm2460 = vcmp.eq.f32.partialorder %v2459, 8.507059e+37
    %v2461 = vand.u32 %v2449, 2147483648
    %v2462 = vor.u32 1.1754944e-38, %v2461
    %v2463 = vsel %vm2460, %v2462, %v2458
    %v2464 = vmul.f32 1.0, %v2463
    %v2465 = vadd.f32 %v2376, %v467
    %v2466 = vmul.f32 %v2444, %v2465
    %v2467 = vadd.f32 %v2424, %v2466
    %v2468 = vtanh.pop %v2467
    %v2469 = vsub.f32 1.0, %v2464
    %v2470 = vmul.f32 %v2469, %v2468
    %v2471 = vmul.f32 %v2464, %v2337
    %v2472 = vadd.f32 %v2470, %v2471
    %v2473 = vpack.c.bf16 %v2472, %v2472
    %2474 = vmatpush.bf16.msra.mxu0 %v1067
    %2475 = vmatpush.bf16.msra.mxu0 %v1064
    %2476 = vmatpush.bf16.msra.mxu0 %v1061
    %2477 = vmatpush.bf16.msra.mxu0 %v1058
    %2478 = vmatpush.bf16.msra.mxu0 %v1055
    %2479 = vmatpush.bf16.msra.mxu0 %v1052
    %2480 = vmatpush.bf16.msra.mxu0 %v1049
    %2481 = vmatpush.bf16.msra.mxu0 %v1046
    %2482 = vmatmul.bf16.gmra.mxu0 %v2473
    %v2483 = vpop.f32.mrf.mxu0
    %v2484 = vadd.f32 %v475, %v2483
    %v2485 = vpop.f32.mrf.mxu0
    %2486 = vdwg.mxu0
    %2487 = vmatpush.bf16.msra.mxu0 %v1068
    %2488 = vmatpush.bf16.msra.mxu0 %v1065
    %2489 = vmatpush.bf16.msra.mxu0 %v1062
    %2490 = vmatpush.bf16.msra.mxu0 %v1059
    %2491 = vmatpush.bf16.msra.mxu0 %v1056
    %2492 = vmatpush.bf16.msra.mxu0 %v1053
    %2493 = vmatpush.bf16.msra.mxu0 %v1050
    %2494 = vmatpush.bf16.msra.mxu0 %v1047
    %2495 = vmatmul.bf16.gmra.mxu0 %v2473
    %v2496 = vpop.f32.mrf.mxu0
    %v2497 = vadd.f32 %v476, %v2496
    %v2498 = vpop.f32.mrf.mxu0
    %2499 = vdwg.mxu0
    %2500 = vmatpush.bf16.msra.mxu0 %v1069
    %2501 = vmatpush.bf16.msra.mxu0 %v1066
    %2502 = vmatpush.bf16.msra.mxu0 %v1063
    %2503 = vmatpush.bf16.msra.mxu0 %v1060
    %2504 = vmatpush.bf16.msra.mxu0 %v1057
    %2505 = vmatpush.bf16.msra.mxu0 %v1054
    %2506 = vmatpush.bf16.msra.mxu0 %v1051
    %2507 = vmatpush.bf16.msra.mxu0 %v1048
    %2508 = vmatmul.bf16.gmra.mxu0 %v2473
    %v2509 = vpop.f32.mrf.mxu0
    %v2510 = vadd.f32 %v477, %v2509
    %v2511 = vpop.f32.mrf.mxu0
    %2512 = vdwg.mxu0
    %v2513 = vadd.f32 %v2484, %v2390
    %v2514 = vxor.u32 %v2513, 2147483648
    %v2515 = vmul.f32 %v2514, 1.442695
    %v2516 = vpow.pop %v2515
    %v2517 = vadd.f32 %v2516, 1.0
    %v2518 = vrcp.pop %v2517
    %v2519 = vmul.f32 %v2517, %v2518
    %v2520 = vsub.f32 1.0, %v2519
    %v2521 = vmul.f32 %v2518, %v2520
    %v2522 = vadd.f32 %v2518, %v2521
    %vm2523 = vweird.f32 %v2517
    %vm2524 = vweird.f32 %v2518
    %vm2525 = vmor %vm2523, %vm2524
    %v2526 = vsel %vm2525, %v2518, %v2522
    %v2527 = vand.u32 2147483647, %v2517
    %vm2528 = vcmp.eq.f32.partialorder %v2527, 8.507059e+37
    %v2529 = vand.u32 %v2517, 2147483648
    %v2530 = vor.u32 1.1754944e-38, %v2529
    %v2531 = vsel %vm2528, %v2530, %v2526
    %v2532 = vmul.f32 1.0, %v2531
    %v2533 = vadd.f32 %v2497, %v2403
    %v2534 = vxor.u32 %v2533, 2147483648
    %v2535 = vmul.f32 %v2534, 1.442695
    %v2536 = vpow.pop %v2535
    %v2537 = vadd.f32 %v2536, 1.0
    %v2538 = vrcp.pop %v2537
    %v2539 = vmul.f32 %v2537, %v2538
    %v2540 = vsub.f32 1.0, %v2539
    %v2541 = vmul.f32 %v2538, %v2540
    %v2542 = vadd.f32 %v2538, %v2541
    %vm2543 = vweird.f32 %v2537
    %vm2544 = vweird.f32 %v2538
    %vm2545 = vmor %vm2543, %vm2544
    %v2546 = vsel %vm2545, %v2538, %v2542
    %v2547 = vand.u32 2147483647, %v2537
    %vm2548 = vcmp.eq.f32.partialorder %v2547, 8.507059e+37
    %v2549 = vand.u32 %v2537, 2147483648
    %v2550 = vor.u32 1.1754944e-38, %v2549
    %v2551 = vsel %vm2548, %v2550, %v2546
    %v2552 = vmul.f32 1.0, %v2551
    %v2553 = vadd.f32 %v2416, %v471
    %v2554 = vmul.f32 %v2532, %v2553
    %v2555 = vadd.f32 %v2510, %v2554
    %v2556 = vtanh.pop %v2555
    %v2557 = vsub.f32 1.0, %v2552
    %v2558 = vmul.f32 %v2557, %v2556
    %v2559 = vmul.f32 %v2552, %v2338
    %v2560 = vadd.f32 %v2558, %v2559
    %vm2561 = vcmp.gt.s32.totalorder %v464, 6
    %v2562 = vsel %vm2561, 1, 0
    %2563 = vset.pattern.permute.xlu0 0
    %2564 = vperm.xlu0 %2563, %v2562
    %v2565 = vpop.permute.xlu0 %2564
    %vm2566 = vcmp.eq.s32.totalorder %v2565, 1
    %v2567 = vsel %vm2566, %v2472, %v2337
    %v2568 = vsel %vm2566, %v2560, %v2338
    %v2569 = vpack.c.bf16 %v2567, %v2567
    %2570 = vmatpush.bf16.msra.mxu0 %v614
    %2571 = vmatpush.bf16.msra.mxu0 %v611
    %2572 = vmatpush.bf16.msra.mxu0 %v608
    %2573 = vmatpush.bf16.msra.mxu0 %v605
    %2574 = vmatpush.bf16.msra.mxu0 %v602
    %2575 = vmatpush.bf16.msra.mxu0 %v599
    %2576 = vmatpush.bf16.msra.mxu0 %v596
    %2577 = vmatpush.bf16.msra.mxu0 %v593
    %2578 = vmatmul.bf16.gmra.mxu0 %v2569
    %v2579 = vpop.f32.mrf.mxu0
    %v2580 = vadd.f32 0.0, %v2579
    %v2581 = vpop.f32.mrf.mxu0
    %2582 = vdwg.mxu0
    %2583 = vmatpush.bf16.msra.mxu0 %v615
    %2584 = vmatpush.bf16.msra.mxu0 %v612
    %2585 = vmatpush.bf16.msra.mxu0 %v609
    %2586 = vmatpush.bf16.msra.mxu0 %v606
    %2587 = vmatpush.bf16.msra.mxu0 %v603
    %2588 = vmatpush.bf16.msra.mxu0 %v600
    %2589 = vmatpush.bf16.msra.mxu0 %v597
    %2590 = vmatpush.bf16.msra.mxu0 %v594
    %2591 = vmatmul.bf16.gmra.mxu0 %v2569
    %v2592 = vpop.f32.mrf.mxu0
    %v2593 = vadd.f32 0.0, %v2592
    %v2594 = vpop.f32.mrf.mxu0
    %2595 = vdwg.mxu0
    %2596 = vmatpush.bf16.msra.mxu0 %v616
    %2597 = vmatpush.bf16.msra.mxu0 %v613
    %2598 = vmatpush.bf16.msra.mxu0 %v610
    %2599 = vmatpush.bf16.msra.mxu0 %v607
    %2600 = vmatpush.bf16.msra.mxu0 %v604
    %2601 = vmatpush.bf16.msra.mxu0 %v601
    %2602 = vmatpush.bf16.msra.mxu0 %v598
    %2603 = vmatpush.bf16.msra.mxu0 %v595
    %2604 = vmatmul.bf16.gmra.mxu0 %v2569
    %v2605 = vpop.f32.mrf.mxu0
    %v2606 = vadd.f32 0.0, %v2605
    %v2607 = vpop.f32.mrf.mxu0
    %2608 = vdwg.mxu0
    %v2609 = vpack.c.bf16 %v2568, %v2568
    %2610 = vmatpush.bf16.msra.mxu0 %v813
    %2611 = vmatpush.bf16.msra.mxu0 %v810
    %2612 = vmatpush.bf16.msra.mxu0 %v807
    %2613 = vmatpush.bf16.msra.mxu0 %v804
    %2614 = vmatpush.bf16.msra.mxu0 %v801
    %2615 = vmatpush.bf16.msra.mxu0 %v798
    %2616 = vmatpush.bf16.msra.mxu0 %v795
    %2617 = vmatpush.bf16.msra.mxu0 %v792
    %2618 = vmatmul.bf16.gmra.mxu0 %v2609
    %v2619 = vpop.f32.mrf.mxu0
    %v2620 = vadd.f32 0.0, %v2619
    %v2621 = vpop.f32.mrf.mxu0
    %2622 = vdwg.mxu0
    %2623 = vmatpush.bf16.msra.mxu0 %v814
    %2624 = vmatpush.bf16.msra.mxu0 %v811
    %2625 = vmatpush.bf16.msra.mxu0 %v808
    %2626 = vmatpush.bf16.msra.mxu0 %v805
    %2627 = vmatpush.bf16.msra.mxu0 %v802
    %2628 = vmatpush.bf16.msra.mxu0 %v799
    %2629 = vmatpush.bf16.msra.mxu0 %v796
    %2630 = vmatpush.bf16.msra.mxu0 %v793
    %2631 = vmatmul.bf16.gmra.mxu0 %v2609
    %v2632 = vpop.f32.mrf.mxu0
    %v2633 = vadd.f32 0.0, %v2632
    %v2634 = vpop.f32.mrf.mxu0
    %2635 = vdwg.mxu0
    %2636 = vmatpush.bf16.msra.mxu0 %v815
    %2637 = vmatpush.bf16.msra.mxu0 %v812
    %2638 = vmatpush.bf16.msra.mxu0 %v809
    %2639 = vmatpush.bf16.msra.mxu0 %v806
    %2640 = vmatpush.bf16.msra.mxu0 %v803
    %2641 = vmatpush.bf16.msra.mxu0 %v800
    %2642 = vmatpush.bf16.msra.mxu0 %v797
    %2643 = vmatpush.bf16.msra.mxu0 %v794
    %2644 = vmatmul.bf16.gmra.mxu0 %v2609
    %v2645 = vpop.f32.mrf.mxu0
    %v2646 = vadd.f32 0.0, %v2645
    %v2647 = vpop.f32.mrf.mxu0
    %2648 = vdwg.mxu0
    %s2649 = smul.u32 7, 3
    %s2650 = smul.addr %s2649, 8
    %s2651 = scalar_lea.vmem [#allocation2], %s2650
    %v2652 = vld [vmem:[%s2651] sm:$0xff]
    %v2653 = vld [vmem:[%s2651 + $0x8] sm:$0xff]
    %v2654 = vld [vmem:[%s2651 + $0x10] sm:$0xff]
    %v2655 = vadd.f32 %v2652, %v2580
    %v2656 = vxor.u32 %v2655, 2147483648
    %v2657 = vmul.f32 %v2656, 1.442695
    %v2658 = vpow.pop %v2657
    %v2659 = vadd.f32 %v2658, 1.0
    %v2660 = vrcp.pop %v2659
    %v2661 = vmul.f32 %v2659, %v2660
    %v2662 = vsub.f32 1.0, %v2661
    %v2663 = vmul.f32 %v2660, %v2662
    %v2664 = vadd.f32 %v2660, %v2663
    %vm2665 = vweird.f32 %v2659
    %vm2666 = vweird.f32 %v2660
    %vm2667 = vmor %vm2665, %vm2666
    %v2668 = vsel %vm2667, %v2660, %v2664
    %v2669 = vand.u32 2147483647, %v2659
    %vm2670 = vcmp.eq.f32.partialorder %v2669, 8.507059e+37
    %v2671 = vand.u32 %v2659, 2147483648
    %v2672 = vor.u32 1.1754944e-38, %v2671
    %v2673 = vsel %vm2670, %v2672, %v2668
    %v2674 = vmul.f32 1.0, %v2673
    %v2675 = vadd.f32 %v2653, %v2593
    %v2676 = vxor.u32 %v2675, 2147483648
    %v2677 = vmul.f32 %v2676, 1.442695
    %v2678 = vpow.pop %v2677
    %v2679 = vadd.f32 %v2678, 1.0
    %v2680 = vrcp.pop %v2679
    %v2681 = vmul.f32 %v2679, %v2680
    %v2682 = vsub.f32 1.0, %v2681
    %v2683 = vmul.f32 %v2680, %v2682
    %v2684 = vadd.f32 %v2680, %v2683
    %vm2685 = vweird.f32 %v2679
    %vm2686 = vweird.f32 %v2680
    %vm2687 = vmor %vm2685, %vm2686
    %v2688 = vsel %vm2687, %v2680, %v2684
    %v2689 = vand.u32 2147483647, %v2679
    %vm2690 = vcmp.eq.f32.partialorder %v2689, 8.507059e+37
    %v2691 = vand.u32 %v2679, 2147483648
    %v2692 = vor.u32 1.1754944e-38, %v2691
    %v2693 = vsel %vm2690, %v2692, %v2688
    %v2694 = vmul.f32 1.0, %v2693
    %v2695 = vadd.f32 %v2606, %v467
    %v2696 = vmul.f32 %v2674, %v2695
    %v2697 = vadd.f32 %v2654, %v2696
    %v2698 = vtanh.pop %v2697
    %v2699 = vsub.f32 1.0, %v2694
    %v2700 = vmul.f32 %v2699, %v2698
    %v2701 = vmul.f32 %v2694, %v2567
    %v2702 = vadd.f32 %v2700, %v2701
    %v2703 = vpack.c.bf16 %v2702, %v2702
    %2704 = vmatpush.bf16.msra.mxu0 %v1067
    %2705 = vmatpush.bf16.msra.mxu0 %v1064
    %2706 = vmatpush.bf16.msra.mxu0 %v1061
    %2707 = vmatpush.bf16.msra.mxu0 %v1058
    %2708 = vmatpush.bf16.msra.mxu0 %v1055
    %2709 = vmatpush.bf16.msra.mxu0 %v1052
    %2710 = vmatpush.bf16.msra.mxu0 %v1049
    %2711 = vmatpush.bf16.msra.mxu0 %v1046
    %2712 = vmatmul.bf16.gmra.mxu0 %v2703
    %v2713 = vpop.f32.mrf.mxu0
    %v2714 = vadd.f32 %v475, %v2713
    %v2715 = vpop.f32.mrf.mxu0
    %2716 = vdwg.mxu0
    %2717 = vmatpush.bf16.msra.mxu0 %v1068
    %2718 = vmatpush.bf16.msra.mxu0 %v1065
    %2719 = vmatpush.bf16.msra.mxu0 %v1062
    %2720 = vmatpush.bf16.msra.mxu0 %v1059
    %2721 = vmatpush.bf16.msra.mxu0 %v1056
    %2722 = vmatpush.bf16.msra.mxu0 %v1053
    %2723 = vmatpush.bf16.msra.mxu0 %v1050
    %2724 = vmatpush.bf16.msra.mxu0 %v1047
    %2725 = vmatmul.bf16.gmra.mxu0 %v2703
    %v2726 = vpop.f32.mrf.mxu0
    %v2727 = vadd.f32 %v476, %v2726
    %v2728 = vpop.f32.mrf.mxu0
    %2729 = vdwg.mxu0
    %2730 = vmatpush.bf16.msra.mxu0 %v1069
    %2731 = vmatpush.bf16.msra.mxu0 %v1066
    %2732 = vmatpush.bf16.msra.mxu0 %v1063
    %2733 = vmatpush.bf16.msra.mxu0 %v1060
    %2734 = vmatpush.bf16.msra.mxu0 %v1057
    %2735 = vmatpush.bf16.msra.mxu0 %v1054
    %2736 = vmatpush.bf16.msra.mxu0 %v1051
    %2737 = vmatpush.bf16.msra.mxu0 %v1048
    %2738 = vmatmul.bf16.gmra.mxu0 %v2703
    %v2739 = vpop.f32.mrf.mxu0
    %v2740 = vadd.f32 %v477, %v2739
    %v2741 = vpop.f32.mrf.mxu0
    %2742 = vdwg.mxu0
    %v2743 = vadd.f32 %v2714, %v2620
    %v2744 = vxor.u32 %v2743, 2147483648
    %v2745 = vmul.f32 %v2744, 1.442695
    %v2746 = vpow.pop %v2745
    %v2747 = vadd.f32 %v2746, 1.0
    %v2748 = vrcp.pop %v2747
    %v2749 = vmul.f32 %v2747, %v2748
    %v2750 = vsub.f32 1.0, %v2749
    %v2751 = vmul.f32 %v2748, %v2750
    %v2752 = vadd.f32 %v2748, %v2751
    %vm2753 = vweird.f32 %v2747
    %vm2754 = vweird.f32 %v2748
    %vm2755 = vmor %vm2753, %vm2754
    %v2756 = vsel %vm2755, %v2748, %v2752
    %v2757 = vand.u32 2147483647, %v2747
    %vm2758 = vcmp.eq.f32.partialorder %v2757, 8.507059e+37
    %v2759 = vand.u32 %v2747, 2147483648
    %v2760 = vor.u32 1.1754944e-38, %v2759
    %v2761 = vsel %vm2758, %v2760, %v2756
    %v2762 = vmul.f32 1.0, %v2761
    %v2763 = vadd.f32 %v2727, %v2633
    %v2764 = vxor.u32 %v2763, 2147483648
    %v2765 = vmul.f32 %v2764, 1.442695
    %v2766 = vpow.pop %v2765
    %v2767 = vadd.f32 %v2766, 1.0
    %v2768 = vrcp.pop %v2767
    %v2769 = vmul.f32 %v2767, %v2768
    %v2770 = vsub.f32 1.0, %v2769
    %v2771 = vmul.f32 %v2768, %v2770
    %v2772 = vadd.f32 %v2768, %v2771
    %vm2773 = vweird.f32 %v2767
    %vm2774 = vweird.f32 %v2768
    %vm2775 = vmor %vm2773, %vm2774
    %v2776 = vsel %vm2775, %v2768, %v2772
    %v2777 = vand.u32 2147483647, %v2767
    %vm2778 = vcmp.eq.f32.partialorder %v2777, 8.507059e+37
    %v2779 = vand.u32 %v2767, 2147483648
    %v2780 = vor.u32 1.1754944e-38, %v2779
    %v2781 = vsel %vm2778, %v2780, %v2776
    %v2782 = vmul.f32 1.0, %v2781
    %v2783 = vadd.f32 %v2646, %v471
    %v2784 = vmul.f32 %v2762, %v2783
    %v2785 = vadd.f32 %v2740, %v2784
    %v2786 = vtanh.pop %v2785
    %v2787 = vsub.f32 1.0, %v2782
    %v2788 = vmul.f32 %v2787, %v2786
    %v2789 = vmul.f32 %v2782, %v2568
    %v2790 = vadd.f32 %v2788, %v2789
    %vm2791 = vcmp.gt.s32.totalorder %v464, 7
    %v2792 = vsel %vm2791, 1, 0
    %2793 = vset.pattern.permute.xlu0 0
    %2794 = vperm.xlu0 %2793, %v2792
    %v2795 = vpop.permute.xlu0 %2794
    %vm2796 = vcmp.eq.s32.totalorder %v2795, 1
    %v2797 = vsel %vm2796, %v2790, %v2568
    %v2798 = vld [vmem:[%s2] sm:$0xff]
    %v2799 = vpack.c.bf16 %v2797, %v2797
    %v2800 = vld [vmem:[#allocation14] sm:$0xf]
    %v2801 = vld [vmem:[#allocation14 + $0x4] sm:$0xf]
    %v2802 = vld [vmem:[#allocation14 + $0x8] sm:$0xf]
    %v2803 = vld [vmem:[#allocation14 + $0xc] sm:$0xf]
    %v2804 = vld [vmem:[#allocation14 + $0x10] sm:$0xf]
    %v2805 = vld [vmem:[#allocation14 + $0x14] sm:$0xf]
    %v2806 = vld [vmem:[#allocation14 + $0x18] sm:$0xf]
    %v2807 = vld [vmem:[#allocation14 + $0x1c] sm:$0xf]
    %v2808 = vld [vmem:[#allocation14 + $0x20] sm:$0xf]
    %v2809 = vld [vmem:[#allocation14 + $0x24] sm:$0xf]
    %v2810 = vld [vmem:[#allocation14 + $0x28] sm:$0xf]
    %v2811 = vld [vmem:[#allocation14 + $0x2c] sm:$0xf]
    %v2812 = vld [vmem:[#allocation14 + $0x30] sm:$0xf]
    %v2813 = vld [vmem:[#allocation14 + $0x34] sm:$0xf]
    %v2814 = vld [vmem:[#allocation14 + $0x38] sm:$0xf]
    %v2815 = vld [vmem:[#allocation14 + $0x3c] sm:$0xf]
    %v2832 = vunpack.c.l.b16 %v2800
    %v2833 = vunpack.c.l.b16 %v2801
    %v2834 = vunpack.c.l.b16 %v2802
    %v2835 = vunpack.c.l.b16 %v2803
    %v2836 = vunpack.c.l.b16 %v2804
    %v2837 = vunpack.c.l.b16 %v2805
    %v2838 = vunpack.c.l.b16 %v2806
    %v2839 = vunpack.c.l.b16 %v2807
    %v2840 = vunpack.c.l.b16 %v2808
    %v2841 = vunpack.c.l.b16 %v2809
    %v2842 = vunpack.c.l.b16 %v2810
    %v2843 = vunpack.c.l.b16 %v2811
    %v2844 = vunpack.c.l.b16 %v2812
    %v2845 = vunpack.c.l.b16 %v2813
    %v2846 = vunpack.c.l.b16 %v2814
    %v2847 = vunpack.c.l.b16 %v2815
    %v2848 = vpack.c.b16 %v2833, %v2832
    %v2849 = vpack.c.b16 %v2835, %v2834
    %v2850 = vpack.c.b16 %v2837, %v2836
    %v2851 = vpack.c.b16 %v2839, %v2838
    %v2852 = vpack.c.b16 %v2841, %v2840
    %v2853 = vpack.c.b16 %v2843, %v2842
    %v2854 = vpack.c.b16 %v2845, %v2844
    %v2855 = vpack.c.b16 %v2847, %v2846
    %2864 = vmatpush.bf16.msra.mxu0 %v2855
    %2865 = vmatpush.bf16.msra.mxu0 %v2854
    %2866 = vmatpush.bf16.msra.mxu0 %v2853
    %2867 = vmatpush.bf16.msra.mxu0 %v2852
    %2868 = vmatpush.bf16.msra.mxu0 %v2851
    %2869 = vmatpush.bf16.msra.mxu0 %v2850
    %2870 = vmatpush.bf16.msra.mxu0 %v2849
    %2871 = vmatpush.bf16.msra.mxu0 %v2848
    %2872 = vmatmul.bf16.gmra.mxu0 %v2799
    %v2873 = vpop.f32.mrf.mxu0
    %v2874 = vadd.f32 0.0, %v2873
    %v2875 = vpop.f32.mrf.mxu0
    %2876 = vdwg.mxu0
    %v2877 = vadd.f32 %v2798, %v2874
    %v2878 = vld [vmem:[%s12] sm:$0x1]
    %v2880 = vperm.slane %v2878, 0
    %v2882 = vadd.f32 %v2877, %v2880
    %2883 = vst [vmem:[#allocation15] sm:$0xff] %v2882
    // Predicated region
    $region82: #{tpu_custom_call.1} parent=1 // pred_check
      _
    $region83: #{tpu_custom_call.1} parent=1 // pred_check_branch
      %2885 = sbr.rel (0) target = $region85
    $region84: #{tpu_custom_call.1} parent=1 // pred_region
      %2887 = vsyncadd [#allocation5], 0
      %s2889 = sshll.u32 [#allocation15], 4
      %s2890 = int_to_ptr.vmem [resolvable:$true] %s2889
      %s2891 = sshll.u32 %s13, 4
      %s2892 = int_to_ptr.hbm [resolvable:$true] %s2891
      %2894 = dma.vmem_to_hbm [thread:$0]  %s2890, 128, %s2892, [#allocation5]
    $region85: #{tpu_custom_call.1} parent=1 // pred_fallthru
      _
    // Predicated region
    $region86: #{tpu_custom_call.1} parent=1 // pred_check
      _
    $region87: #{tpu_custom_call.1} parent=1 // pred_check_branch
      %2896 = sbr.rel (0) target = $region89
    $region88: #{tpu_custom_call.1} parent=1 // pred_region
      %2898 = dma.done [#allocation5], 128
    $region89: #{tpu_custom_call.1} parent=1 // pred_fallthru
      _
    %2899 = vsyncpa [#allocation4], 1
    %2900 = vsyncpa [#allocation7], 1
    %2901 = vsyncpa [#allocation10], 1
    %2902 = vsyncpa [#allocation13], 1
    %2903 = vsyncpa [#allocation5], 1

</llo_original>
